<compile_context>
chip_gen: v7x
topology: tpu7x:2x2x1
jax: 0.10.0
libtpu: 0.0.40
codegen_flags: <defaults>
</compile_context>

<pallas_src>
import jax
import jax.numpy as jnp
from jax.experimental import pallas as pl
from jax.experimental.pallas import tpu as pltpu

# ----------------------------- hyper-parameters ------------------------------
N_LAYERS = 2          # N in Decoder(decoder_block, N)
D_MODEL  = 32         # decoder_block.size
N_HEADS  = 4
D_K      = D_MODEL // N_HEADS
D_FF     = 64
EPS      = 1e-6
NEG_INF  = -1e9
SCALE    = 1.0 / (D_K ** 0.5)

# ----- vec-blob row layout (all biases + LN params in one (VEC_ROWS,128) f32) ----
ROW_B_QKV, ROW_B_CQ, ROW_B_OS, ROW_B_OC, ROW_B_FF1, ROW_B_FF2 = 0, 1, 2, 3, 4, 5
ROW_LN0_G, ROW_LN0_B, ROW_LN1_G, ROW_LN1_B, ROW_LN2_G, ROW_LN2_B = 6, 7, 8, 9, 10, 11
ROWS_PER_LAYER = 12
ROW_B_CKV   = N_LAYERS * ROWS_PER_LAYER
ROW_FINAL_G = ROW_B_CKV + 1
ROW_FINAL_B = ROW_B_CKV + 2
VEC_ROWS    = ROW_B_CKV + 3
VEC_LANES   = 128


# ------------------------- in-kernel math helpers -----------------------------
def _ln(x, gamma, beta):
    """Annotated-Transformer LayerNorm: unbiased std, eps added to std. Exact divide."""
    d = x.shape[-1]
    mean = jnp.mean(x, axis=-1, keepdims=True)
    diff = x - mean
    var = jnp.sum(diff * diff, axis=-1, keepdims=True) * (1.0 / (d - 1))
    return gamma * diff / (jnp.sqrt(var) + EPS) + beta


def _heads_to_rows(x2d, groups):
    """(R, groups*D_K) cols ordered (g, dk) -> (groups*R, D_K) rows ordered (g, r)."""
    return jnp.concatenate(
        [x2d[:, g * D_K:(g + 1) * D_K] for g in range(groups)], axis=0)


def _rows_to_heads(xh, rows):
    """(N_HEADS*rows, D_K) rows (h, r) -> (rows, N_HEADS*D_K) cols (h, dk)."""
    return jnp.concatenate(
        [xh[h * rows:(h + 1) * rows, :] for h in range(N_HEADS)], axis=1)


def _attend(qs, ks, vs, bias):
    """qs:(G*Tq,Dk), ks/vs:(G*Tk,Dk), bias:(G*Tq,G*Tk) additive (block-diag -1e9).
    SCALE already folded into Q weights; exact divide for the softmax."""
    s = jnp.dot(qs, ks.T, preferred_element_type=jnp.float32) + bias
    m = jnp.max(s, axis=-1, keepdims=True)
    e = jnp.exp(s - m)
    p = e / jnp.sum(e, axis=-1, keepdims=True)
    return jnp.dot(p, vs, preferred_element_type=jnp.float32)


# ------------------------------ Pallas kernel ---------------------------------
def decoder_kernel(x_ref, mem_ref, bias_s_ref, bias_c_ref,
                   w_qkv_ref, w_cq_ref, w_ckv_ref, w_o_ref, w1_ref, w2_ref,
                   vec_ref, out_ref):
    BT = x_ref.shape[0]            # B * Tq
    BS = mem_ref.shape[0]          # B * Ts
    GBT = N_HEADS * BT
    GBS = N_HEADS * BS

    x = x_ref[...]                 # (BT, D)
    mem = mem_ref[...]             # (BS, D)
    bias_s = bias_s_ref[...]       # (GBT, GBT) additive, block-diag masked
    bias_c = bias_c_ref[...]       # (GBT, GBS)

    def vrow(r, width):            # (1, width) bias / LN row (static offsets)
        return vec_ref[r:r + 1, 0:width]

    # cross-attention K/V for ALL layers hoisted out of the layer loop
    # (memory is layer-invariant and un-normalized in the reference).
    ckv = jnp.dot(mem, w_ckv_ref[...], preferred_element_type=jnp.float32) \
        + vrow(ROW_B_CKV, N_LAYERS * 2 * N_HEADS * D_K)
    ckvs = _heads_to_rows(ckv, N_LAYERS * 2 * N_HEADS)       # (L*2*H*BS, Dk)

    for l in range(N_LAYERS):                                 # static unroll (N=2)
        r0 = l * ROWS_PER_LAYER

        # --- sublayer 1: pre-norm masked self-attention + residual ------------
        xn = _ln(x, vrow(r0 + ROW_LN0_G, D_MODEL), vrow(r0 + ROW_LN0_B, D_MODEL))
        qkv = jnp.dot(xn, w_qkv_ref[l], preferred_element_type=jnp.float32) \
            + vrow(r0 + ROW_B_QKV, 3 * N_HEADS * D_K)
        qkvs = _heads_to_rows(qkv, 3 * N_HEADS)               # (3*H*BT, Dk)
        o = _attend(qkvs[0:GBT], qkvs[GBT:2 * GBT], qkvs[2 * GBT:3 * GBT], bias_s)
        om = _rows_to_heads(o, BT)                            # (BT, H*Dk)
        x = x + jnp.dot(om, w_o_ref[l, 0], preferred_element_type=jnp.float32) \
              + vrow(r0 + ROW_B_OS, D_MODEL)

        # --- sublayer 2: pre-norm cross-attention over memory + residual ------
        xn = _ln(x, vrow(r0 + ROW_LN1_G, D_MODEL), vrow(r0 + ROW_LN1_B, D_MODEL))
        qc = jnp.dot(xn, w_cq_ref[l], preferred_element_type=jnp.float32) \
            + vrow(r0 + ROW_B_CQ, N_HEADS * D_K)
        qcs = _heads_to_rows(qc, N_HEADS)                     # (H*BT, Dk)
        base = l * 2 * GBS
        o = _attend(qcs, ckvs[base:base + GBS],
                    ckvs[base + GBS:base + 2 * GBS], bias_c)
        om = _rows_to_heads(o, BT)
        x = x + jnp.dot(om, w_o_ref[l, 1], preferred_element_type=jnp.float32) \
              + vrow(r0 + ROW_B_OC, D_MODEL)

        # --- sublayer 3: pre-norm position-wise FFN (ReLU) + residual ----------
        xn = _ln(x, vrow(r0 + ROW_LN2_G, D_MODEL), vrow(r0 + ROW_LN2_B, D_MODEL))
        h = jnp.maximum(
            jnp.dot(xn, w1_ref[l], preferred_element_type=jnp.float32)
            + vrow(r0 + ROW_B_FF1, D_FF), 0.0)
        x = x + jnp.dot(h, w2_ref[l], preferred_element_type=jnp.float32) \
              + vrow(r0 + ROW_B_FF2, D_MODEL)

    out_ref[...] = _ln(x, vrow(ROW_FINAL_G, D_MODEL), vrow(ROW_FINAL_B, D_MODEL))
    # TODO(synk): output last dim is 32 (<128) -> masked vst epilogue; a
    # lane-dense (1, BT*D) store layout would avoid it but output is ~2 KB here.


# ------------------- wrapper-side parameter / bias packing ---------------------
def _pack_params(p):
    """Repack params into head-packed, scale-folded matmul weights + one vec blob."""
    L, D = N_LAYERS, D_MODEL
    aw, ab = p["attn_w"], p["attn_b"]            # (L,8,D,D), (L,8,D)
    # indices: 0..3 = self Wq,Wk,Wv,Wo ; 4..7 = cross Wq,Wk,Wv,Wo

    w_qkv = jnp.concatenate([aw[:, 0] * SCALE, aw[:, 1], aw[:, 2]], axis=-1)  # (L,D,96)
    w_cq  = aw[:, 4] * SCALE                                                  # (L,D,D)
    w_ckv = jnp.concatenate(
        [jnp.concatenate([aw[l, 5], aw[l, 6]], axis=-1) for l in range(L)],
        axis=-1)                                                              # (D, L*2*D)
    w_o   = jnp.stack([aw[:, 3], aw[:, 7]], axis=1)                           # (L,2,D,D)

    vec = jnp.zeros((VEC_ROWS, VEC_LANES), jnp.float32)
    for l in range(L):
        r0 = l * ROWS_PER_LAYER
        vec = vec.at[r0 + ROW_B_QKV, 0:3 * D].set(
            jnp.concatenate([ab[l, 0] * SCALE, ab[l, 1], ab[l, 2]]))
        vec = vec.at[r0 + ROW_B_CQ,  0:D].set(ab[l, 4] * SCALE)
        vec = vec.at[r0 + ROW_B_OS,  0:D].set(ab[l, 3])
        vec = vec.at[r0 + ROW_B_OC,  0:D].set(ab[l, 7])
        vec = vec.at[r0 + ROW_B_FF1, 0:D_FF].set(p["b1"][l, 0])
        vec = vec.at[r0 + ROW_B_FF2, 0:D].set(p["b2"][l, 0])
        for j in range(3):
            vec = vec.at[r0 + ROW_LN0_G + 2 * j, 0:D].set(p["ln"][l, j, 0])
            vec = vec.at[r0 + ROW_LN0_B + 2 * j, 0:D].set(p["ln"][l, j, 1])
    vec = vec.at[ROW_B_CKV, 0:L * 2 * D].set(
        jnp.concatenate([jnp.concatenate([ab[l, 5], ab[l, 6]]) for l in range(L)]))
    vec = vec.at[ROW_FINAL_G, 0:D].set(p["final_ln"][0])
    vec = vec.at[ROW_FINAL_B, 0:D].set(p["final_ln"][1])

    return (w_qkv, w_cq, w_ckv, w_o, p["w1"], p["w2"], vec)


def _build_attn_bias(mask, tq, batch):
    """mask: (B, Mq, Tk) with Mq in {1, tq}; 1 = attend, 0 = masked.
    Returns (H*B*tq, H*B*Tk) additive bias: mask bias on the (h,b)-diagonal
    blocks, -1e9 on all off-(head,batch) blocks (so they softmax to 0).
    Group ordering g = h*B + b, matching _heads_to_rows on (b,q)-flat rows."""
    tk = mask.shape[-1]
    add = jnp.where(mask == 0, NEG_INF, 0.0).astype(jnp.float32)
    add = jnp.broadcast_to(add, (batch, tq, tk))
    diag = jnp.tile(add, (N_HEADS, 1, 1))                     # (G, tq, tk)
    g = N_HEADS * batch
    eye = jnp.eye(g, dtype=jnp.float32)
    full = jnp.where(eye[:, :, None, None] > 0, diag[:, None, :, :], NEG_INF)
    return full.transpose(0, 2, 1, 3).reshape(g * tq, g * tk).astype(jnp.float32)


# --------------------------------- wrapper --------------------------------------
def decoder_forward(x, memory, src_mask, tgt_mask, params):
    B, Tq, D = x.shape
    Ts = memory.shape[1]
    assert D == D_MODEL

    x_flat = x.reshape(B * Tq, D)
    mem_flat = memory.reshape(B * Ts, D)
    bias_self = _build_attn_bias(tgt_mask, Tq, B)     # (H*B*Tq, H*B*Tq)
    bias_cross = _build_attn_bias(src_mask, Tq, B)    # (H*B*Tq, H*B*Ts)

    weights = _pack_params(params)
    args = (x_flat, mem_flat, bias_self, bias_cross) + weights

    vmem = pl.BlockSpec(memory_space=pltpu.MemorySpace.VMEM)
    out_flat = pl.pallas_call(
        decoder_kernel,
        out_shape=jax.ShapeDtypeStruct((B * Tq, D), jnp.float32),
        in_specs=[vmem] * len(args),
        out_specs=vmem,
    )(*args)
    # TODO(synk): on v7x (2 TensorCores) a 2-way "parallel" split (grid over
    # batch halves or pl.core_map) would engage the second core; the folded
    # single-invocation form is chosen for the 1-TC v5e/v6e latency win.
    return out_flat.reshape(B, Tq, D)


# -------------------------- deterministic params --------------------------------
def init_params(key):
    ks = jax.random.split(key, 6)
    s = 0.05
    attn_w = s * jax.random.normal(ks[0], (N_LAYERS, 8, D_MODEL, D_MODEL), jnp.float32)
    attn_b = s * jax.random.normal(ks[1], (N_LAYERS, 8, D_MODEL), jnp.float32)
    ln = jnp.stack([jnp.ones((N_LAYERS, 3, D_MODEL), jnp.float32),
                    jnp.zeros((N_LAYERS, 3, D_MODEL), jnp.float32)], axis=2)
    w1 = s * jax.random.normal(ks[2], (N_LAYERS, D_MODEL, D_FF), jnp.float32)
    b1 = s * jax.random.normal(ks[3], (N_LAYERS, 1, D_FF), jnp.float32)
    w2 = s * jax.random.normal(ks[4], (N_LAYERS, D_FF, D_MODEL), jnp.float32)
    b2 = s * jax.random.normal(ks[5], (N_LAYERS, 1, D_MODEL), jnp.float32)
    final_ln = jnp.stack([jnp.ones((D_MODEL,), jnp.float32),
                          jnp.zeros((D_MODEL,), jnp.float32)], axis=0)
    return dict(attn_w=attn_w, attn_b=attn_b, ln=ln,
                w1=w1, b1=b1, w2=w2, b2=b2, final_ln=final_ln)


# ------------------------------ pure-JAX reference -------------------------------
def ref_layer_norm(x, gamma, beta):
    d = x.shape[-1]
    mean = jnp.mean(x, axis=-1, keepdims=True)
    var = jnp.sum((x - mean) ** 2, axis=-1, keepdims=True) / (d - 1)
    return gamma * (x - mean) / (jnp.sqrt(var) + EPS) + beta


def ref_softmax(x):
    m = jnp.max(x, axis=-1, keepdims=True)
    e = jnp.exp(x - m)
    return e / jnp.sum(e, axis=-1, keepdims=True)


def ref_mha(q_in, k_in, v_in, wq, bq, wk, bk, wv, bv, wo, bo, mask):
    q = jnp.dot(q_in, wq, preferred_element_type=jnp.float32) + bq
    k = jnp.dot(k_in, wk, preferred_element_type=jnp.float32) + bk
    v = jnp.dot(v_in, wv, preferred_element_type=jnp.float32) + bv
    heads = []
    for h in range(N_HEADS):
        sl = slice(h * D_K, (h + 1) * D_K)
        s = jnp.dot(q[:, sl], k[:, sl].T, preferred_element_type=jnp.float32) * SCALE
        s = jnp.where(mask == 0, NEG_INF, s)
        heads.append(jnp.dot(ref_softmax(s), v[:, sl],
                             preferred_element_type=jnp.float32))
    o = jnp.concatenate(heads, axis=-1)
    return jnp.dot(o, wo, preferred_element_type=jnp.float32) + bo


def ref_decoder_layer(x, mem, tgt_mask, src_mask, aw, ab, ln, w1, b1, w2, b2):
    xn = ref_layer_norm(x, ln[0, 0], ln[0, 1])
    x = x + ref_mha(xn, xn, xn, aw[0], ab[0], aw[1], ab[1], aw[2], ab[2],
                    aw[3], ab[3], tgt_mask)
    xn = ref_layer_norm(x, ln[1, 0], ln[1, 1])
    x = x + ref_mha(xn, mem, mem, aw[4], ab[4], aw[5], ab[5], aw[6], ab[6],
                    aw[7], ab[7], src_mask)
    xn = ref_layer_norm(x, ln[2, 0], ln[2, 1])
    h = jnp.maximum(jnp.dot(xn, w1, preferred_element_type=jnp.float32) + b1, 0.0)
    return x + jnp.dot(h, w2, preferred_element_type=jnp.float32) + b2


def ref_decoder(x, memory, src_mask, tgt_mask, p):
    outs = []
    for b in range(x.shape[0]):
        xb = x[b]
        for l in range(N_LAYERS):
            xb = ref_decoder_layer(xb, memory[b], tgt_mask[b], src_mask[b],
                                   p["attn_w"][l], p["attn_b"][l], p["ln"][l],
                                   p["w1"][l], p["b1"][l, 0],
                                   p["w2"][l], p["b2"][l, 0])
        outs.append(ref_layer_norm(xb, p["final_ln"][0], p["final_ln"][1]))
    return jnp.stack(outs, axis=0)


if __name__ == "__main__":
    key = jax.random.PRNGKey(0)
    kx, km, kp = jax.random.split(key, 3)

    B, Tq, Ts = 2, 8, 8
    x = jax.random.normal(kx, (B, Tq, D_MODEL), jnp.float32)
    memory = jax.random.normal(km, (B, Ts, D_MODEL), jnp.float32)
    # tgt_mask: causal (subsequent) mask, 1 = attend; src_mask: all-valid padding mask
    tgt_mask = jnp.tile(jnp.tril(jnp.ones((Tq, Tq), jnp.float32))[None], (B, 1, 1))
    src_mask = jnp.ones((B, 1, Ts), jnp.float32)

    params = init_params(kp)

    out = decoder_forward(x, memory, src_mask, tgt_mask, params)
    out = jax.block_until_ready(out)

    ref = ref_decoder(x, memory, src_mask, tgt_mask, params)
    assert out.shape == (B, Tq, D_MODEL)
    err = float(jnp.max(jnp.abs(out - ref)))
    assert jnp.allclose(out, ref, rtol=1e-3, atol=1e-3), f"max abs err {err}"
    print("KERNEL_OK")
</pallas_src>

<mosaic_0001>
module attributes {stable_mosaic.version = 11 : i64} {
  func.func @decoder_kernel(%arg0: memref<16x32xf32, #tpu.memory_space<vmem>>, %arg1: memref<16x32xf32, #tpu.memory_space<vmem>>, %arg2: memref<64x64xf32, #tpu.memory_space<vmem>>, %arg3: memref<64x64xf32, #tpu.memory_space<vmem>>, %arg4: memref<2x32x96xf32, #tpu.memory_space<vmem>>, %arg5: memref<2x32x32xf32, #tpu.memory_space<vmem>>, %arg6: memref<32x128xf32, #tpu.memory_space<vmem>>, %arg7: memref<2x2x32x32xf32, #tpu.memory_space<vmem>>, %arg8: memref<2x32x64xf32, #tpu.memory_space<vmem>>, %arg9: memref<2x64x32xf32, #tpu.memory_space<vmem>>, %arg10: memref<27x128xf32, #tpu.memory_space<vmem>>, %arg11: memref<16x32xf32, #tpu.memory_space<vmem>>) attributes {dimension_semantics = [], scalar_prefetch = 0 : i64, scratch_operands = 0 : i64, tpu.core_type = #tpu.core_type<tc>} {
    %c0 = arith.constant 0 : index
    %c0_0 = arith.constant 0 : index
    %0 = vector.load %arg0[%c0, %c0_0] : memref<16x32xf32, #tpu.memory_space<vmem>>, vector<16x32xf32>
    %c0_1 = arith.constant 0 : index
    %c0_2 = arith.constant 0 : index
    %1 = vector.load %arg1[%c0_1, %c0_2] : memref<16x32xf32, #tpu.memory_space<vmem>>, vector<16x32xf32>
    %c0_3 = arith.constant 0 : index
    %c0_4 = arith.constant 0 : index
    %2 = vector.load %arg2[%c0_3, %c0_4] : memref<64x64xf32, #tpu.memory_space<vmem>>, vector<64x64xf32>
    %c0_5 = arith.constant 0 : index
    %c0_6 = arith.constant 0 : index
    %3 = vector.load %arg3[%c0_5, %c0_6] : memref<64x64xf32, #tpu.memory_space<vmem>>, vector<64x64xf32>
    %c0_7 = arith.constant 0 : index
    %c0_8 = arith.constant 0 : index
    %4 = vector.load %arg6[%c0_7, %c0_8] : memref<32x128xf32, #tpu.memory_space<vmem>>, vector<32x128xf32>
    %cst = arith.constant dense<0.000000e+00> : vector<16x128xf32>
    %5 = tpu.matmul %1, %4, %cst {dimension_numbers = #tpu.dot_dimension_numbers<[1], [0], [0], [1], [0, 0, 1, 1], [], []>} : vector<16x32xf32>, vector<32x128xf32>, vector<16x128xf32> -> vector<16x128xf32>
    %c24 = arith.constant 24 : index
    %c0_9 = arith.constant 0 : index
    %6 = vector.load %arg10[%c24, %c0_9] : memref<27x128xf32, #tpu.memory_space<vmem>>, vector<1x128xf32>
    %7 = vector.broadcast %6 : vector<1x128xf32> to vector<16x128xf32>
    %8 = arith.addf %5, %7 : vector<16x128xf32>
    %9 = vector.extract_strided_slice %8 {offsets = [0, 0], sizes = [16, 8], strides = [1, 1]} : vector<16x128xf32> to vector<16x8xf32>
    %10 = vector.extract_strided_slice %8 {offsets = [0, 8], sizes = [16, 8], strides = [1, 1]} : vector<16x128xf32> to vector<16x8xf32>
    %11 = vector.extract_strided_slice %8 {offsets = [0, 16], sizes = [16, 8], strides = [1, 1]} : vector<16x128xf32> to vector<16x8xf32>
    %12 = vector.extract_strided_slice %8 {offsets = [0, 24], sizes = [16, 8], strides = [1, 1]} : vector<16x128xf32> to vector<16x8xf32>
    %13 = vector.extract_strided_slice %8 {offsets = [0, 32], sizes = [16, 8], strides = [1, 1]} : vector<16x128xf32> to vector<16x8xf32>
    %14 = vector.extract_strided_slice %8 {offsets = [0, 40], sizes = [16, 8], strides = [1, 1]} : vector<16x128xf32> to vector<16x8xf32>
    %15 = vector.extract_strided_slice %8 {offsets = [0, 48], sizes = [16, 8], strides = [1, 1]} : vector<16x128xf32> to vector<16x8xf32>
    %16 = vector.extract_strided_slice %8 {offsets = [0, 56], sizes = [16, 8], strides = [1, 1]} : vector<16x128xf32> to vector<16x8xf32>
    %17 = vector.extract_strided_slice %8 {offsets = [0, 64], sizes = [16, 8], strides = [1, 1]} : vector<16x128xf32> to vector<16x8xf32>
    %18 = vector.extract_strided_slice %8 {offsets = [0, 72], sizes = [16, 8], strides = [1, 1]} : vector<16x128xf32> to vector<16x8xf32>
    %19 = vector.extract_strided_slice %8 {offsets = [0, 80], sizes = [16, 8], strides = [1, 1]} : vector<16x128xf32> to vector<16x8xf32>
    %20 = vector.extract_strided_slice %8 {offsets = [0, 88], sizes = [16, 8], strides = [1, 1]} : vector<16x128xf32> to vector<16x8xf32>
    %21 = vector.extract_strided_slice %8 {offsets = [0, 96], sizes = [16, 8], strides = [1, 1]} : vector<16x128xf32> to vector<16x8xf32>
    %22 = vector.extract_strided_slice %8 {offsets = [0, 104], sizes = [16, 8], strides = [1, 1]} : vector<16x128xf32> to vector<16x8xf32>
    %23 = vector.extract_strided_slice %8 {offsets = [0, 112], sizes = [16, 8], strides = [1, 1]} : vector<16x128xf32> to vector<16x8xf32>
    %24 = vector.extract_strided_slice %8 {offsets = [0, 120], sizes = [16, 8], strides = [1, 1]} : vector<16x128xf32> to vector<16x8xf32>
    %25 = tpu.concatenate %9, %10, %11, %12, %13, %14, %15, %16, %17, %18, %19, %20, %21, %22, %23, %24 in 0 : vector<16x8xf32>, vector<16x8xf32>, vector<16x8xf32>, vector<16x8xf32>, vector<16x8xf32>, vector<16x8xf32>, vector<16x8xf32>, vector<16x8xf32>, vector<16x8xf32>, vector<16x8xf32>, vector<16x8xf32>, vector<16x8xf32>, vector<16x8xf32>, vector<16x8xf32>, vector<16x8xf32>, vector<16x8xf32> -> vector<256x8xf32>
    %c6 = arith.constant 6 : index
    %c0_10 = arith.constant 0 : index
    %26 = vector.load %arg10[%c6, %c0_10] : memref<27x128xf32, #tpu.memory_space<vmem>>, vector<1x32xf32>
    %c7 = arith.constant 7 : index
    %c0_11 = arith.constant 0 : index
    %27 = vector.load %arg10[%c7, %c0_11] : memref<27x128xf32, #tpu.memory_space<vmem>>, vector<1x32xf32>
    %cst_12 = arith.constant dense<0.000000e+00> : vector<16xf32>
    %28 = vector.multi_reduction <add>, %0, %cst_12 [1] : vector<16x32xf32> to vector<16xf32>
    %29 = vector.shape_cast %28 : vector<16xf32> to vector<16x1xf32>
    %cst_13 = arith.constant 3.200000e+01 : f32
    %30 = vector.broadcast %cst_13 : f32 to vector<16x1xf32>
    %31 = arith.divf %29, %30 : vector<16x1xf32>
    %32 = vector.broadcast %31 : vector<16x1xf32> to vector<16x32xf32>
    %33 = arith.subf %0, %32 : vector<16x32xf32>
    %34 = arith.mulf %33, %33 : vector<16x32xf32>
    %cst_14 = arith.constant dense<0.000000e+00> : vector<16xf32>
    %35 = vector.multi_reduction <add>, %34, %cst_14 [1] : vector<16x32xf32> to vector<16xf32>
    %36 = vector.shape_cast %35 : vector<16xf32> to vector<16x1xf32>
    %cst_15 = arith.constant 0.0322580636 : f32
    %37 = vector.broadcast %cst_15 : f32 to vector<16x1xf32>
    %38 = arith.mulf %36, %37 : vector<16x1xf32>
    %39 = vector.broadcast %26 : vector<1x32xf32> to vector<16x32xf32>
    %40 = arith.mulf %39, %33 : vector<16x32xf32>
    %41 = math.sqrt %38 : vector<16x1xf32>
    %cst_16 = arith.constant 9.99999997E-7 : f32
    %42 = vector.broadcast %cst_16 : f32 to vector<16x1xf32>
    %43 = arith.addf %41, %42 : vector<16x1xf32>
    %44 = vector.broadcast %43 : vector<16x1xf32> to vector<16x32xf32>
    %45 = arith.divf %40, %44 : vector<16x32xf32>
    %46 = vector.broadcast %27 : vector<1x32xf32> to vector<16x32xf32>
    %47 = arith.addf %45, %46 : vector<16x32xf32>
    %c0_17 = arith.constant 0 : index
    %c0_18 = arith.constant 0 : index
    %c0_19 = arith.constant 0 : index
    %48 = vector.load %arg4[%c0_17, %c0_18, %c0_19] : memref<2x32x96xf32, #tpu.memory_space<vmem>>, vector<1x32x96xf32>
    %49 = vector.shape_cast %48 : vector<1x32x96xf32> to vector<32x96xf32>
    %cst_20 = arith.constant dense<0.000000e+00> : vector<16x96xf32>
    %50 = tpu.matmul %47, %49, %cst_20 {dimension_numbers = #tpu.dot_dimension_numbers<[1], [0], [0], [1], [0, 0, 1, 1], [], []>} : vector<16x32xf32>, vector<32x96xf32>, vector<16x96xf32> -> vector<16x96xf32>
    %c0_21 = arith.constant 0 : index
    %c0_22 = arith.constant 0 : index
    %51 = vector.load %arg10[%c0_21, %c0_22] : memref<27x128xf32, #tpu.memory_space<vmem>>, vector<1x96xf32>
    %52 = vector.broadcast %51 : vector<1x96xf32> to vector<16x96xf32>
    %53 = arith.addf %50, %52 : vector<16x96xf32>
    %54 = vector.extract_strided_slice %53 {offsets = [0, 0], sizes = [16, 8], strides = [1, 1]} : vector<16x96xf32> to vector<16x8xf32>
    %55 = vector.extract_strided_slice %53 {offsets = [0, 8], sizes = [16, 8], strides = [1, 1]} : vector<16x96xf32> to vector<16x8xf32>
    %56 = vector.extract_strided_slice %53 {offsets = [0, 16], sizes = [16, 8], strides = [1, 1]} : vector<16x96xf32> to vector<16x8xf32>
    %57 = vector.extract_strided_slice %53 {offsets = [0, 24], sizes = [16, 8], strides = [1, 1]} : vector<16x96xf32> to vector<16x8xf32>
    %58 = vector.extract_strided_slice %53 {offsets = [0, 32], sizes = [16, 8], strides = [1, 1]} : vector<16x96xf32> to vector<16x8xf32>
    %59 = vector.extract_strided_slice %53 {offsets = [0, 40], sizes = [16, 8], strides = [1, 1]} : vector<16x96xf32> to vector<16x8xf32>
    %60 = vector.extract_strided_slice %53 {offsets = [0, 48], sizes = [16, 8], strides = [1, 1]} : vector<16x96xf32> to vector<16x8xf32>
    %61 = vector.extract_strided_slice %53 {offsets = [0, 56], sizes = [16, 8], strides = [1, 1]} : vector<16x96xf32> to vector<16x8xf32>
    %62 = vector.extract_strided_slice %53 {offsets = [0, 64], sizes = [16, 8], strides = [1, 1]} : vector<16x96xf32> to vector<16x8xf32>
    %63 = vector.extract_strided_slice %53 {offsets = [0, 72], sizes = [16, 8], strides = [1, 1]} : vector<16x96xf32> to vector<16x8xf32>
    %64 = vector.extract_strided_slice %53 {offsets = [0, 80], sizes = [16, 8], strides = [1, 1]} : vector<16x96xf32> to vector<16x8xf32>
    %65 = vector.extract_strided_slice %53 {offsets = [0, 88], sizes = [16, 8], strides = [1, 1]} : vector<16x96xf32> to vector<16x8xf32>
    %66 = tpu.concatenate %54, %55, %56, %57, %58, %59, %60, %61, %62, %63, %64, %65 in 0 : vector<16x8xf32>, vector<16x8xf32>, vector<16x8xf32>, vector<16x8xf32>, vector<16x8xf32>, vector<16x8xf32>, vector<16x8xf32>, vector<16x8xf32>, vector<16x8xf32>, vector<16x8xf32>, vector<16x8xf32>, vector<16x8xf32> -> vector<192x8xf32>
    %67 = vector.extract_strided_slice %66 {offsets = [0, 0], sizes = [64, 8], strides = [1, 1]} : vector<192x8xf32> to vector<64x8xf32>
    %68 = vector.extract_strided_slice %66 {offsets = [64, 0], sizes = [64, 8], strides = [1, 1]} : vector<192x8xf32> to vector<64x8xf32>
    %69 = vector.extract_strided_slice %66 {offsets = [128, 0], sizes = [64, 8], strides = [1, 1]} : vector<192x8xf32> to vector<64x8xf32>
    %70 = tpu.transpose %68, [1, 0] : vector<64x8xf32> -> vector<8x64xf32>
    %cst_23 = arith.constant dense<0.000000e+00> : vector<64x64xf32>
    %71 = tpu.matmul %67, %70, %cst_23 {dimension_numbers = #tpu.dot_dimension_numbers<[1], [0], [0], [1], [0, 0, 1, 1], [], []>} : vector<64x8xf32>, vector<8x64xf32>, vector<64x64xf32> -> vector<64x64xf32>
    %72 = arith.addf %71, %2 : vector<64x64xf32>
    %cst_24 = arith.constant dense<0xFF800000> : vector<64xf32>
    %73 = vector.multi_reduction <maximumf>, %72, %cst_24 [1] : vector<64x64xf32> to vector<64xf32>
    %74 = vector.shape_cast %73 : vector<64xf32> to vector<64x1xf32>
    %75 = vector.broadcast %74 : vector<64x1xf32> to vector<64x64xf32>
    %76 = arith.subf %72, %75 : vector<64x64xf32>
    %77 = math.exp %76 : vector<64x64xf32>
    %cst_25 = arith.constant dense<0.000000e+00> : vector<64xf32>
    %78 = vector.multi_reduction <add>, %77, %cst_25 [1] : vector<64x64xf32> to vector<64xf32>
    %79 = vector.shape_cast %78 : vector<64xf32> to vector<64x1xf32>
    %80 = vector.broadcast %79 : vector<64x1xf32> to vector<64x64xf32>
    %81 = arith.divf %77, %80 : vector<64x64xf32>
    %cst_26 = arith.constant dense<0.000000e+00> : vector<64x8xf32>
    %82 = tpu.matmul %81, %69, %cst_26 {dimension_numbers = #tpu.dot_dimension_numbers<[1], [0], [0], [1], [0, 0, 1, 1], [], []>} : vector<64x64xf32>, vector<64x8xf32>, vector<64x8xf32> -> vector<64x8xf32>
    %83 = vector.extract_strided_slice %82 {offsets = [0, 0], sizes = [16, 8], strides = [1, 1]} : vector<64x8xf32> to vector<16x8xf32>
    %84 = vector.extract_strided_slice %82 {offsets = [16, 0], sizes = [16, 8], strides = [1, 1]} : vector<64x8xf32> to vector<16x8xf32>
    %85 = vector.extract_strided_slice %82 {offsets = [32, 0], sizes = [16, 8], strides = [1, 1]} : vector<64x8xf32> to vector<16x8xf32>
    %86 = vector.extract_strided_slice %82 {offsets = [48, 0], sizes = [16, 8], strides = [1, 1]} : vector<64x8xf32> to vector<16x8xf32>
    %87 = tpu.concatenate %83, %84, %85, %86 in 1 : vector<16x8xf32>, vector<16x8xf32>, vector<16x8xf32>, vector<16x8xf32> -> vector<16x32xf32>
    %c0_27 = arith.constant 0 : index
    %c0_28 = arith.constant 0 : index
    %c0_29 = arith.constant 0 : index
    %c0_30 = arith.constant 0 : index
    %88 = vector.load %arg7[%c0_27, %c0_28, %c0_29, %c0_30] : memref<2x2x32x32xf32, #tpu.memory_space<vmem>>, vector<1x1x32x32xf32>
    %89 = vector.shape_cast %88 : vector<1x1x32x32xf32> to vector<32x32xf32>
    %cst_31 = arith.constant dense<0.000000e+00> : vector<16x32xf32>
    %90 = tpu.matmul %87, %89, %cst_31 {dimension_numbers = #tpu.dot_dimension_numbers<[1], [0], [0], [1], [0, 0, 1, 1], [], []>} : vector<16x32xf32>, vector<32x32xf32>, vector<16x32xf32> -> vector<16x32xf32>
    %91 = arith.addf %0, %90 : vector<16x32xf32>
    %c2 = arith.constant 2 : index
    %c0_32 = arith.constant 0 : index
    %92 = vector.load %arg10[%c2, %c0_32] : memref<27x128xf32, #tpu.memory_space<vmem>>, vector<1x32xf32>
    %93 = vector.broadcast %92 : vector<1x32xf32> to vector<16x32xf32>
    %94 = arith.addf %91, %93 : vector<16x32xf32>
    %c8 = arith.constant 8 : index
    %c0_33 = arith.constant 0 : index
    %95 = vector.load %arg10[%c8, %c0_33] : memref<27x128xf32, #tpu.memory_space<vmem>>, vector<1x32xf32>
    %c9 = arith.constant 9 : index
    %c0_34 = arith.constant 0 : index
    %96 = vector.load %arg10[%c9, %c0_34] : memref<27x128xf32, #tpu.memory_space<vmem>>, vector<1x32xf32>
    %cst_35 = arith.constant dense<0.000000e+00> : vector<16xf32>
    %97 = vector.multi_reduction <add>, %94, %cst_35 [1] : vector<16x32xf32> to vector<16xf32>
    %98 = vector.shape_cast %97 : vector<16xf32> to vector<16x1xf32>
    %cst_36 = arith.constant 3.200000e+01 : f32
    %99 = vector.broadcast %cst_36 : f32 to vector<16x1xf32>
    %100 = arith.divf %98, %99 : vector<16x1xf32>
    %101 = vector.broadcast %100 : vector<16x1xf32> to vector<16x32xf32>
    %102 = arith.subf %94, %101 : vector<16x32xf32>
    %103 = arith.mulf %102, %102 : vector<16x32xf32>
    %cst_37 = arith.constant dense<0.000000e+00> : vector<16xf32>
    %104 = vector.multi_reduction <add>, %103, %cst_37 [1] : vector<16x32xf32> to vector<16xf32>
    %105 = vector.shape_cast %104 : vector<16xf32> to vector<16x1xf32>
    %cst_38 = arith.constant 0.0322580636 : f32
    %106 = vector.broadcast %cst_38 : f32 to vector<16x1xf32>
    %107 = arith.mulf %105, %106 : vector<16x1xf32>
    %108 = vector.broadcast %95 : vector<1x32xf32> to vector<16x32xf32>
    %109 = arith.mulf %108, %102 : vector<16x32xf32>
    %110 = math.sqrt %107 : vector<16x1xf32>
    %cst_39 = arith.constant 9.99999997E-7 : f32
    %111 = vector.broadcast %cst_39 : f32 to vector<16x1xf32>
    %112 = arith.addf %110, %111 : vector<16x1xf32>
    %113 = vector.broadcast %112 : vector<16x1xf32> to vector<16x32xf32>
    %114 = arith.divf %109, %113 : vector<16x32xf32>
    %115 = vector.broadcast %96 : vector<1x32xf32> to vector<16x32xf32>
    %116 = arith.addf %114, %115 : vector<16x32xf32>
    %c0_40 = arith.constant 0 : index
    %c0_41 = arith.constant 0 : index
    %c0_42 = arith.constant 0 : index
    %117 = vector.load %arg5[%c0_40, %c0_41, %c0_42] : memref<2x32x32xf32, #tpu.memory_space<vmem>>, vector<1x32x32xf32>
    %118 = vector.shape_cast %117 : vector<1x32x32xf32> to vector<32x32xf32>
    %cst_43 = arith.constant dense<0.000000e+00> : vector<16x32xf32>
    %119 = tpu.matmul %116, %118, %cst_43 {dimension_numbers = #tpu.dot_dimension_numbers<[1], [0], [0], [1], [0, 0, 1, 1], [], []>} : vector<16x32xf32>, vector<32x32xf32>, vector<16x32xf32> -> vector<16x32xf32>
    %c1 = arith.constant 1 : index
    %c0_44 = arith.constant 0 : index
    %120 = vector.load %arg10[%c1, %c0_44] : memref<27x128xf32, #tpu.memory_space<vmem>>, vector<1x32xf32>
    %121 = vector.broadcast %120 : vector<1x32xf32> to vector<16x32xf32>
    %122 = arith.addf %119, %121 : vector<16x32xf32>
    %123 = vector.extract_strided_slice %122 {offsets = [0, 0], sizes = [16, 8], strides = [1, 1]} : vector<16x32xf32> to vector<16x8xf32>
    %124 = vector.extract_strided_slice %122 {offsets = [0, 8], sizes = [16, 8], strides = [1, 1]} : vector<16x32xf32> to vector<16x8xf32>
    %125 = vector.extract_strided_slice %122 {offsets = [0, 16], sizes = [16, 8], strides = [1, 1]} : vector<16x32xf32> to vector<16x8xf32>
    %126 = vector.extract_strided_slice %122 {offsets = [0, 24], sizes = [16, 8], strides = [1, 1]} : vector<16x32xf32> to vector<16x8xf32>
    %127 = tpu.concatenate %123, %124, %125, %126 in 0 : vector<16x8xf32>, vector<16x8xf32>, vector<16x8xf32>, vector<16x8xf32> -> vector<64x8xf32>
    %128 = vector.extract_strided_slice %25 {offsets = [0, 0], sizes = [64, 8], strides = [1, 1]} : vector<256x8xf32> to vector<64x8xf32>
    %129 = vector.extract_strided_slice %25 {offsets = [64, 0], sizes = [64, 8], strides = [1, 1]} : vector<256x8xf32> to vector<64x8xf32>
    %130 = tpu.transpose %128, [1, 0] : vector<64x8xf32> -> vector<8x64xf32>
    %cst_45 = arith.constant dense<0.000000e+00> : vector<64x64xf32>
    %131 = tpu.matmul %127, %130, %cst_45 {dimension_numbers = #tpu.dot_dimension_numbers<[1], [0], [0], [1], [0, 0, 1, 1], [], []>} : vector<64x8xf32>, vector<8x64xf32>, vector<64x64xf32> -> vector<64x64xf32>
    %132 = arith.addf %131, %3 : vector<64x64xf32>
    %cst_46 = arith.constant dense<0xFF800000> : vector<64xf32>
    %133 = vector.multi_reduction <maximumf>, %132, %cst_46 [1] : vector<64x64xf32> to vector<64xf32>
    %134 = vector.shape_cast %133 : vector<64xf32> to vector<64x1xf32>
    %135 = vector.broadcast %134 : vector<64x1xf32> to vector<64x64xf32>
    %136 = arith.subf %132, %135 : vector<64x64xf32>
    %137 = math.exp %136 : vector<64x64xf32>
    %cst_47 = arith.constant dense<0.000000e+00> : vector<64xf32>
    %138 = vector.multi_reduction <add>, %137, %cst_47 [1] : vector<64x64xf32> to vector<64xf32>
    %139 = vector.shape_cast %138 : vector<64xf32> to vector<64x1xf32>
    %140 = vector.broadcast %139 : vector<64x1xf32> to vector<64x64xf32>
    %141 = arith.divf %137, %140 : vector<64x64xf32>
    %cst_48 = arith.constant dense<0.000000e+00> : vector<64x8xf32>
    %142 = tpu.matmul %141, %129, %cst_48 {dimension_numbers = #tpu.dot_dimension_numbers<[1], [0], [0], [1], [0, 0, 1, 1], [], []>} : vector<64x64xf32>, vector<64x8xf32>, vector<64x8xf32> -> vector<64x8xf32>
    %143 = vector.extract_strided_slice %142 {offsets = [0, 0], sizes = [16, 8], strides = [1, 1]} : vector<64x8xf32> to vector<16x8xf32>
    %144 = vector.extract_strided_slice %142 {offsets = [16, 0], sizes = [16, 8], strides = [1, 1]} : vector<64x8xf32> to vector<16x8xf32>
    %145 = vector.extract_strided_slice %142 {offsets = [32, 0], sizes = [16, 8], strides = [1, 1]} : vector<64x8xf32> to vector<16x8xf32>
    %146 = vector.extract_strided_slice %142 {offsets = [48, 0], sizes = [16, 8], strides = [1, 1]} : vector<64x8xf32> to vector<16x8xf32>
    %147 = tpu.concatenate %143, %144, %145, %146 in 1 : vector<16x8xf32>, vector<16x8xf32>, vector<16x8xf32>, vector<16x8xf32> -> vector<16x32xf32>
    %c0_49 = arith.constant 0 : index
    %c1_50 = arith.constant 1 : index
    %c0_51 = arith.constant 0 : index
    %c0_52 = arith.constant 0 : index
    %148 = vector.load %arg7[%c0_49, %c1_50, %c0_51, %c0_52] : memref<2x2x32x32xf32, #tpu.memory_space<vmem>>, vector<1x1x32x32xf32>
    %149 = vector.shape_cast %148 : vector<1x1x32x32xf32> to vector<32x32xf32>
    %cst_53 = arith.constant dense<0.000000e+00> : vector<16x32xf32>
    %150 = tpu.matmul %147, %149, %cst_53 {dimension_numbers = #tpu.dot_dimension_numbers<[1], [0], [0], [1], [0, 0, 1, 1], [], []>} : vector<16x32xf32>, vector<32x32xf32>, vector<16x32xf32> -> vector<16x32xf32>
    %151 = arith.addf %94, %150 : vector<16x32xf32>
    %c3 = arith.constant 3 : index
    %c0_54 = arith.constant 0 : index
    %152 = vector.load %arg10[%c3, %c0_54] : memref<27x128xf32, #tpu.memory_space<vmem>>, vector<1x32xf32>
    %153 = vector.broadcast %152 : vector<1x32xf32> to vector<16x32xf32>
    %154 = arith.addf %151, %153 : vector<16x32xf32>
    %c10 = arith.constant 10 : index
    %c0_55 = arith.constant 0 : index
    %155 = vector.load %arg10[%c10, %c0_55] : memref<27x128xf32, #tpu.memory_space<vmem>>, vector<1x32xf32>
    %c11 = arith.constant 11 : index
    %c0_56 = arith.constant 0 : index
    %156 = vector.load %arg10[%c11, %c0_56] : memref<27x128xf32, #tpu.memory_space<vmem>>, vector<1x32xf32>
    %cst_57 = arith.constant dense<0.000000e+00> : vector<16xf32>
    %157 = vector.multi_reduction <add>, %154, %cst_57 [1] : vector<16x32xf32> to vector<16xf32>
    %158 = vector.shape_cast %157 : vector<16xf32> to vector<16x1xf32>
    %cst_58 = arith.constant 3.200000e+01 : f32
    %159 = vector.broadcast %cst_58 : f32 to vector<16x1xf32>
    %160 = arith.divf %158, %159 : vector<16x1xf32>
    %161 = vector.broadcast %160 : vector<16x1xf32> to vector<16x32xf32>
    %162 = arith.subf %154, %161 : vector<16x32xf32>
    %163 = arith.mulf %162, %162 : vector<16x32xf32>
    %cst_59 = arith.constant dense<0.000000e+00> : vector<16xf32>
    %164 = vector.multi_reduction <add>, %163, %cst_59 [1] : vector<16x32xf32> to vector<16xf32>
    %165 = vector.shape_cast %164 : vector<16xf32> to vector<16x1xf32>
    %cst_60 = arith.constant 0.0322580636 : f32
    %166 = vector.broadcast %cst_60 : f32 to vector<16x1xf32>
    %167 = arith.mulf %165, %166 : vector<16x1xf32>
    %168 = vector.broadcast %155 : vector<1x32xf32> to vector<16x32xf32>
    %169 = arith.mulf %168, %162 : vector<16x32xf32>
    %170 = math.sqrt %167 : vector<16x1xf32>
    %cst_61 = arith.constant 9.99999997E-7 : f32
    %171 = vector.broadcast %cst_61 : f32 to vector<16x1xf32>
    %172 = arith.addf %170, %171 : vector<16x1xf32>
    %173 = vector.broadcast %172 : vector<16x1xf32> to vector<16x32xf32>
    %174 = arith.divf %169, %173 : vector<16x32xf32>
    %175 = vector.broadcast %156 : vector<1x32xf32> to vector<16x32xf32>
    %176 = arith.addf %174, %175 : vector<16x32xf32>
    %c0_62 = arith.constant 0 : index
    %c0_63 = arith.constant 0 : index
    %c0_64 = arith.constant 0 : index
    %177 = vector.load %arg8[%c0_62, %c0_63, %c0_64] : memref<2x32x64xf32, #tpu.memory_space<vmem>>, vector<1x32x64xf32>
    %178 = vector.shape_cast %177 : vector<1x32x64xf32> to vector<32x64xf32>
    %cst_65 = arith.constant dense<0.000000e+00> : vector<16x64xf32>
    %179 = tpu.matmul %176, %178, %cst_65 {dimension_numbers = #tpu.dot_dimension_numbers<[1], [0], [0], [1], [0, 0, 1, 1], [], []>} : vector<16x32xf32>, vector<32x64xf32>, vector<16x64xf32> -> vector<16x64xf32>
    %c4 = arith.constant 4 : index
    %c0_66 = arith.constant 0 : index
    %180 = vector.load %arg10[%c4, %c0_66] : memref<27x128xf32, #tpu.memory_space<vmem>>, vector<1x64xf32>
    %181 = vector.broadcast %180 : vector<1x64xf32> to vector<16x64xf32>
    %182 = arith.addf %179, %181 : vector<16x64xf32>
    %cst_67 = arith.constant 0.000000e+00 : f32
    %183 = vector.broadcast %cst_67 : f32 to vector<16x64xf32>
    %184 = arith.maximumf %182, %183 : vector<16x64xf32>
    %c0_68 = arith.constant 0 : index
    %c0_69 = arith.constant 0 : index
    %c0_70 = arith.constant 0 : index
    %185 = vector.load %arg9[%c0_68, %c0_69, %c0_70] : memref<2x64x32xf32, #tpu.memory_space<vmem>>, vector<1x64x32xf32>
    %186 = vector.shape_cast %185 : vector<1x64x32xf32> to vector<64x32xf32>
    %cst_71 = arith.constant dense<0.000000e+00> : vector<16x32xf32>
    %187 = tpu.matmul %184, %186, %cst_71 {dimension_numbers = #tpu.dot_dimension_numbers<[1], [0], [0], [1], [0, 0, 1, 1], [], []>} : vector<16x64xf32>, vector<64x32xf32>, vector<16x32xf32> -> vector<16x32xf32>
    %188 = arith.addf %154, %187 : vector<16x32xf32>
    %c5 = arith.constant 5 : index
    %c0_72 = arith.constant 0 : index
    %189 = vector.load %arg10[%c5, %c0_72] : memref<27x128xf32, #tpu.memory_space<vmem>>, vector<1x32xf32>
    %190 = vector.broadcast %189 : vector<1x32xf32> to vector<16x32xf32>
    %191 = arith.addf %188, %190 : vector<16x32xf32>
    %c18 = arith.constant 18 : index
    %c0_73 = arith.constant 0 : index
    %192 = vector.load %arg10[%c18, %c0_73] : memref<27x128xf32, #tpu.memory_space<vmem>>, vector<1x32xf32>
    %c19 = arith.constant 19 : index
    %c0_74 = arith.constant 0 : index
    %193 = vector.load %arg10[%c19, %c0_74] : memref<27x128xf32, #tpu.memory_space<vmem>>, vector<1x32xf32>
    %cst_75 = arith.constant dense<0.000000e+00> : vector<16xf32>
    %194 = vector.multi_reduction <add>, %191, %cst_75 [1] : vector<16x32xf32> to vector<16xf32>
    %195 = vector.shape_cast %194 : vector<16xf32> to vector<16x1xf32>
    %cst_76 = arith.constant 3.200000e+01 : f32
    %196 = vector.broadcast %cst_76 : f32 to vector<16x1xf32>
    %197 = arith.divf %195, %196 : vector<16x1xf32>
    %198 = vector.broadcast %197 : vector<16x1xf32> to vector<16x32xf32>
    %199 = arith.subf %191, %198 : vector<16x32xf32>
    %200 = arith.mulf %199, %199 : vector<16x32xf32>
    %cst_77 = arith.constant dense<0.000000e+00> : vector<16xf32>
    %201 = vector.multi_reduction <add>, %200, %cst_77 [1] : vector<16x32xf32> to vector<16xf32>
    %202 = vector.shape_cast %201 : vector<16xf32> to vector<16x1xf32>
    %cst_78 = arith.constant 0.0322580636 : f32
    %203 = vector.broadcast %cst_78 : f32 to vector<16x1xf32>
    %204 = arith.mulf %202, %203 : vector<16x1xf32>
    %205 = vector.broadcast %192 : vector<1x32xf32> to vector<16x32xf32>
    %206 = arith.mulf %205, %199 : vector<16x32xf32>
    %207 = math.sqrt %204 : vector<16x1xf32>
    %cst_79 = arith.constant 9.99999997E-7 : f32
    %208 = vector.broadcast %cst_79 : f32 to vector<16x1xf32>
    %209 = arith.addf %207, %208 : vector<16x1xf32>
    %210 = vector.broadcast %209 : vector<16x1xf32> to vector<16x32xf32>
    %211 = arith.divf %206, %210 : vector<16x32xf32>
    %212 = vector.broadcast %193 : vector<1x32xf32> to vector<16x32xf32>
    %213 = arith.addf %211, %212 : vector<16x32xf32>
    %c1_80 = arith.constant 1 : index
    %c0_81 = arith.constant 0 : index
    %c0_82 = arith.constant 0 : index
    %214 = vector.load %arg4[%c1_80, %c0_81, %c0_82] : memref<2x32x96xf32, #tpu.memory_space<vmem>>, vector<1x32x96xf32>
    %215 = vector.shape_cast %214 : vector<1x32x96xf32> to vector<32x96xf32>
    %cst_83 = arith.constant dense<0.000000e+00> : vector<16x96xf32>
    %216 = tpu.matmul %213, %215, %cst_83 {dimension_numbers = #tpu.dot_dimension_numbers<[1], [0], [0], [1], [0, 0, 1, 1], [], []>} : vector<16x32xf32>, vector<32x96xf32>, vector<16x96xf32> -> vector<16x96xf32>
    %c12 = arith.constant 12 : index
    %c0_84 = arith.constant 0 : index
    %217 = vector.load %arg10[%c12, %c0_84] : memref<27x128xf32, #tpu.memory_space<vmem>>, vector<1x96xf32>
    %218 = vector.broadcast %217 : vector<1x96xf32> to vector<16x96xf32>
    %219 = arith.addf %216, %218 : vector<16x96xf32>
    %220 = vector.extract_strided_slice %219 {offsets = [0, 0], sizes = [16, 8], strides = [1, 1]} : vector<16x96xf32> to vector<16x8xf32>
    %221 = vector.extract_strided_slice %219 {offsets = [0, 8], sizes = [16, 8], strides = [1, 1]} : vector<16x96xf32> to vector<16x8xf32>
    %222 = vector.extract_strided_slice %219 {offsets = [0, 16], sizes = [16, 8], strides = [1, 1]} : vector<16x96xf32> to vector<16x8xf32>
    %223 = vector.extract_strided_slice %219 {offsets = [0, 24], sizes = [16, 8], strides = [1, 1]} : vector<16x96xf32> to vector<16x8xf32>
    %224 = vector.extract_strided_slice %219 {offsets = [0, 32], sizes = [16, 8], strides = [1, 1]} : vector<16x96xf32> to vector<16x8xf32>
    %225 = vector.extract_strided_slice %219 {offsets = [0, 40], sizes = [16, 8], strides = [1, 1]} : vector<16x96xf32> to vector<16x8xf32>
    %226 = vector.extract_strided_slice %219 {offsets = [0, 48], sizes = [16, 8], strides = [1, 1]} : vector<16x96xf32> to vector<16x8xf32>
    %227 = vector.extract_strided_slice %219 {offsets = [0, 56], sizes = [16, 8], strides = [1, 1]} : vector<16x96xf32> to vector<16x8xf32>
    %228 = vector.extract_strided_slice %219 {offsets = [0, 64], sizes = [16, 8], strides = [1, 1]} : vector<16x96xf32> to vector<16x8xf32>
    %229 = vector.extract_strided_slice %219 {offsets = [0, 72], sizes = [16, 8], strides = [1, 1]} : vector<16x96xf32> to vector<16x8xf32>
    %230 = vector.extract_strided_slice %219 {offsets = [0, 80], sizes = [16, 8], strides = [1, 1]} : vector<16x96xf32> to vector<16x8xf32>
    %231 = vector.extract_strided_slice %219 {offsets = [0, 88], sizes = [16, 8], strides = [1, 1]} : vector<16x96xf32> to vector<16x8xf32>
    %232 = tpu.concatenate %220, %221, %222, %223, %224, %225, %226, %227, %228, %229, %230, %231 in 0 : vector<16x8xf32>, vector<16x8xf32>, vector<16x8xf32>, vector<16x8xf32>, vector<16x8xf32>, vector<16x8xf32>, vector<16x8xf32>, vector<16x8xf32>, vector<16x8xf32>, vector<16x8xf32>, vector<16x8xf32>, vector<16x8xf32> -> vector<192x8xf32>
    %233 = vector.extract_strided_slice %232 {offsets = [0, 0], sizes = [64, 8], strides = [1, 1]} : vector<192x8xf32> to vector<64x8xf32>
    %234 = vector.extract_strided_slice %232 {offsets = [64, 0], sizes = [64, 8], strides = [1, 1]} : vector<192x8xf32> to vector<64x8xf32>
    %235 = vector.extract_strided_slice %232 {offsets = [128, 0], sizes = [64, 8], strides = [1, 1]} : vector<192x8xf32> to vector<64x8xf32>
    %236 = tpu.transpose %234, [1, 0] : vector<64x8xf32> -> vector<8x64xf32>
    %cst_85 = arith.constant dense<0.000000e+00> : vector<64x64xf32>
    %237 = tpu.matmul %233, %236, %cst_85 {dimension_numbers = #tpu.dot_dimension_numbers<[1], [0], [0], [1], [0, 0, 1, 1], [], []>} : vector<64x8xf32>, vector<8x64xf32>, vector<64x64xf32> -> vector<64x64xf32>
    %238 = arith.addf %237, %2 : vector<64x64xf32>
    %cst_86 = arith.constant dense<0xFF800000> : vector<64xf32>
    %239 = vector.multi_reduction <maximumf>, %238, %cst_86 [1] : vector<64x64xf32> to vector<64xf32>
    %240 = vector.shape_cast %239 : vector<64xf32> to vector<64x1xf32>
    %241 = vector.broadcast %240 : vector<64x1xf32> to vector<64x64xf32>
    %242 = arith.subf %238, %241 : vector<64x64xf32>
    %243 = math.exp %242 : vector<64x64xf32>
    %cst_87 = arith.constant dense<0.000000e+00> : vector<64xf32>
    %244 = vector.multi_reduction <add>, %243, %cst_87 [1] : vector<64x64xf32> to vector<64xf32>
    %245 = vector.shape_cast %244 : vector<64xf32> to vector<64x1xf32>
    %246 = vector.broadcast %245 : vector<64x1xf32> to vector<64x64xf32>
    %247 = arith.divf %243, %246 : vector<64x64xf32>
    %cst_88 = arith.constant dense<0.000000e+00> : vector<64x8xf32>
    %248 = tpu.matmul %247, %235, %cst_88 {dimension_numbers = #tpu.dot_dimension_numbers<[1], [0], [0], [1], [0, 0, 1, 1], [], []>} : vector<64x64xf32>, vector<64x8xf32>, vector<64x8xf32> -> vector<64x8xf32>
    %249 = vector.extract_strided_slice %248 {offsets = [0, 0], sizes = [16, 8], strides = [1, 1]} : vector<64x8xf32> to vector<16x8xf32>
    %250 = vector.extract_strided_slice %248 {offsets = [16, 0], sizes = [16, 8], strides = [1, 1]} : vector<64x8xf32> to vector<16x8xf32>
    %251 = vector.extract_strided_slice %248 {offsets = [32, 0], sizes = [16, 8], strides = [1, 1]} : vector<64x8xf32> to vector<16x8xf32>
    %252 = vector.extract_strided_slice %248 {offsets = [48, 0], sizes = [16, 8], strides = [1, 1]} : vector<64x8xf32> to vector<16x8xf32>
    %253 = tpu.concatenate %249, %250, %251, %252 in 1 : vector<16x8xf32>, vector<16x8xf32>, vector<16x8xf32>, vector<16x8xf32> -> vector<16x32xf32>
    %c1_89 = arith.constant 1 : index
    %c0_90 = arith.constant 0 : index
    %c0_91 = arith.constant 0 : index
    %c0_92 = arith.constant 0 : index
    %254 = vector.load %arg7[%c1_89, %c0_90, %c0_91, %c0_92] : memref<2x2x32x32xf32, #tpu.memory_space<vmem>>, vector<1x1x32x32xf32>
    %255 = vector.shape_cast %254 : vector<1x1x32x32xf32> to vector<32x32xf32>
    %cst_93 = arith.constant dense<0.000000e+00> : vector<16x32xf32>
    %256 = tpu.matmul %253, %255, %cst_93 {dimension_numbers = #tpu.dot_dimension_numbers<[1], [0], [0], [1], [0, 0, 1, 1], [], []>} : vector<16x32xf32>, vector<32x32xf32>, vector<16x32xf32> -> vector<16x32xf32>
    %257 = arith.addf %191, %256 : vector<16x32xf32>
    %c14 = arith.constant 14 : index
    %c0_94 = arith.constant 0 : index
    %258 = vector.load %arg10[%c14, %c0_94] : memref<27x128xf32, #tpu.memory_space<vmem>>, vector<1x32xf32>
    %259 = vector.broadcast %258 : vector<1x32xf32> to vector<16x32xf32>
    %260 = arith.addf %257, %259 : vector<16x32xf32>
    %c20 = arith.constant 20 : index
    %c0_95 = arith.constant 0 : index
    %261 = vector.load %arg10[%c20, %c0_95] : memref<27x128xf32, #tpu.memory_space<vmem>>, vector<1x32xf32>
    %c21 = arith.constant 21 : index
    %c0_96 = arith.constant 0 : index
    %262 = vector.load %arg10[%c21, %c0_96] : memref<27x128xf32, #tpu.memory_space<vmem>>, vector<1x32xf32>
    %cst_97 = arith.constant dense<0.000000e+00> : vector<16xf32>
    %263 = vector.multi_reduction <add>, %260, %cst_97 [1] : vector<16x32xf32> to vector<16xf32>
    %264 = vector.shape_cast %263 : vector<16xf32> to vector<16x1xf32>
    %cst_98 = arith.constant 3.200000e+01 : f32
    %265 = vector.broadcast %cst_98 : f32 to vector<16x1xf32>
    %266 = arith.divf %264, %265 : vector<16x1xf32>
    %267 = vector.broadcast %266 : vector<16x1xf32> to vector<16x32xf32>
    %268 = arith.subf %260, %267 : vector<16x32xf32>
    %269 = arith.mulf %268, %268 : vector<16x32xf32>
    %cst_99 = arith.constant dense<0.000000e+00> : vector<16xf32>
    %270 = vector.multi_reduction <add>, %269, %cst_99 [1] : vector<16x32xf32> to vector<16xf32>
    %271 = vector.shape_cast %270 : vector<16xf32> to vector<16x1xf32>
    %cst_100 = arith.constant 0.0322580636 : f32
    %272 = vector.broadcast %cst_100 : f32 to vector<16x1xf32>
    %273 = arith.mulf %271, %272 : vector<16x1xf32>
    %274 = vector.broadcast %261 : vector<1x32xf32> to vector<16x32xf32>
    %275 = arith.mulf %274, %268 : vector<16x32xf32>
    %276 = math.sqrt %273 : vector<16x1xf32>
    %cst_101 = arith.constant 9.99999997E-7 : f32
    %277 = vector.broadcast %cst_101 : f32 to vector<16x1xf32>
    %278 = arith.addf %276, %277 : vector<16x1xf32>
    %279 = vector.broadcast %278 : vector<16x1xf32> to vector<16x32xf32>
    %280 = arith.divf %275, %279 : vector<16x32xf32>
    %281 = vector.broadcast %262 : vector<1x32xf32> to vector<16x32xf32>
    %282 = arith.addf %280, %281 : vector<16x32xf32>
    %c1_102 = arith.constant 1 : index
    %c0_103 = arith.constant 0 : index
    %c0_104 = arith.constant 0 : index
    %283 = vector.load %arg5[%c1_102, %c0_103, %c0_104] : memref<2x32x32xf32, #tpu.memory_space<vmem>>, vector<1x32x32xf32>
    %284 = vector.shape_cast %283 : vector<1x32x32xf32> to vector<32x32xf32>
    %cst_105 = arith.constant dense<0.000000e+00> : vector<16x32xf32>
    %285 = tpu.matmul %282, %284, %cst_105 {dimension_numbers = #tpu.dot_dimension_numbers<[1], [0], [0], [1], [0, 0, 1, 1], [], []>} : vector<16x32xf32>, vector<32x32xf32>, vector<16x32xf32> -> vector<16x32xf32>
    %c13 = arith.constant 13 : index
    %c0_106 = arith.constant 0 : index
    %286 = vector.load %arg10[%c13, %c0_106] : memref<27x128xf32, #tpu.memory_space<vmem>>, vector<1x32xf32>
    %287 = vector.broadcast %286 : vector<1x32xf32> to vector<16x32xf32>
    %288 = arith.addf %285, %287 : vector<16x32xf32>
    %289 = vector.extract_strided_slice %288 {offsets = [0, 0], sizes = [16, 8], strides = [1, 1]} : vector<16x32xf32> to vector<16x8xf32>
    %290 = vector.extract_strided_slice %288 {offsets = [0, 8], sizes = [16, 8], strides = [1, 1]} : vector<16x32xf32> to vector<16x8xf32>
    %291 = vector.extract_strided_slice %288 {offsets = [0, 16], sizes = [16, 8], strides = [1, 1]} : vector<16x32xf32> to vector<16x8xf32>
    %292 = vector.extract_strided_slice %288 {offsets = [0, 24], sizes = [16, 8], strides = [1, 1]} : vector<16x32xf32> to vector<16x8xf32>
    %293 = tpu.concatenate %289, %290, %291, %292 in 0 : vector<16x8xf32>, vector<16x8xf32>, vector<16x8xf32>, vector<16x8xf32> -> vector<64x8xf32>
    %294 = vector.extract_strided_slice %25 {offsets = [128, 0], sizes = [64, 8], strides = [1, 1]} : vector<256x8xf32> to vector<64x8xf32>
    %295 = vector.extract_strided_slice %25 {offsets = [192, 0], sizes = [64, 8], strides = [1, 1]} : vector<256x8xf32> to vector<64x8xf32>
    %296 = tpu.transpose %294, [1, 0] : vector<64x8xf32> -> vector<8x64xf32>
    %cst_107 = arith.constant dense<0.000000e+00> : vector<64x64xf32>
    %297 = tpu.matmul %293, %296, %cst_107 {dimension_numbers = #tpu.dot_dimension_numbers<[1], [0], [0], [1], [0, 0, 1, 1], [], []>} : vector<64x8xf32>, vector<8x64xf32>, vector<64x64xf32> -> vector<64x64xf32>
    %298 = arith.addf %297, %3 : vector<64x64xf32>
    %cst_108 = arith.constant dense<0xFF800000> : vector<64xf32>
    %299 = vector.multi_reduction <maximumf>, %298, %cst_108 [1] : vector<64x64xf32> to vector<64xf32>
    %300 = vector.shape_cast %299 : vector<64xf32> to vector<64x1xf32>
    %301 = vector.broadcast %300 : vector<64x1xf32> to vector<64x64xf32>
    %302 = arith.subf %298, %301 : vector<64x64xf32>
    %303 = math.exp %302 : vector<64x64xf32>
    %cst_109 = arith.constant dense<0.000000e+00> : vector<64xf32>
    %304 = vector.multi_reduction <add>, %303, %cst_109 [1] : vector<64x64xf32> to vector<64xf32>
    %305 = vector.shape_cast %304 : vector<64xf32> to vector<64x1xf32>
    %306 = vector.broadcast %305 : vector<64x1xf32> to vector<64x64xf32>
    %307 = arith.divf %303, %306 : vector<64x64xf32>
    %cst_110 = arith.constant dense<0.000000e+00> : vector<64x8xf32>
    %308 = tpu.matmul %307, %295, %cst_110 {dimension_numbers = #tpu.dot_dimension_numbers<[1], [0], [0], [1], [0, 0, 1, 1], [], []>} : vector<64x64xf32>, vector<64x8xf32>, vector<64x8xf32> -> vector<64x8xf32>
    %309 = vector.extract_strided_slice %308 {offsets = [0, 0], sizes = [16, 8], strides = [1, 1]} : vector<64x8xf32> to vector<16x8xf32>
    %310 = vector.extract_strided_slice %308 {offsets = [16, 0], sizes = [16, 8], strides = [1, 1]} : vector<64x8xf32> to vector<16x8xf32>
    %311 = vector.extract_strided_slice %308 {offsets = [32, 0], sizes = [16, 8], strides = [1, 1]} : vector<64x8xf32> to vector<16x8xf32>
    %312 = vector.extract_strided_slice %308 {offsets = [48, 0], sizes = [16, 8], strides = [1, 1]} : vector<64x8xf32> to vector<16x8xf32>
    %313 = tpu.concatenate %309, %310, %311, %312 in 1 : vector<16x8xf32>, vector<16x8xf32>, vector<16x8xf32>, vector<16x8xf32> -> vector<16x32xf32>
    %c1_111 = arith.constant 1 : index
    %c1_112 = arith.constant 1 : index
    %c0_113 = arith.constant 0 : index
    %c0_114 = arith.constant 0 : index
    %314 = vector.load %arg7[%c1_111, %c1_112, %c0_113, %c0_114] : memref<2x2x32x32xf32, #tpu.memory_space<vmem>>, vector<1x1x32x32xf32>
    %315 = vector.shape_cast %314 : vector<1x1x32x32xf32> to vector<32x32xf32>
    %cst_115 = arith.constant dense<0.000000e+00> : vector<16x32xf32>
    %316 = tpu.matmul %313, %315, %cst_115 {dimension_numbers = #tpu.dot_dimension_numbers<[1], [0], [0], [1], [0, 0, 1, 1], [], []>} : vector<16x32xf32>, vector<32x32xf32>, vector<16x32xf32> -> vector<16x32xf32>
    %317 = arith.addf %260, %316 : vector<16x32xf32>
    %c15 = arith.constant 15 : index
    %c0_116 = arith.constant 0 : index
    %318 = vector.load %arg10[%c15, %c0_116] : memref<27x128xf32, #tpu.memory_space<vmem>>, vector<1x32xf32>
    %319 = vector.broadcast %318 : vector<1x32xf32> to vector<16x32xf32>
    %320 = arith.addf %317, %319 : vector<16x32xf32>
    %c22 = arith.constant 22 : index
    %c0_117 = arith.constant 0 : index
    %321 = vector.load %arg10[%c22, %c0_117] : memref<27x128xf32, #tpu.memory_space<vmem>>, vector<1x32xf32>
    %c23 = arith.constant 23 : index
    %c0_118 = arith.constant 0 : index
    %322 = vector.load %arg10[%c23, %c0_118] : memref<27x128xf32, #tpu.memory_space<vmem>>, vector<1x32xf32>
    %cst_119 = arith.constant dense<0.000000e+00> : vector<16xf32>
    %323 = vector.multi_reduction <add>, %320, %cst_119 [1] : vector<16x32xf32> to vector<16xf32>
    %324 = vector.shape_cast %323 : vector<16xf32> to vector<16x1xf32>
    %cst_120 = arith.constant 3.200000e+01 : f32
    %325 = vector.broadcast %cst_120 : f32 to vector<16x1xf32>
    %326 = arith.divf %324, %325 : vector<16x1xf32>
    %327 = vector.broadcast %326 : vector<16x1xf32> to vector<16x32xf32>
    %328 = arith.subf %320, %327 : vector<16x32xf32>
    %329 = arith.mulf %328, %328 : vector<16x32xf32>
    %cst_121 = arith.constant dense<0.000000e+00> : vector<16xf32>
    %330 = vector.multi_reduction <add>, %329, %cst_121 [1] : vector<16x32xf32> to vector<16xf32>
    %331 = vector.shape_cast %330 : vector<16xf32> to vector<16x1xf32>
    %cst_122 = arith.constant 0.0322580636 : f32
    %332 = vector.broadcast %cst_122 : f32 to vector<16x1xf32>
    %333 = arith.mulf %331, %332 : vector<16x1xf32>
    %334 = vector.broadcast %321 : vector<1x32xf32> to vector<16x32xf32>
    %335 = arith.mulf %334, %328 : vector<16x32xf32>
    %336 = math.sqrt %333 : vector<16x1xf32>
    %cst_123 = arith.constant 9.99999997E-7 : f32
    %337 = vector.broadcast %cst_123 : f32 to vector<16x1xf32>
    %338 = arith.addf %336, %337 : vector<16x1xf32>
    %339 = vector.broadcast %338 : vector<16x1xf32> to vector<16x32xf32>
    %340 = arith.divf %335, %339 : vector<16x32xf32>
    %341 = vector.broadcast %322 : vector<1x32xf32> to vector<16x32xf32>
    %342 = arith.addf %340, %341 : vector<16x32xf32>
    %c1_124 = arith.constant 1 : index
    %c0_125 = arith.constant 0 : index
    %c0_126 = arith.constant 0 : index
    %343 = vector.load %arg8[%c1_124, %c0_125, %c0_126] : memref<2x32x64xf32, #tpu.memory_space<vmem>>, vector<1x32x64xf32>
    %344 = vector.shape_cast %343 : vector<1x32x64xf32> to vector<32x64xf32>
    %cst_127 = arith.constant dense<0.000000e+00> : vector<16x64xf32>
    %345 = tpu.matmul %342, %344, %cst_127 {dimension_numbers = #tpu.dot_dimension_numbers<[1], [0], [0], [1], [0, 0, 1, 1], [], []>} : vector<16x32xf32>, vector<32x64xf32>, vector<16x64xf32> -> vector<16x64xf32>
    %c16 = arith.constant 16 : index
    %c0_128 = arith.constant 0 : index
    %346 = vector.load %arg10[%c16, %c0_128] : memref<27x128xf32, #tpu.memory_space<vmem>>, vector<1x64xf32>
    %347 = vector.broadcast %346 : vector<1x64xf32> to vector<16x64xf32>
    %348 = arith.addf %345, %347 : vector<16x64xf32>
    %cst_129 = arith.constant 0.000000e+00 : f32
    %349 = vector.broadcast %cst_129 : f32 to vector<16x64xf32>
    %350 = arith.maximumf %348, %349 : vector<16x64xf32>
    %c1_130 = arith.constant 1 : index
    %c0_131 = arith.constant 0 : index
    %c0_132 = arith.constant 0 : index
    %351 = vector.load %arg9[%c1_130, %c0_131, %c0_132] : memref<2x64x32xf32, #tpu.memory_space<vmem>>, vector<1x64x32xf32>
    %352 = vector.shape_cast %351 : vector<1x64x32xf32> to vector<64x32xf32>
    %cst_133 = arith.constant dense<0.000000e+00> : vector<16x32xf32>
    %353 = tpu.matmul %350, %352, %cst_133 {dimension_numbers = #tpu.dot_dimension_numbers<[1], [0], [0], [1], [0, 0, 1, 1], [], []>} : vector<16x64xf32>, vector<64x32xf32>, vector<16x32xf32> -> vector<16x32xf32>
    %354 = arith.addf %320, %353 : vector<16x32xf32>
    %c17 = arith.constant 17 : index
    %c0_134 = arith.constant 0 : index
    %355 = vector.load %arg10[%c17, %c0_134] : memref<27x128xf32, #tpu.memory_space<vmem>>, vector<1x32xf32>
    %356 = vector.broadcast %355 : vector<1x32xf32> to vector<16x32xf32>
    %357 = arith.addf %354, %356 : vector<16x32xf32>
    %c25 = arith.constant 25 : index
    %c0_135 = arith.constant 0 : index
    %358 = vector.load %arg10[%c25, %c0_135] : memref<27x128xf32, #tpu.memory_space<vmem>>, vector<1x32xf32>
    %c26 = arith.constant 26 : index
    %c0_136 = arith.constant 0 : index
    %359 = vector.load %arg10[%c26, %c0_136] : memref<27x128xf32, #tpu.memory_space<vmem>>, vector<1x32xf32>
    %cst_137 = arith.constant dense<0.000000e+00> : vector<16xf32>
    %360 = vector.multi_reduction <add>, %357, %cst_137 [1] : vector<16x32xf32> to vector<16xf32>
    %361 = vector.shape_cast %360 : vector<16xf32> to vector<16x1xf32>
    %cst_138 = arith.constant 3.200000e+01 : f32
    %362 = vector.broadcast %cst_138 : f32 to vector<16x1xf32>
    %363 = arith.divf %361, %362 : vector<16x1xf32>
    %364 = vector.broadcast %363 : vector<16x1xf32> to vector<16x32xf32>
    %365 = arith.subf %357, %364 : vector<16x32xf32>
    %366 = arith.mulf %365, %365 : vector<16x32xf32>
    %cst_139 = arith.constant dense<0.000000e+00> : vector<16xf32>
    %367 = vector.multi_reduction <add>, %366, %cst_139 [1] : vector<16x32xf32> to vector<16xf32>
    %368 = vector.shape_cast %367 : vector<16xf32> to vector<16x1xf32>
    %cst_140 = arith.constant 0.0322580636 : f32
    %369 = vector.broadcast %cst_140 : f32 to vector<16x1xf32>
    %370 = arith.mulf %368, %369 : vector<16x1xf32>
    %371 = vector.broadcast %358 : vector<1x32xf32> to vector<16x32xf32>
    %372 = arith.mulf %371, %365 : vector<16x32xf32>
    %373 = math.sqrt %370 : vector<16x1xf32>
    %cst_141 = arith.constant 9.99999997E-7 : f32
    %374 = vector.broadcast %cst_141 : f32 to vector<16x1xf32>
    %375 = arith.addf %373, %374 : vector<16x1xf32>
    %376 = vector.broadcast %375 : vector<16x1xf32> to vector<16x32xf32>
    %377 = arith.divf %372, %376 : vector<16x32xf32>
    %378 = vector.broadcast %359 : vector<1x32xf32> to vector<16x32xf32>
    %379 = arith.addf %377, %378 : vector<16x32xf32>
    %c0_142 = arith.constant 0 : index
    %c0_143 = arith.constant 0 : index
    %380 = vector.load %arg11[%c0_142, %c0_143] : memref<16x32xf32, #tpu.memory_space<vmem>>, vector<16x32xf32>
    tpu.vector_store %arg11[%c0_142, %c0_143], %379 {strides = array<i32>} : memref<16x32xf32, #tpu.memory_space<vmem>>, vector<16x32xf32>,
    return
  }
}

</mosaic_0001>

<llo_original>
// kernel: tpu_custom_call.1
$region0: #{tpu_custom_call.1}
  #allocation0 [shape = 'u32[]', space=smem, size = 0x4, offset = 0x4, fixed_abs, tag = 'smem constant byte address 0x4 - core index']
  #allocation1 [shape = 'u32[144,128]{1,0:T(1,128)}', space=vmem, size = 0x12000, scoped, tag = 'internal scratch']
  %s0 = inlined_call_operand.hbm [shape: f32[16,32], index: 0, kind: input, shape index: {}]
  %s1 = inlined_call_operand.hbm [shape: f32[16,32], index: 1, kind: input, shape index: {}]
  %s2 = inlined_call_operand.vmem [shape: f32[64,64], index: 2, kind: input, shape index: {}]
  %s3 = inlined_call_operand.hbm [shape: f32[64,64], index: 3, kind: input, shape index: {}]
  %s4 = inlined_call_operand.hbm [shape: f32[2,32,96], index: 4, kind: input, shape index: {}]
  %s5 = inlined_call_operand.hbm [shape: f32[2,32,32], index: 5, kind: input, shape index: {}]
  %s6 = inlined_call_operand.hbm [shape: f32[32,128], index: 6, kind: input, shape index: {}]
  %s7 = inlined_call_operand.vmem [shape: f32[2,2,32,32], index: 7, kind: input, shape index: {}]
  %s8 = inlined_call_operand.hbm [shape: f32[2,32,64], index: 8, kind: input, shape index: {}]
  %s9 = inlined_call_operand.vmem [shape: f32[2,64,32], index: 9, kind: input, shape index: {}]
  %s10 = inlined_call_operand.vmem [shape: f32[27,128], index: 10, kind: input, shape index: {}]
  %s11 = inlined_call_operand.hbm [shape: f32[16,32], index: 11, kind: output, shape index: {}]
  %s12 = sld [smem:[#allocation0]]
  $region82: #{tpu_custom_call.1} parent=0
    _
  %s14 = ssub.s32 1, %s12
  %s15 = scalar_select 0, %s14, %s12
  $region1: #{tpu_custom_call.1} parent=0
    #allocation2 [shape = 'u8[8192]{0}', space=vmem, size = 0x2000, scoped, tag = 'input window, operand 0, single buffered']
    #allocation3 [shape = 's32[1]{0}', space=sflag, size = 0x4, scoped, tag = 'scoped memory for tpu_custom_call.1']
    #allocation4 [shape = 's32[1]{0}', space=sflag, size = 0x4, scoped, tag = 'scoped memory for tpu_custom_call.1']
    #allocation5 [shape = 'u8[8192]{0}', space=vmem, size = 0x2000, scoped, tag = 'input window, operand 1, single buffered']
    #allocation6 [shape = 's32[1]{0}', space=sflag, size = 0x4, scoped, tag = 'scoped memory for tpu_custom_call.1']
    #allocation7 [shape = 'u8[32768]{0}', space=vmem, size = 0x8000, scoped, tag = 'input window, operand 3, single buffered']
    #allocation8 [shape = 'u8[32768]{0}', space=vmem, size = 0x8000, scoped, tag = 'input window, operand 4, single buffered']
    #allocation9 [shape = 's32[1]{0}', space=sflag, size = 0x4, scoped, tag = 'scoped memory for tpu_custom_call.1']
    #allocation10 [shape = 'u8[32768]{0}', space=vmem, size = 0x8000, scoped, tag = 'input window, operand 5, single buffered']
    #allocation11 [shape = 'u8[16384]{0}', space=vmem, size = 0x4000, scoped, tag = 'input window, operand 6, single buffered']
    #allocation12 [shape = 's32[1]{0}', space=sflag, size = 0x4, scoped, tag = 'scoped memory for tpu_custom_call.1']
    #allocation13 [shape = 'u8[32768]{0}', space=vmem, size = 0x8000, scoped, tag = 'input window, operand 8, single buffered']
    #allocation14 [shape = 'u8[8192]{0}', space=vmem, size = 0x2000, scoped, tag = 'output window, operand 0, single buffered']
    %16 = vsyncpa [#allocation3], 0
    %17 = vsyncpa [#allocation6], 0
    %18 = vsyncpa [#allocation9], 0
    %19 = vsyncpa [#allocation12], 0
    %20 = vsyncpa [#allocation4], 0
    // Predicated region
    $region2: #{tpu_custom_call.1} parent=1 // pred_check
      _
    $region3: #{tpu_custom_call.1} parent=1 // pred_check_branch
      %22 = sbr.rel (0) target = $region5
    $region4: #{tpu_custom_call.1} parent=1 // pred_region
      %s24 = ssub.s32 256, 256
      %25 = vsyncadd [#allocation3], %s24
      %s26 = sshll.u32 [#allocation2], 4
      %s27 = int_to_ptr.vmem [resolvable:$true] %s26
      %32 = dma.hbm_to_vmem [thread:$0]  %s0, 256, %s27, [#allocation3], 128, 128, 8
    $region5: #{tpu_custom_call.1} parent=1 // pred_fallthru
      _
    // Predicated region
    $region6: #{tpu_custom_call.1} parent=1 // pred_check
      _
    $region7: #{tpu_custom_call.1} parent=1 // pred_check_branch
      %34 = sbr.rel (0) target = $region9
    $region8: #{tpu_custom_call.1} parent=1 // pred_region
      %s36 = ssub.s32 256, 256
      %37 = vsyncadd [#allocation6], %s36
      %s38 = sshll.u32 [#allocation5], 4
      %s39 = int_to_ptr.vmem [resolvable:$true] %s38
      %44 = dma.hbm_to_vmem [thread:$0]  %s1, 256, %s39, [#allocation6], 128, 128, 8
    $region9: #{tpu_custom_call.1} parent=1 // pred_fallthru
      _
    // Predicated region
    $region10: #{tpu_custom_call.1} parent=1 // pred_check
      _
    $region11: #{tpu_custom_call.1} parent=1 // pred_check_branch
      %46 = sbr.rel (0) target = $region13
    $region12: #{tpu_custom_call.1} parent=1 // pred_region
      _
    $region13: #{tpu_custom_call.1} parent=1 // pred_fallthru
      _
    // Predicated region
    $region14: #{tpu_custom_call.1} parent=1 // pred_check
      _
    $region15: #{tpu_custom_call.1} parent=1 // pred_check_branch
      %48 = sbr.rel (0) target = $region17
    $region16: #{tpu_custom_call.1} parent=1 // pred_region
      %s50 = ssub.s32 1024, 1024
      %51 = vsyncadd [#allocation6], %s50
      %s52 = sshll.u32 [#allocation7], 4
      %s53 = int_to_ptr.vmem [resolvable:$true] %s52
      %58 = dma.hbm_to_vmem [thread:$0]  %s3, 1024, %s53, [#allocation6], 128, 128, 8
    $region17: #{tpu_custom_call.1} parent=1 // pred_fallthru
      _
    // Predicated region
    $region18: #{tpu_custom_call.1} parent=1 // pred_check
      _
    $region19: #{tpu_custom_call.1} parent=1 // pred_check_branch
      %60 = sbr.rel (0) target = $region21
    $region20: #{tpu_custom_call.1} parent=1 // pred_region
      %s62 = ssub.s32 1024, 1024
      %63 = vsyncadd [#allocation9], %s62
      %s64 = sshll.u32 [#allocation8], 4
      %s65 = int_to_ptr.vmem [resolvable:$true] %s64
      %70 = dma.hbm_to_vmem [thread:$0]  %s4, 1024, %s65, [#allocation9], 128, 128, 8
    $region21: #{tpu_custom_call.1} parent=1 // pred_fallthru
      _
    // Predicated region
    $region22: #{tpu_custom_call.1} parent=1 // pred_check
      _
    $region23: #{tpu_custom_call.1} parent=1 // pred_check_branch
      %72 = sbr.rel (0) target = $region25
    $region24: #{tpu_custom_call.1} parent=1 // pred_region
      %s74 = ssub.s32 1024, 1024
      %75 = vsyncadd [#allocation9], %s74
      %s76 = sshll.u32 [#allocation10], 4
      %s77 = int_to_ptr.vmem [resolvable:$true] %s76
      %82 = dma.hbm_to_vmem [thread:$0]  %s5, 1024, %s77, [#allocation9], 128, 128, 8
    $region25: #{tpu_custom_call.1} parent=1 // pred_fallthru
      _
    // Predicated region
    $region26: #{tpu_custom_call.1} parent=1 // pred_check
      _
    $region27: #{tpu_custom_call.1} parent=1 // pred_check_branch
      %84 = sbr.rel (0) target = $region29
    $region28: #{tpu_custom_call.1} parent=1 // pred_region
      %s86 = ssub.s32 512, 512
      %87 = vsyncadd [#allocation12], %s86
      %s88 = sshll.u32 [#allocation11], 4
      %s89 = int_to_ptr.vmem [resolvable:$true] %s88
      %94 = dma.hbm_to_vmem [thread:$0]  %s6, 512, %s89, [#allocation12], 128, 128, 8
    $region29: #{tpu_custom_call.1} parent=1 // pred_fallthru
      _
    // Predicated region
    $region30: #{tpu_custom_call.1} parent=1 // pred_check
      _
    $region31: #{tpu_custom_call.1} parent=1 // pred_check_branch
      %96 = sbr.rel (0) target = $region33
    $region32: #{tpu_custom_call.1} parent=1 // pred_region
      _
    $region33: #{tpu_custom_call.1} parent=1 // pred_fallthru
      _
    // Predicated region
    $region34: #{tpu_custom_call.1} parent=1 // pred_check
      _
    $region35: #{tpu_custom_call.1} parent=1 // pred_check_branch
      %98 = sbr.rel (0) target = $region37
    $region36: #{tpu_custom_call.1} parent=1 // pred_region
      %s100 = ssub.s32 1024, 1024
      %101 = vsyncadd [#allocation12], %s100
      %s102 = sshll.u32 [#allocation13], 4
      %s103 = int_to_ptr.vmem [resolvable:$true] %s102
      %108 = dma.hbm_to_vmem [thread:$0]  %s8, 1024, %s103, [#allocation12], 128, 128, 8
    $region37: #{tpu_custom_call.1} parent=1 // pred_fallthru
      _
    // Predicated region
    $region38: #{tpu_custom_call.1} parent=1 // pred_check
      _
    $region39: #{tpu_custom_call.1} parent=1 // pred_check_branch
      %110 = sbr.rel (0) target = $region41
    $region40: #{tpu_custom_call.1} parent=1 // pred_region
      _
    $region41: #{tpu_custom_call.1} parent=1 // pred_fallthru
      _
    // Predicated region
    $region42: #{tpu_custom_call.1} parent=1 // pred_check
      _
    $region43: #{tpu_custom_call.1} parent=1 // pred_check_branch
      %112 = sbr.rel (0) target = $region45
    $region44: #{tpu_custom_call.1} parent=1 // pred_region
      _
    $region45: #{tpu_custom_call.1} parent=1 // pred_fallthru
      _
    // Predicated region
    $region46: #{tpu_custom_call.1} parent=1 // pred_check
      _
    $region47: #{tpu_custom_call.1} parent=1 // pred_check_branch
      %114 = sbr.rel (0) target = $region49
    $region48: #{tpu_custom_call.1} parent=1 // pred_region
      %115 = dma.done [#allocation3], 256
    $region49: #{tpu_custom_call.1} parent=1 // pred_fallthru
      _
    // Predicated region
    $region50: #{tpu_custom_call.1} parent=1 // pred_check
      _
    $region51: #{tpu_custom_call.1} parent=1 // pred_check_branch
      %117 = sbr.rel (0) target = $region53
    $region52: #{tpu_custom_call.1} parent=1 // pred_region
      %118 = dma.done [#allocation6], 256
    $region53: #{tpu_custom_call.1} parent=1 // pred_fallthru
      _
    // Predicated region
    $region54: #{tpu_custom_call.1} parent=1 // pred_check
      _
    $region55: #{tpu_custom_call.1} parent=1 // pred_check_branch
      %120 = sbr.rel (0) target = $region57
    $region56: #{tpu_custom_call.1} parent=1 // pred_region
      %121 = dma.done [#allocation6], 1024
    $region57: #{tpu_custom_call.1} parent=1 // pred_fallthru
      _
    // Predicated region
    $region58: #{tpu_custom_call.1} parent=1 // pred_check
      _
    $region59: #{tpu_custom_call.1} parent=1 // pred_check_branch
      %123 = sbr.rel (0) target = $region61
    $region60: #{tpu_custom_call.1} parent=1 // pred_region
      %124 = dma.done [#allocation9], 1024
    $region61: #{tpu_custom_call.1} parent=1 // pred_fallthru
      _
    // Predicated region
    $region62: #{tpu_custom_call.1} parent=1 // pred_check
      _
    $region63: #{tpu_custom_call.1} parent=1 // pred_check_branch
      %126 = sbr.rel (0) target = $region65
    $region64: #{tpu_custom_call.1} parent=1 // pred_region
      %127 = dma.done [#allocation9], 1024
    $region65: #{tpu_custom_call.1} parent=1 // pred_fallthru
      _
    // Predicated region
    $region66: #{tpu_custom_call.1} parent=1 // pred_check
      _
    $region67: #{tpu_custom_call.1} parent=1 // pred_check_branch
      %129 = sbr.rel (0) target = $region69
    $region68: #{tpu_custom_call.1} parent=1 // pred_region
      %130 = dma.done [#allocation12], 512
    $region69: #{tpu_custom_call.1} parent=1 // pred_fallthru
      _
    // Predicated region
    $region70: #{tpu_custom_call.1} parent=1 // pred_check
      _
    $region71: #{tpu_custom_call.1} parent=1 // pred_check_branch
      %132 = sbr.rel (0) target = $region73
    $region72: #{tpu_custom_call.1} parent=1 // pred_region
      %133 = dma.done [#allocation12], 1024
    $region73: #{tpu_custom_call.1} parent=1 // pred_fallthru
      _
    %v134 = vld [vmem:[#allocation2] sm:$0xff]
    %v135 = vld [vmem:[#allocation2 + $0x8] sm:$0xff]
    %v136 = vld [vmem:[#allocation5] sm:$0xff]
    %v137 = vld [vmem:[#allocation5 + $0x8] sm:$0xff]
    %v138 = vld [vmem:[%s2] sm:$0xff]
    %v139 = vld [vmem:[%s2 + $0x8] sm:$0xff]
    %v140 = vld [vmem:[%s2 + $0x10] sm:$0xff]
    %v141 = vld [vmem:[%s2 + $0x18] sm:$0xff]
    %v142 = vld [vmem:[%s2 + $0x20] sm:$0xff]
    %v143 = vld [vmem:[%s2 + $0x28] sm:$0xff]
    %v144 = vld [vmem:[%s2 + $0x30] sm:$0xff]
    %v145 = vld [vmem:[%s2 + $0x38] sm:$0xff]
    %v146 = vld [vmem:[#allocation7] sm:$0xff]
    %v147 = vld [vmem:[#allocation7 + $0x8] sm:$0xff]
    %v148 = vld [vmem:[#allocation7 + $0x10] sm:$0xff]
    %v149 = vld [vmem:[#allocation7 + $0x18] sm:$0xff]
    %v150 = vld [vmem:[#allocation7 + $0x20] sm:$0xff]
    %v151 = vld [vmem:[#allocation7 + $0x28] sm:$0xff]
    %v152 = vld [vmem:[#allocation7 + $0x30] sm:$0xff]
    %v153 = vld [vmem:[#allocation7 + $0x38] sm:$0xff]
    %v154 = vld [vmem:[#allocation11] sm:$0xff]
    %v155 = vld [vmem:[#allocation11 + $0x8] sm:$0xff]
    %v156 = vld [vmem:[#allocation11 + $0x10] sm:$0xff]
    %v157 = vld [vmem:[#allocation11 + $0x18] sm:$0xff]
    %v158 = vld [vmem:[%s10 + $0x18] sm:$0x1]
    %v159 = vlaneseq
    %v160 = vshrl.u32 %v159, 7
    %v161 = vsub.s32 0, %v160
    %v162 = vrot.slane %v158, %v161
    %vm163 = vcmask 261120
    %v165 = vsel %vm163, %v136, 0
    %v168 = vsel %vm163, %v137, 0
    %170 = vmatprep.subr.mxu0 0.0
    %171 = vmatpush1.msra.mxu0 %v154
    %172 = vmatprep.subr.mxu0 0.0
    %173 = vmatpush1.msra.mxu0 %v155
    %174 = vmatprep.subr.mxu0 0.0
    %175 = vmatpush1.msra.mxu0 %v156
    %176 = vmatprep.subr.mxu0 0.0
    %177 = vmatpush1.msra.mxu0 %v157
    %178 = vmatprep.subr.mxu0 0.0
    %179 = vmatpush1.msra.mxu0 0.0
    %180 = vmatprep.subr.mxu0 0.0
    %181 = vmatpush1.msra.mxu0 0.0
    %182 = vmatprep.subr.mxu0 0.0
    %183 = vmatpush1.msra.mxu0 0.0
    %184 = vmatprep.subr.mxu0 0.0
    %185 = vmatpush1.msra.mxu0 0.0
    %186 = vmatprep.subr.mxu0 0.0
    %187 = vmatpush1.msra.mxu0 0.0
    %188 = vmatprep.subr.mxu0 0.0
    %189 = vmatpush1.msra.mxu0 0.0
    %190 = vmatprep.subr.mxu0 0.0
    %191 = vmatpush1.msra.mxu0 0.0
    %192 = vmatprep.subr.mxu0 0.0
    %193 = vmatpush1.msra.mxu0 0.0
    %194 = vmatprep.subr.mxu0 0.0
    %195 = vmatpush1.msra.mxu0 0.0
    %196 = vmatprep.subr.mxu0 0.0
    %197 = vmatpush1.msra.mxu0 0.0
    %198 = vmatprep.subr.mxu0 0.0
    %199 = vmatpush1.msra.mxu0 0.0
    %200 = vmatprep.subr.mxu0 0.0
    %201 = vmatpush1.msra.mxu0 0.0
    %202 = vmatprep.subr.mxu0 0.0
    %203 = vmatpush1.msra.mxu0 0.0
    %204 = vmatprep.subr.mxu0 0.0
    %205 = vmatpush1.msra.mxu0 0.0
    %206 = vmatprep.subr.mxu0 0.0
    %207 = vmatpush1.msra.mxu0 0.0
    %208 = vmatprep.subr.mxu0 0.0
    %209 = vmatpush1.msra.mxu0 0.0
    %210 = vmatprep.subr.mxu0 0.0
    %211 = vmatpush1.msra.mxu0 0.0
    %212 = vmatprep.subr.mxu0 0.0
    %213 = vmatpush1.msra.mxu0 0.0
    %214 = vmatprep.subr.mxu0 0.0
    %215 = vmatpush1.msra.mxu0 0.0
    %216 = vmatprep.subr.mxu0 0.0
    %217 = vmatpush1.msra.mxu0 0.0
    %218 = vmatprep.subr.mxu0 0.0
    %219 = vmatpush1.msra.mxu0 0.0
    %220 = vmatprep.subr.mxu0 0.0
    %221 = vmatpush1.msra.mxu0 0.0
    %222 = vmatprep.subr.mxu0 0.0
    %223 = vmatpush1.msra.mxu0 0.0
    %224 = vmatprep.subr.mxu0 0.0
    %225 = vmatpush1.msra.mxu0 0.0
    %226 = vmatprep.subr.mxu0 0.0
    %227 = vmatpush1.msra.mxu0 0.0
    %228 = vmatprep.subr.mxu0 0.0
    %229 = vmatpush1.msra.mxu0 0.0
    %230 = vmatprep.subr.mxu0 0.0
    %231 = vmatpush1.msra.mxu0 0.0
    %232 = vmatprep.subr.mxu0 0.0
    %233 = vmatpush1.msra.mxu0 0.0
    %234 = vmatprep.mubr.f32.mxu0 0.0
    %235 = vmatmul.mubr.f32.gmra.mrb[0].mxu0 %v165
    %v236 = vpop.f32.mrb[0].mxu0
    %v237 = vadd.f32 %v162, %v236
    %v238 = vpop.f32.mrb[0].mxu0
    %239 = vmatprep.mubr.f32.mxu0 0.0
    %240 = vmatmul.mubr.f32.gmra.mrb[0].mxu0 %v168
    %v241 = vpop.f32.mrb[0].mxu0
    %v242 = vadd.f32 %v162, %v241
    %v243 = vpop.f32.mrb[0].mxu0
    %244 = vdwg.mxu0
    %247 = vrot.lane.b32.xlu0 %v237, 120
    %v248 = vpop.permute.xlu0 %247
    %249 = vrot.lane.b32.xlu0 %v242, 120
    %v250 = vpop.permute.xlu0 %249
    %251 = vrot.lane.b32.xlu0 %v237, 112
    %v252 = vpop.permute.xlu0 %251
    %253 = vrot.lane.b32.xlu0 %v242, 112
    %v254 = vpop.permute.xlu0 %253
    %255 = vrot.lane.b32.xlu0 %v237, 104
    %v256 = vpop.permute.xlu0 %255
    %257 = vrot.lane.b32.xlu0 %v242, 104
    %v258 = vpop.permute.xlu0 %257
    %259 = vrot.lane.b32.xlu0 %v237, 96
    %v260 = vpop.permute.xlu0 %259
    %261 = vrot.lane.b32.xlu0 %v242, 96
    %v262 = vpop.permute.xlu0 %261
    %265 = vrot.lane.b32.xlu0 %v237, 88
    %v266 = vpop.permute.xlu0 %265
    %267 = vrot.lane.b32.xlu0 %v242, 88
    %v268 = vpop.permute.xlu0 %267
    %271 = vrot.lane.b32.xlu0 %v237, 80
    %v272 = vpop.permute.xlu0 %271
    %273 = vrot.lane.b32.xlu0 %v242, 80
    %v274 = vpop.permute.xlu0 %273
    %277 = vrot.lane.b32.xlu0 %v237, 72
    %v278 = vpop.permute.xlu0 %277
    %279 = vrot.lane.b32.xlu0 %v242, 72
    %v280 = vpop.permute.xlu0 %279
    %283 = vrot.lane.b32.xlu0 %v237, 64
    %v284 = vpop.permute.xlu0 %283
    %285 = vrot.lane.b32.xlu0 %v242, 64
    %v286 = vpop.permute.xlu0 %285
    %287 = vrot.lane.b32.xlu0 %v237, 56
    %v288 = vpop.permute.xlu0 %287
    %289 = vrot.lane.b32.xlu0 %v242, 56
    %v290 = vpop.permute.xlu0 %289
    %291 = vrot.lane.b32.xlu0 %v237, 48
    %v292 = vpop.permute.xlu0 %291
    %293 = vrot.lane.b32.xlu0 %v242, 48
    %v294 = vpop.permute.xlu0 %293
    %295 = vrot.lane.b32.xlu0 %v237, 40
    %v296 = vpop.permute.xlu0 %295
    %297 = vrot.lane.b32.xlu0 %v242, 40
    %v298 = vpop.permute.xlu0 %297
    %299 = vrot.lane.b32.xlu0 %v237, 32
    %v300 = vpop.permute.xlu0 %299
    %301 = vrot.lane.b32.xlu0 %v242, 32
    %v302 = vpop.permute.xlu0 %301
    %305 = vrot.lane.b32.xlu0 %v237, 24
    %v306 = vpop.permute.xlu0 %305
    %307 = vrot.lane.b32.xlu0 %v242, 24
    %v308 = vpop.permute.xlu0 %307
    %311 = vrot.lane.b32.xlu0 %v237, 16
    %v312 = vpop.permute.xlu0 %311
    %313 = vrot.lane.b32.xlu0 %v242, 16
    %v314 = vpop.permute.xlu0 %313
    %317 = vrot.lane.b32.xlu0 %v237, 8
    %v318 = vpop.permute.xlu0 %317
    %319 = vrot.lane.b32.xlu0 %v242, 8
    %v320 = vpop.permute.xlu0 %319
    %v323 = vld [vmem:[%s10 + $0x6] sm:$0x1]
    %v324 = vld [vmem:[%s10 + $0x7] sm:$0x1]
    %v325 = vsel %vm163, %v134, 0.0
    %326 = vadd.xlane.f32.xlu0 %v325
    %v327 = vpop.xlane.xlu0 %326
    %v328 = vsel %vm163, %v135, 0.0
    %329 = vadd.xlane.f32.xlu0 %v328
    %v330 = vpop.xlane.xlu0 %329
    %v331 = vrcp.pop 32.0
    %v332 = vmul.f32 %v327, %v331
    %v333 = vmul.f32 %v330, %v331
    %v334 = vsub.f32 %v134, %v332
    %v335 = vsub.f32 %v135, %v333
    %v336 = vmul.f32 %v334, %v334
    %v337 = vmul.f32 %v335, %v335
    %v338 = vsel %vm163, %v336, 0.0
    %339 = vadd.xlane.f32.xlu0 %v338
    %v340 = vpop.xlane.xlu0 %339
    %v341 = vsel %vm163, %v337, 0.0
    %342 = vadd.xlane.f32.xlu0 %v341
    %v343 = vpop.xlane.xlu0 %342
    %v344 = vmul.f32 %v340, 0.032258064
    %v345 = vmul.f32 %v343, 0.032258064
    %v346 = vlaneseq
    %v347 = vshrl.u32 %v346, 7
    %v348 = vsub.s32 0, %v347
    %v349 = vrot.slane %v323, %v348
    %v350 = vmul.f32 %v349, %v334
    %v351 = vmul.f32 %v349, %v335
    %v352 = vrsqrt.pop %v344
    %v353 = vmul.f32 %v344, %v352
    %vm354 = vcmp.eq.f32.partialorder %v344, inf
    %v355 = vsel %vm354, %v344, %v353
    %vm356 = vcmp.eq.f32.partialorder %v344, 0.0
    %v357 = vand.u32 %v344, 2147483648
    %v358 = vsel %vm356, %v357, %v355
    %v359 = vrsqrt.pop %v345
    %v360 = vmul.f32 %v345, %v359
    %vm361 = vcmp.eq.f32.partialorder %v345, inf
    %v362 = vsel %vm361, %v345, %v360
    %vm363 = vcmp.eq.f32.partialorder %v345, 0.0
    %v364 = vand.u32 %v345, 2147483648
    %v365 = vsel %vm363, %v364, %v362
    %v366 = vadd.f32 %v358, 1e-06
    %v367 = vadd.f32 %v365, 1e-06
    %v368 = vrcp.pop %v366
    %v369 = vmul.f32 %v350, %v368
    %v370 = vrcp.pop %v367
    %v371 = vmul.f32 %v351, %v370
    %v372 = vlaneseq
    %v373 = vshrl.u32 %v372, 7
    %v374 = vsub.s32 0, %v373
    %v375 = vrot.slane %v324, %v374
    %v376 = vadd.f32 %v369, %v375
    %v377 = vadd.f32 %v371, %v375
    %v378 = vld [vmem:[#allocation8] sm:$0xff]
    %v379 = vld [vmem:[#allocation8 + $0x8] sm:$0xff]
    %v380 = vld [vmem:[#allocation8 + $0x10] sm:$0xff]
    %v381 = vld [vmem:[#allocation8 + $0x18] sm:$0xff]
    %v382 = vld [vmem:[%s10] sm:$0x1]
    %v383 = vlaneseq
    %v384 = vshrl.u32 %v383, 7
    %v385 = vsub.s32 0, %v384
    %v386 = vrot.slane %v382, %v385
    %v388 = vsel %vm163, %v376, 0
    %v391 = vsel %vm163, %v377, 0
    %393 = vmatprep.subr.mxu0 0.0
    %394 = vmatpush1.msra.mxu0 %v378
    %395 = vmatprep.subr.mxu0 0.0
    %396 = vmatpush1.msra.mxu0 %v379
    %397 = vmatprep.subr.mxu0 0.0
    %398 = vmatpush1.msra.mxu0 %v380
    %399 = vmatprep.subr.mxu0 0.0
    %400 = vmatpush1.msra.mxu0 %v381
    %401 = vmatprep.subr.mxu0 0.0
    %402 = vmatpush1.msra.mxu0 0.0
    %403 = vmatprep.subr.mxu0 0.0
    %404 = vmatpush1.msra.mxu0 0.0
    %405 = vmatprep.subr.mxu0 0.0
    %406 = vmatpush1.msra.mxu0 0.0
    %407 = vmatprep.subr.mxu0 0.0
    %408 = vmatpush1.msra.mxu0 0.0
    %409 = vmatprep.subr.mxu0 0.0
    %410 = vmatpush1.msra.mxu0 0.0
    %411 = vmatprep.subr.mxu0 0.0
    %412 = vmatpush1.msra.mxu0 0.0
    %413 = vmatprep.subr.mxu0 0.0
    %414 = vmatpush1.msra.mxu0 0.0
    %415 = vmatprep.subr.mxu0 0.0
    %416 = vmatpush1.msra.mxu0 0.0
    %417 = vmatprep.subr.mxu0 0.0
    %418 = vmatpush1.msra.mxu0 0.0
    %419 = vmatprep.subr.mxu0 0.0
    %420 = vmatpush1.msra.mxu0 0.0
    %421 = vmatprep.subr.mxu0 0.0
    %422 = vmatpush1.msra.mxu0 0.0
    %423 = vmatprep.subr.mxu0 0.0
    %424 = vmatpush1.msra.mxu0 0.0
    %425 = vmatprep.subr.mxu0 0.0
    %426 = vmatpush1.msra.mxu0 0.0
    %427 = vmatprep.subr.mxu0 0.0
    %428 = vmatpush1.msra.mxu0 0.0
    %429 = vmatprep.subr.mxu0 0.0
    %430 = vmatpush1.msra.mxu0 0.0
    %431 = vmatprep.subr.mxu0 0.0
    %432 = vmatpush1.msra.mxu0 0.0
    %433 = vmatprep.subr.mxu0 0.0
    %434 = vmatpush1.msra.mxu0 0.0
    %435 = vmatprep.subr.mxu0 0.0
    %436 = vmatpush1.msra.mxu0 0.0
    %437 = vmatprep.subr.mxu0 0.0
    %438 = vmatpush1.msra.mxu0 0.0
    %439 = vmatprep.subr.mxu0 0.0
    %440 = vmatpush1.msra.mxu0 0.0
    %441 = vmatprep.subr.mxu0 0.0
    %442 = vmatpush1.msra.mxu0 0.0
    %443 = vmatprep.subr.mxu0 0.0
    %444 = vmatpush1.msra.mxu0 0.0
    %445 = vmatprep.subr.mxu0 0.0
    %446 = vmatpush1.msra.mxu0 0.0
    %447 = vmatprep.subr.mxu0 0.0
    %448 = vmatpush1.msra.mxu0 0.0
    %449 = vmatprep.subr.mxu0 0.0
    %450 = vmatpush1.msra.mxu0 0.0
    %451 = vmatprep.subr.mxu0 0.0
    %452 = vmatpush1.msra.mxu0 0.0
    %453 = vmatprep.subr.mxu0 0.0
    %454 = vmatpush1.msra.mxu0 0.0
    %455 = vmatprep.subr.mxu0 0.0
    %456 = vmatpush1.msra.mxu0 0.0
    %457 = vmatprep.mubr.f32.mxu0 0.0
    %458 = vmatmul.mubr.f32.gmra.mrb[0].mxu0 %v388
    %v459 = vpop.f32.mrb[0].mxu0
    %v460 = vadd.f32 %v386, %v459
    %v461 = vpop.f32.mrb[0].mxu0
    %462 = vmatprep.mubr.f32.mxu0 0.0
    %463 = vmatmul.mubr.f32.gmra.mrb[0].mxu0 %v391
    %v464 = vpop.f32.mrb[0].mxu0
    %v465 = vadd.f32 %v386, %v464
    %v466 = vpop.f32.mrb[0].mxu0
    %467 = vdwg.mxu0
    %470 = vrot.lane.b32.xlu0 %v460, 120
    %v471 = vpop.permute.xlu0 %470
    %472 = vrot.lane.b32.xlu0 %v465, 120
    %v473 = vpop.permute.xlu0 %472
    %474 = vrot.lane.b32.xlu0 %v460, 112
    %v475 = vpop.permute.xlu0 %474
    %476 = vrot.lane.b32.xlu0 %v465, 112
    %v477 = vpop.permute.xlu0 %476
    %478 = vrot.lane.b32.xlu0 %v460, 104
    %v479 = vpop.permute.xlu0 %478
    %480 = vrot.lane.b32.xlu0 %v465, 104
    %v481 = vpop.permute.xlu0 %480
    %482 = vrot.lane.b32.xlu0 %v460, 96
    %v483 = vpop.permute.xlu0 %482
    %484 = vrot.lane.b32.xlu0 %v465, 96
    %v485 = vpop.permute.xlu0 %484
    %486 = vrot.lane.b32.xlu0 %v460, 88
    %v487 = vpop.permute.xlu0 %486
    %488 = vrot.lane.b32.xlu0 %v465, 88
    %v489 = vpop.permute.xlu0 %488
    %490 = vrot.lane.b32.xlu0 %v460, 80
    %v491 = vpop.permute.xlu0 %490
    %492 = vrot.lane.b32.xlu0 %v465, 80
    %v493 = vpop.permute.xlu0 %492
    %494 = vrot.lane.b32.xlu0 %v460, 72
    %v495 = vpop.permute.xlu0 %494
    %496 = vrot.lane.b32.xlu0 %v465, 72
    %v497 = vpop.permute.xlu0 %496
    %498 = vrot.lane.b32.xlu0 %v460, 64
    %v499 = vpop.permute.xlu0 %498
    %500 = vrot.lane.b32.xlu0 %v465, 64
    %v501 = vpop.permute.xlu0 %500
    %504 = vrot.lane.b32.xlu0 %v460, 56
    %v505 = vpop.permute.xlu0 %504
    %506 = vrot.lane.b32.xlu0 %v465, 56
    %v507 = vpop.permute.xlu0 %506
    %510 = vrot.lane.b32.xlu0 %v460, 48
    %v511 = vpop.permute.xlu0 %510
    %512 = vrot.lane.b32.xlu0 %v465, 48
    %v513 = vpop.permute.xlu0 %512
    %516 = vrot.lane.b32.xlu0 %v460, 40
    %v517 = vpop.permute.xlu0 %516
    %518 = vrot.lane.b32.xlu0 %v465, 40
    %v519 = vpop.permute.xlu0 %518
    %vm522 = vcmask 64512
    %v523 = vsel %vm522, %v460, 0
    %v525 = vsel %vm522, %v465, 0
    %v527 = vsel %vm522, %v471, 0
    %v529 = vsel %vm522, %v473, 0
    %v531 = vsel %vm522, %v475, 0
    %v533 = vsel %vm522, %v477, 0
    %v535 = vsel %vm522, %v479, 0
    %v537 = vsel %vm522, %v481, 0
    %v539 = vsel %vm522, %v483, 0
    %v541 = vsel %vm522, %v485, 0
    %v543 = vsel %vm522, %v487, 0
    %v545 = vsel %vm522, %v489, 0
    %v547 = vsel %vm522, %v491, 0
    %v549 = vsel %vm522, %v493, 0
    %v551 = vsel %vm522, %v495, 0
    %v553 = vsel %vm522, %v497, 0
    %555 = vmatprep.subr.mxu0 0.0
    %556 = vmatpush1.xpose.msra.mxu0 %v539
    %557 = vmatprep.subr.mxu0 0.0
    %558 = vmatpush1.xpose.msra.mxu0 %v541
    %559 = vmatprep.subr.mxu0 0.0
    %560 = vmatpush1.xpose.msra.mxu0 %v543
    %561 = vmatprep.subr.mxu0 0.0
    %562 = vmatpush1.xpose.msra.mxu0 %v545
    %563 = vmatprep.subr.mxu0 0.0
    %564 = vmatpush1.xpose.msra.mxu0 %v547
    %565 = vmatprep.subr.mxu0 0.0
    %566 = vmatpush1.xpose.msra.mxu0 %v549
    %567 = vmatprep.subr.mxu0 0.0
    %568 = vmatpush1.xpose.msra.mxu0 %v551
    %569 = vmatprep.subr.mxu0 0.0
    %570 = vmatpush1.xpose.msra.mxu0 %v553
    %571 = vmatprep.subr.mxu0 0.0
    %572 = vmatpush1.xpose.msra.mxu0 0.0
    %573 = vmatprep.subr.mxu0 0.0
    %574 = vmatpush1.xpose.msra.mxu0 0.0
    %575 = vmatprep.subr.mxu0 0.0
    %576 = vmatpush1.xpose.msra.mxu0 0.0
    %577 = vmatprep.subr.mxu0 0.0
    %578 = vmatpush1.xpose.msra.mxu0 0.0
    %579 = vmatprep.subr.mxu0 0.0
    %580 = vmatpush1.xpose.msra.mxu0 0.0
    %581 = vmatprep.subr.mxu0 0.0
    %582 = vmatpush1.xpose.msra.mxu0 0.0
    %583 = vmatprep.subr.mxu0 0.0
    %584 = vmatpush1.xpose.msra.mxu0 0.0
    %585 = vmatprep.subr.mxu0 0.0
    %586 = vmatpush1.xpose.msra.mxu0 0.0
    %587 = vmatprep.subr.mxu0 0.0
    %588 = vmatpush1.xpose.msra.mxu0 0.0
    %589 = vmatprep.subr.mxu0 0.0
    %590 = vmatpush1.xpose.msra.mxu0 0.0
    %591 = vmatprep.subr.mxu0 0.0
    %592 = vmatpush1.xpose.msra.mxu0 0.0
    %593 = vmatprep.subr.mxu0 0.0
    %594 = vmatpush1.xpose.msra.mxu0 0.0
    %595 = vmatprep.subr.mxu0 0.0
    %596 = vmatpush1.xpose.msra.mxu0 0.0
    %597 = vmatprep.subr.mxu0 0.0
    %598 = vmatpush1.xpose.msra.mxu0 0.0
    %599 = vmatprep.subr.mxu0 0.0
    %600 = vmatpush1.xpose.msra.mxu0 0.0
    %601 = vmatprep.subr.mxu0 0.0
    %602 = vmatpush1.xpose.msra.mxu0 0.0
    %603 = vmatprep.subr.mxu0 0.0
    %604 = vmatpush1.xpose.msra.mxu0 0.0
    %605 = vmatprep.subr.mxu0 0.0
    %606 = vmatpush1.xpose.msra.mxu0 0.0
    %607 = vmatprep.subr.mxu0 0.0
    %608 = vmatpush1.xpose.msra.mxu0 0.0
    %609 = vmatprep.subr.mxu0 0.0
    %610 = vmatpush1.xpose.msra.mxu0 0.0
    %611 = vmatprep.subr.mxu0 0.0
    %612 = vmatpush1.xpose.msra.mxu0 0.0
    %613 = vmatprep.subr.mxu0 0.0
    %614 = vmatpush1.xpose.msra.mxu0 0.0
    %615 = vmatprep.subr.mxu0 0.0
    %616 = vmatpush1.xpose.msra.mxu0 0.0
    %617 = vmatprep.subr.mxu0 0.0
    %618 = vmatpush1.xpose.msra.mxu0 0.0
    %619 = vmatprep.mubr.f32.mxu0 0.0
    %620 = vmatmul.mubr.f32.gmra.mrb[0].mxu0 %v523
    %v621 = vpop.f32.mrb[0].mxu0
    %v622 = vadd.f32 %v138, %v621
    %v623 = vpop.f32.mrb[0].mxu0
    %624 = vmatprep.mubr.f32.mxu0 0.0
    %625 = vmatmul.mubr.f32.gmra.mrb[0].mxu0 %v525
    %v626 = vpop.f32.mrb[0].mxu0
    %v627 = vadd.f32 %v139, %v626
    %v628 = vpop.f32.mrb[0].mxu0
    %629 = vmatprep.mubr.f32.mxu0 0.0
    %630 = vmatmul.mubr.f32.gmra.mrb[0].mxu0 %v527
    %v631 = vpop.f32.mrb[0].mxu0
    %v632 = vadd.f32 %v140, %v631
    %v633 = vpop.f32.mrb[0].mxu0
    %634 = vmatprep.mubr.f32.mxu0 0.0
    %635 = vmatmul.mubr.f32.gmra.mrb[0].mxu0 %v529
    %v636 = vpop.f32.mrb[0].mxu0
    %v637 = vadd.f32 %v141, %v636
    %v638 = vpop.f32.mrb[0].mxu0
    %639 = vmatprep.mubr.f32.mxu0 0.0
    %640 = vmatmul.mubr.f32.gmra.mrb[0].mxu0 %v531
    %v641 = vpop.f32.mrb[0].mxu0
    %v642 = vadd.f32 %v142, %v641
    %v643 = vpop.f32.mrb[0].mxu0
    %644 = vmatprep.mubr.f32.mxu0 0.0
    %645 = vmatmul.mubr.f32.gmra.mrb[0].mxu0 %v533
    %v646 = vpop.f32.mrb[0].mxu0
    %v647 = vadd.f32 %v143, %v646
    %v648 = vpop.f32.mrb[0].mxu0
    %649 = vmatprep.mubr.f32.mxu0 0.0
    %650 = vmatmul.mubr.f32.gmra.mrb[0].mxu0 %v535
    %v651 = vpop.f32.mrb[0].mxu0
    %v652 = vadd.f32 %v144, %v651
    %v653 = vpop.f32.mrb[0].mxu0
    %654 = vmatprep.mubr.f32.mxu0 0.0
    %655 = vmatmul.mubr.f32.gmra.mrb[0].mxu0 %v537
    %v656 = vpop.f32.mrb[0].mxu0
    %v657 = vadd.f32 %v145, %v656
    %v658 = vpop.f32.mrb[0].mxu0
    %659 = vdwg.mxu0
    %vm660 = vcmask 523264
    %v661 = vsel %vm660, %v622, -inf
    %662 = vmax.xlane.f32.xlu0 %v661
    %v663 = vpop.xlane.xlu0 %662
    %v664 = vsel %vm660, %v627, -inf
    %665 = vmax.xlane.f32.xlu0 %v664
    %v666 = vpop.xlane.xlu0 %665
    %v667 = vsel %vm660, %v632, -inf
    %668 = vmax.xlane.f32.xlu0 %v667
    %v669 = vpop.xlane.xlu0 %668
    %v670 = vsel %vm660, %v637, -inf
    %671 = vmax.xlane.f32.xlu0 %v670
    %v672 = vpop.xlane.xlu0 %671
    %v673 = vsel %vm660, %v642, -inf
    %674 = vmax.xlane.f32.xlu0 %v673
    %v675 = vpop.xlane.xlu0 %674
    %v676 = vsel %vm660, %v647, -inf
    %677 = vmax.xlane.f32.xlu0 %v676
    %v678 = vpop.xlane.xlu0 %677
    %v679 = vsel %vm660, %v652, -inf
    %680 = vmax.xlane.f32.xlu0 %v679
    %v681 = vpop.xlane.xlu0 %680
    %v682 = vsel %vm660, %v657, -inf
    %683 = vmax.xlane.f32.xlu0 %v682
    %v684 = vpop.xlane.xlu0 %683
    %v685 = vsub.f32 %v622, %v663
    %v686 = vsub.f32 %v627, %v666
    %v687 = vsub.f32 %v632, %v669
    %v688 = vsub.f32 %v637, %v672
    %v689 = vsub.f32 %v642, %v675
    %v690 = vsub.f32 %v647, %v678
    %v691 = vsub.f32 %v652, %v681
    %v692 = vsub.f32 %v657, %v684
    %v693 = vmul.f32 %v685, 1.442695
    %v694 = vpow.pop %v693
    %v695 = vmul.f32 %v686, 1.442695
    %v696 = vpow.pop %v695
    %v697 = vmul.f32 %v687, 1.442695
    %v698 = vpow.pop %v697
    %v699 = vmul.f32 %v688, 1.442695
    %v700 = vpow.pop %v699
    %v701 = vmul.f32 %v689, 1.442695
    %v702 = vpow.pop %v701
    %v703 = vmul.f32 %v690, 1.442695
    %v704 = vpow.pop %v703
    %v705 = vmul.f32 %v691, 1.442695
    %v706 = vpow.pop %v705
    %v707 = vmul.f32 %v692, 1.442695
    %v708 = vpow.pop %v707
    %v709 = vsel %vm660, %v694, 0.0
    %710 = vadd.xlane.f32.xlu0 %v709
    %v711 = vpop.xlane.xlu0 %710
    %v712 = vsel %vm660, %v696, 0.0
    %713 = vadd.xlane.f32.xlu0 %v712
    %v714 = vpop.xlane.xlu0 %713
    %v715 = vsel %vm660, %v698, 0.0
    %716 = vadd.xlane.f32.xlu0 %v715
    %v717 = vpop.xlane.xlu0 %716
    %v718 = vsel %vm660, %v700, 0.0
    %719 = vadd.xlane.f32.xlu0 %v718
    %v720 = vpop.xlane.xlu0 %719
    %v721 = vsel %vm660, %v702, 0.0
    %722 = vadd.xlane.f32.xlu0 %v721
    %v723 = vpop.xlane.xlu0 %722
    %v724 = vsel %vm660, %v704, 0.0
    %725 = vadd.xlane.f32.xlu0 %v724
    %v726 = vpop.xlane.xlu0 %725
    %v727 = vsel %vm660, %v706, 0.0
    %728 = vadd.xlane.f32.xlu0 %v727
    %v729 = vpop.xlane.xlu0 %728
    %v730 = vsel %vm660, %v708, 0.0
    %731 = vadd.xlane.f32.xlu0 %v730
    %v732 = vpop.xlane.xlu0 %731
    %v733 = vrcp.pop %v711
    %v734 = vmul.f32 %v694, %v733
    %v735 = vrcp.pop %v714
    %v736 = vmul.f32 %v696, %v735
    %v737 = vrcp.pop %v717
    %v738 = vmul.f32 %v698, %v737
    %v739 = vrcp.pop %v720
    %v740 = vmul.f32 %v700, %v739
    %v741 = vrcp.pop %v723
    %v742 = vmul.f32 %v702, %v741
    %v743 = vrcp.pop %v726
    %v744 = vmul.f32 %v704, %v743
    %v745 = vrcp.pop %v729
    %v746 = vmul.f32 %v706, %v745
    %v747 = vrcp.pop %v732
    %v748 = vmul.f32 %v708, %v747
    %v750 = vsel %vm660, %v734, 0
    %v753 = vsel %vm660, %v736, 0
    %v756 = vsel %vm660, %v738, 0
    %v759 = vsel %vm660, %v740, 0
    %v762 = vsel %vm660, %v742, 0
    %v765 = vsel %vm660, %v744, 0
    %v768 = vsel %vm660, %v746, 0
    %v771 = vsel %vm660, %v748, 0
    %773 = vmatprep.subr.mxu0 0.0
    %774 = vmatpush1.msra.mxu0 %v499
    %775 = vmatprep.subr.mxu0 0.0
    %776 = vmatpush1.msra.mxu0 %v501
    %777 = vmatprep.subr.mxu0 0.0
    %778 = vmatpush1.msra.mxu0 %v505
    %779 = vmatprep.subr.mxu0 0.0
    %780 = vmatpush1.msra.mxu0 %v507
    %781 = vmatprep.subr.mxu0 0.0
    %782 = vmatpush1.msra.mxu0 %v511
    %783 = vmatprep.subr.mxu0 0.0
    %784 = vmatpush1.msra.mxu0 %v513
    %785 = vmatprep.subr.mxu0 0.0
    %786 = vmatpush1.msra.mxu0 %v517
    %787 = vmatprep.subr.mxu0 0.0
    %788 = vmatpush1.msra.mxu0 %v519
    %789 = vmatprep.subr.mxu0 0.0
    %790 = vmatpush1.msra.mxu0 0.0
    %791 = vmatprep.subr.mxu0 0.0
    %792 = vmatpush1.msra.mxu0 0.0
    %793 = vmatprep.subr.mxu0 0.0
    %794 = vmatpush1.msra.mxu0 0.0
    %795 = vmatprep.subr.mxu0 0.0
    %796 = vmatpush1.msra.mxu0 0.0
    %797 = vmatprep.subr.mxu0 0.0
    %798 = vmatpush1.msra.mxu0 0.0
    %799 = vmatprep.subr.mxu0 0.0
    %800 = vmatpush1.msra.mxu0 0.0
    %801 = vmatprep.subr.mxu0 0.0
    %802 = vmatpush1.msra.mxu0 0.0
    %803 = vmatprep.subr.mxu0 0.0
    %804 = vmatpush1.msra.mxu0 0.0
    %805 = vmatprep.subr.mxu0 0.0
    %806 = vmatpush1.msra.mxu0 0.0
    %807 = vmatprep.subr.mxu0 0.0
    %808 = vmatpush1.msra.mxu0 0.0
    %809 = vmatprep.subr.mxu0 0.0
    %810 = vmatpush1.msra.mxu0 0.0
    %811 = vmatprep.subr.mxu0 0.0
    %812 = vmatpush1.msra.mxu0 0.0
    %813 = vmatprep.subr.mxu0 0.0
    %814 = vmatpush1.msra.mxu0 0.0
    %815 = vmatprep.subr.mxu0 0.0
    %816 = vmatpush1.msra.mxu0 0.0
    %817 = vmatprep.subr.mxu0 0.0
    %818 = vmatpush1.msra.mxu0 0.0
    %819 = vmatprep.subr.mxu0 0.0
    %820 = vmatpush1.msra.mxu0 0.0
    %821 = vmatprep.subr.mxu0 0.0
    %822 = vmatpush1.msra.mxu0 0.0
    %823 = vmatprep.subr.mxu0 0.0
    %824 = vmatpush1.msra.mxu0 0.0
    %825 = vmatprep.subr.mxu0 0.0
    %826 = vmatpush1.msra.mxu0 0.0
    %827 = vmatprep.subr.mxu0 0.0
    %828 = vmatpush1.msra.mxu0 0.0
    %829 = vmatprep.subr.mxu0 0.0
    %830 = vmatpush1.msra.mxu0 0.0
    %831 = vmatprep.subr.mxu0 0.0
    %832 = vmatpush1.msra.mxu0 0.0
    %833 = vmatprep.subr.mxu0 0.0
    %834 = vmatpush1.msra.mxu0 0.0
    %835 = vmatprep.subr.mxu0 0.0
    %836 = vmatpush1.msra.mxu0 0.0
    %837 = vmatprep.mubr.f32.mxu0 0.0
    %838 = vmatmul.mubr.f32.gmra.mrb[0].mxu0 %v750
    %v839 = vpop.f32.mrb[0].mxu0
    %v840 = vadd.f32 0.0, %v839
    %v841 = vpop.f32.mrb[0].mxu0
    %842 = vmatprep.mubr.f32.mxu0 0.0
    %843 = vmatmul.mubr.f32.gmra.mrb[0].mxu0 %v753
    %v844 = vpop.f32.mrb[0].mxu0
    %v845 = vadd.f32 0.0, %v844
    %v846 = vpop.f32.mrb[0].mxu0
    %847 = vmatprep.mubr.f32.mxu0 0.0
    %848 = vmatmul.mubr.f32.gmra.mrb[0].mxu0 %v756
    %v849 = vpop.f32.mrb[0].mxu0
    %v850 = vadd.f32 0.0, %v849
    %v851 = vpop.f32.mrb[0].mxu0
    %852 = vmatprep.mubr.f32.mxu0 0.0
    %853 = vmatmul.mubr.f32.gmra.mrb[0].mxu0 %v759
    %v854 = vpop.f32.mrb[0].mxu0
    %v855 = vadd.f32 0.0, %v854
    %v856 = vpop.f32.mrb[0].mxu0
    %857 = vmatprep.mubr.f32.mxu0 0.0
    %858 = vmatmul.mubr.f32.gmra.mrb[0].mxu0 %v762
    %v859 = vpop.f32.mrb[0].mxu0
    %v860 = vadd.f32 0.0, %v859
    %v861 = vpop.f32.mrb[0].mxu0
    %862 = vmatprep.mubr.f32.mxu0 0.0
    %863 = vmatmul.mubr.f32.gmra.mrb[0].mxu0 %v765
    %v864 = vpop.f32.mrb[0].mxu0
    %v865 = vadd.f32 0.0, %v864
    %v866 = vpop.f32.mrb[0].mxu0
    %867 = vmatprep.mubr.f32.mxu0 0.0
    %868 = vmatmul.mubr.f32.gmra.mrb[0].mxu0 %v768
    %v869 = vpop.f32.mrb[0].mxu0
    %v870 = vadd.f32 0.0, %v869
    %v871 = vpop.f32.mrb[0].mxu0
    %872 = vmatprep.mubr.f32.mxu0 0.0
    %873 = vmatmul.mubr.f32.gmra.mrb[0].mxu0 %v771
    %v874 = vpop.f32.mrb[0].mxu0
    %v875 = vadd.f32 0.0, %v874
    %v876 = vpop.f32.mrb[0].mxu0
    %877 = vdwg.mxu0
    %880 = vrot.lane.b32.xlu0 %v850, 8
    %v881 = vpop.permute.xlu0 %880
    %882 = vrot.lane.b32.xlu0 %v855, 8
    %v883 = vpop.permute.xlu0 %882
    %888 = vrot.lane.b32.xlu0 %v860, 16
    %v889 = vpop.permute.xlu0 %888
    %890 = vrot.lane.b32.xlu0 %v865, 16
    %v891 = vpop.permute.xlu0 %890
    %896 = vrot.lane.b32.xlu0 %v870, 24
    %v897 = vpop.permute.xlu0 %896
    %898 = vrot.lane.b32.xlu0 %v875, 24
    %v899 = vpop.permute.xlu0 %898
    %v902 = vsel %vm522, %v840, %v881
    %v903 = vsel %vm522, %v845, %v883
    %vm904 = vcmask 130048
    %v905 = vsel %vm904, %v902, %v889
    %v906 = vsel %vm904, %v903, %v891
    %vm907 = vcmask 195584
    %v908 = vsel %vm907, %v905, %v897
    %v909 = vsel %vm907, %v906, %v899
    %v910 = vld [vmem:[%s7] sm:$0xff]
    %v911 = vld [vmem:[%s7 + $0x8] sm:$0xff]
    %v912 = vld [vmem:[%s7 + $0x10] sm:$0xff]
    %v913 = vld [vmem:[%s7 + $0x18] sm:$0xff]
    %v915 = vsel %vm163, %v908, 0
    %v918 = vsel %vm163, %v909, 0
    %920 = vmatprep.subr.mxu0 0.0
    %921 = vmatpush1.msra.mxu0 %v910
    %922 = vmatprep.subr.mxu0 0.0
    %923 = vmatpush1.msra.mxu0 %v911
    %924 = vmatprep.subr.mxu0 0.0
    %925 = vmatpush1.msra.mxu0 %v912
    %926 = vmatprep.subr.mxu0 0.0
    %927 = vmatpush1.msra.mxu0 %v913
    %928 = vmatprep.subr.mxu0 0.0
    %929 = vmatpush1.msra.mxu0 0.0
    %930 = vmatprep.subr.mxu0 0.0
    %931 = vmatpush1.msra.mxu0 0.0
    %932 = vmatprep.subr.mxu0 0.0
    %933 = vmatpush1.msra.mxu0 0.0
    %934 = vmatprep.subr.mxu0 0.0
    %935 = vmatpush1.msra.mxu0 0.0
    %936 = vmatprep.subr.mxu0 0.0
    %937 = vmatpush1.msra.mxu0 0.0
    %938 = vmatprep.subr.mxu0 0.0
    %939 = vmatpush1.msra.mxu0 0.0
    %940 = vmatprep.subr.mxu0 0.0
    %941 = vmatpush1.msra.mxu0 0.0
    %942 = vmatprep.subr.mxu0 0.0
    %943 = vmatpush1.msra.mxu0 0.0
    %944 = vmatprep.subr.mxu0 0.0
    %945 = vmatpush1.msra.mxu0 0.0
    %946 = vmatprep.subr.mxu0 0.0
    %947 = vmatpush1.msra.mxu0 0.0
    %948 = vmatprep.subr.mxu0 0.0
    %949 = vmatpush1.msra.mxu0 0.0
    %950 = vmatprep.subr.mxu0 0.0
    %951 = vmatpush1.msra.mxu0 0.0
    %952 = vmatprep.subr.mxu0 0.0
    %953 = vmatpush1.msra.mxu0 0.0
    %954 = vmatprep.subr.mxu0 0.0
    %955 = vmatpush1.msra.mxu0 0.0
    %956 = vmatprep.subr.mxu0 0.0
    %957 = vmatpush1.msra.mxu0 0.0
    %958 = vmatprep.subr.mxu0 0.0
    %959 = vmatpush1.msra.mxu0 0.0
    %960 = vmatprep.subr.mxu0 0.0
    %961 = vmatpush1.msra.mxu0 0.0
    %962 = vmatprep.subr.mxu0 0.0
    %963 = vmatpush1.msra.mxu0 0.0
    %964 = vmatprep.subr.mxu0 0.0
    %965 = vmatpush1.msra.mxu0 0.0
    %966 = vmatprep.subr.mxu0 0.0
    %967 = vmatpush1.msra.mxu0 0.0
    %968 = vmatprep.subr.mxu0 0.0
    %969 = vmatpush1.msra.mxu0 0.0
    %970 = vmatprep.subr.mxu0 0.0
    %971 = vmatpush1.msra.mxu0 0.0
    %972 = vmatprep.subr.mxu0 0.0
    %973 = vmatpush1.msra.mxu0 0.0
    %974 = vmatprep.subr.mxu0 0.0
    %975 = vmatpush1.msra.mxu0 0.0
    %976 = vmatprep.subr.mxu0 0.0
    %977 = vmatpush1.msra.mxu0 0.0
    %978 = vmatprep.subr.mxu0 0.0
    %979 = vmatpush1.msra.mxu0 0.0
    %980 = vmatprep.subr.mxu0 0.0
    %981 = vmatpush1.msra.mxu0 0.0
    %982 = vmatprep.subr.mxu0 0.0
    %983 = vmatpush1.msra.mxu0 0.0
    %984 = vmatprep.mubr.f32.mxu0 0.0
    %985 = vmatmul.mubr.f32.gmra.mrb[0].mxu0 %v915
    %v986 = vpop.f32.mrb[0].mxu0
    %v987 = vadd.f32 0.0, %v986
    %v988 = vpop.f32.mrb[0].mxu0
    %989 = vmatprep.mubr.f32.mxu0 0.0
    %990 = vmatmul.mubr.f32.gmra.mrb[0].mxu0 %v918
    %v991 = vpop.f32.mrb[0].mxu0
    %v992 = vadd.f32 0.0, %v991
    %v993 = vpop.f32.mrb[0].mxu0
    %994 = vdwg.mxu0
    %v995 = vadd.f32 %v134, %v987
    %v996 = vadd.f32 %v135, %v992
    %v997 = vld [vmem:[%s10 + $0x2] sm:$0x1]
    %v998 = vlaneseq
    %v999 = vshrl.u32 %v998, 7
    %v1000 = vsub.s32 0, %v999
    %v1001 = vrot.slane %v997, %v1000
    %v1002 = vadd.f32 %v995, %v1001
    %v1003 = vadd.f32 %v996, %v1001
    %v1004 = vld [vmem:[%s10 + $0x8] sm:$0x1]
    %v1005 = vld [vmem:[%s10 + $0x9] sm:$0x1]
    %v1006 = vsel %vm163, %v1002, 0.0
    %1007 = vadd.xlane.f32.xlu0 %v1006
    %v1008 = vpop.xlane.xlu0 %1007
    %v1009 = vsel %vm163, %v1003, 0.0
    %1010 = vadd.xlane.f32.xlu0 %v1009
    %v1011 = vpop.xlane.xlu0 %1010
    %v1012 = vmul.f32 %v1008, %v331
    %v1013 = vmul.f32 %v1011, %v331
    %v1014 = vsub.f32 %v1002, %v1012
    %v1015 = vsub.f32 %v1003, %v1013
    %v1016 = vmul.f32 %v1014, %v1014
    %v1017 = vmul.f32 %v1015, %v1015
    %v1018 = vsel %vm163, %v1016, 0.0
    %1019 = vadd.xlane.f32.xlu0 %v1018
    %v1020 = vpop.xlane.xlu0 %1019
    %v1021 = vsel %vm163, %v1017, 0.0
    %1022 = vadd.xlane.f32.xlu0 %v1021
    %v1023 = vpop.xlane.xlu0 %1022
    %v1024 = vmul.f32 %v1020, 0.032258064
    %v1025 = vmul.f32 %v1023, 0.032258064
    %v1026 = vlaneseq
    %v1027 = vshrl.u32 %v1026, 7
    %v1028 = vsub.s32 0, %v1027
    %v1029 = vrot.slane %v1004, %v1028
    %v1030 = vmul.f32 %v1029, %v1014
    %v1031 = vmul.f32 %v1029, %v1015
    %v1032 = vrsqrt.pop %v1024
    %v1033 = vmul.f32 %v1024, %v1032
    %vm1034 = vcmp.eq.f32.partialorder %v1024, inf
    %v1035 = vsel %vm1034, %v1024, %v1033
    %vm1036 = vcmp.eq.f32.partialorder %v1024, 0.0
    %v1037 = vand.u32 %v1024, 2147483648
    %v1038 = vsel %vm1036, %v1037, %v1035
    %v1039 = vrsqrt.pop %v1025
    %v1040 = vmul.f32 %v1025, %v1039
    %vm1041 = vcmp.eq.f32.partialorder %v1025, inf
    %v1042 = vsel %vm1041, %v1025, %v1040
    %vm1043 = vcmp.eq.f32.partialorder %v1025, 0.0
    %v1044 = vand.u32 %v1025, 2147483648
    %v1045 = vsel %vm1043, %v1044, %v1042
    %v1046 = vadd.f32 %v1038, 1e-06
    %v1047 = vadd.f32 %v1045, 1e-06
    %v1048 = vrcp.pop %v1046
    %v1049 = vmul.f32 %v1030, %v1048
    %v1050 = vrcp.pop %v1047
    %v1051 = vmul.f32 %v1031, %v1050
    %v1052 = vlaneseq
    %v1053 = vshrl.u32 %v1052, 7
    %v1054 = vsub.s32 0, %v1053
    %v1055 = vrot.slane %v1005, %v1054
    %v1056 = vadd.f32 %v1049, %v1055
    %v1057 = vadd.f32 %v1051, %v1055
    %v1058 = vld [vmem:[#allocation10] sm:$0xff]
    %v1059 = vld [vmem:[#allocation10 + $0x8] sm:$0xff]
    %v1060 = vld [vmem:[#allocation10 + $0x10] sm:$0xff]
    %v1061 = vld [vmem:[#allocation10 + $0x18] sm:$0xff]
    %v1062 = vld [vmem:[%s10 + $0x1] sm:$0x1]
    %v1063 = vlaneseq
    %v1064 = vshrl.u32 %v1063, 7
    %v1065 = vsub.s32 0, %v1064
    %v1066 = vrot.slane %v1062, %v1065
    %v1068 = vsel %vm163, %v1056, 0
    %v1071 = vsel %vm163, %v1057, 0
    %1073 = vmatprep.subr.mxu0 0.0
    %1074 = vmatpush1.msra.mxu0 %v1058
    %1075 = vmatprep.subr.mxu0 0.0
    %1076 = vmatpush1.msra.mxu0 %v1059
    %1077 = vmatprep.subr.mxu0 0.0
    %1078 = vmatpush1.msra.mxu0 %v1060
    %1079 = vmatprep.subr.mxu0 0.0
    %1080 = vmatpush1.msra.mxu0 %v1061
    %1081 = vmatprep.subr.mxu0 0.0
    %1082 = vmatpush1.msra.mxu0 0.0
    %1083 = vmatprep.subr.mxu0 0.0
    %1084 = vmatpush1.msra.mxu0 0.0
    %1085 = vmatprep.subr.mxu0 0.0
    %1086 = vmatpush1.msra.mxu0 0.0
    %1087 = vmatprep.subr.mxu0 0.0
    %1088 = vmatpush1.msra.mxu0 0.0
    %1089 = vmatprep.subr.mxu0 0.0
    %1090 = vmatpush1.msra.mxu0 0.0
    %1091 = vmatprep.subr.mxu0 0.0
    %1092 = vmatpush1.msra.mxu0 0.0
    %1093 = vmatprep.subr.mxu0 0.0
    %1094 = vmatpush1.msra.mxu0 0.0
    %1095 = vmatprep.subr.mxu0 0.0
    %1096 = vmatpush1.msra.mxu0 0.0
    %1097 = vmatprep.subr.mxu0 0.0
    %1098 = vmatpush1.msra.mxu0 0.0
    %1099 = vmatprep.subr.mxu0 0.0
    %1100 = vmatpush1.msra.mxu0 0.0
    %1101 = vmatprep.subr.mxu0 0.0
    %1102 = vmatpush1.msra.mxu0 0.0
    %1103 = vmatprep.subr.mxu0 0.0
    %1104 = vmatpush1.msra.mxu0 0.0
    %1105 = vmatprep.subr.mxu0 0.0
    %1106 = vmatpush1.msra.mxu0 0.0
    %1107 = vmatprep.subr.mxu0 0.0
    %1108 = vmatpush1.msra.mxu0 0.0
    %1109 = vmatprep.subr.mxu0 0.0
    %1110 = vmatpush1.msra.mxu0 0.0
    %1111 = vmatprep.subr.mxu0 0.0
    %1112 = vmatpush1.msra.mxu0 0.0
    %1113 = vmatprep.subr.mxu0 0.0
    %1114 = vmatpush1.msra.mxu0 0.0
    %1115 = vmatprep.subr.mxu0 0.0
    %1116 = vmatpush1.msra.mxu0 0.0
    %1117 = vmatprep.subr.mxu0 0.0
    %1118 = vmatpush1.msra.mxu0 0.0
    %1119 = vmatprep.subr.mxu0 0.0
    %1120 = vmatpush1.msra.mxu0 0.0
    %1121 = vmatprep.subr.mxu0 0.0
    %1122 = vmatpush1.msra.mxu0 0.0
    %1123 = vmatprep.subr.mxu0 0.0
    %1124 = vmatpush1.msra.mxu0 0.0
    %1125 = vmatprep.subr.mxu0 0.0
    %1126 = vmatpush1.msra.mxu0 0.0
    %1127 = vmatprep.subr.mxu0 0.0
    %1128 = vmatpush1.msra.mxu0 0.0
    %1129 = vmatprep.subr.mxu0 0.0
    %1130 = vmatpush1.msra.mxu0 0.0
    %1131 = vmatprep.subr.mxu0 0.0
    %1132 = vmatpush1.msra.mxu0 0.0
    %1133 = vmatprep.subr.mxu0 0.0
    %1134 = vmatpush1.msra.mxu0 0.0
    %1135 = vmatprep.subr.mxu0 0.0
    %1136 = vmatpush1.msra.mxu0 0.0
    %1137 = vmatprep.mubr.f32.mxu0 0.0
    %1138 = vmatmul.mubr.f32.gmra.mrb[0].mxu0 %v1068
    %v1139 = vpop.f32.mrb[0].mxu0
    %v1140 = vadd.f32 %v1066, %v1139
    %v1141 = vpop.f32.mrb[0].mxu0
    %1142 = vmatprep.mubr.f32.mxu0 0.0
    %1143 = vmatmul.mubr.f32.gmra.mrb[0].mxu0 %v1071
    %v1144 = vpop.f32.mrb[0].mxu0
    %v1145 = vadd.f32 %v1066, %v1144
    %v1146 = vpop.f32.mrb[0].mxu0
    %1147 = vdwg.mxu0
    %1150 = vrot.lane.b32.xlu0 %v1140, 120
    %v1151 = vpop.permute.xlu0 %1150
    %1152 = vrot.lane.b32.xlu0 %v1145, 120
    %v1153 = vpop.permute.xlu0 %1152
    %1154 = vrot.lane.b32.xlu0 %v1140, 112
    %v1155 = vpop.permute.xlu0 %1154
    %1156 = vrot.lane.b32.xlu0 %v1145, 112
    %v1157 = vpop.permute.xlu0 %1156
    %1158 = vrot.lane.b32.xlu0 %v1140, 104
    %v1159 = vpop.permute.xlu0 %1158
    %1160 = vrot.lane.b32.xlu0 %v1145, 104
    %v1161 = vpop.permute.xlu0 %1160
    %v1162 = vsel %vm522, %v1140, 0
    %v1164 = vsel %vm522, %v1145, 0
    %v1166 = vsel %vm522, %v1151, 0
    %v1168 = vsel %vm522, %v1153, 0
    %v1170 = vsel %vm522, %v1155, 0
    %v1172 = vsel %vm522, %v1157, 0
    %v1174 = vsel %vm522, %v1159, 0
    %v1176 = vsel %vm522, %v1161, 0
    %v1178 = vsel %vm522, %v237, 0
    %v1180 = vsel %vm522, %v242, 0
    %v1182 = vsel %vm522, %v248, 0
    %v1184 = vsel %vm522, %v250, 0
    %v1186 = vsel %vm522, %v252, 0
    %v1188 = vsel %vm522, %v254, 0
    %v1190 = vsel %vm522, %v256, 0
    %v1192 = vsel %vm522, %v258, 0
    %1194 = vmatprep.subr.mxu0 0.0
    %1195 = vmatpush1.xpose.msra.mxu0 %v1178
    %1196 = vmatprep.subr.mxu0 0.0
    %1197 = vmatpush1.xpose.msra.mxu0 %v1180
    %1198 = vmatprep.subr.mxu0 0.0
    %1199 = vmatpush1.xpose.msra.mxu0 %v1182
    %1200 = vmatprep.subr.mxu0 0.0
    %1201 = vmatpush1.xpose.msra.mxu0 %v1184
    %1202 = vmatprep.subr.mxu0 0.0
    %1203 = vmatpush1.xpose.msra.mxu0 %v1186
    %1204 = vmatprep.subr.mxu0 0.0
    %1205 = vmatpush1.xpose.msra.mxu0 %v1188
    %1206 = vmatprep.subr.mxu0 0.0
    %1207 = vmatpush1.xpose.msra.mxu0 %v1190
    %1208 = vmatprep.subr.mxu0 0.0
    %1209 = vmatpush1.xpose.msra.mxu0 %v1192
    %1210 = vmatprep.subr.mxu0 0.0
    %1211 = vmatpush1.xpose.msra.mxu0 0.0
    %1212 = vmatprep.subr.mxu0 0.0
    %1213 = vmatpush1.xpose.msra.mxu0 0.0
    %1214 = vmatprep.subr.mxu0 0.0
    %1215 = vmatpush1.xpose.msra.mxu0 0.0
    %1216 = vmatprep.subr.mxu0 0.0
    %1217 = vmatpush1.xpose.msra.mxu0 0.0
    %1218 = vmatprep.subr.mxu0 0.0
    %1219 = vmatpush1.xpose.msra.mxu0 0.0
    %1220 = vmatprep.subr.mxu0 0.0
    %1221 = vmatpush1.xpose.msra.mxu0 0.0
    %1222 = vmatprep.subr.mxu0 0.0
    %1223 = vmatpush1.xpose.msra.mxu0 0.0
    %1224 = vmatprep.subr.mxu0 0.0
    %1225 = vmatpush1.xpose.msra.mxu0 0.0
    %1226 = vmatprep.subr.mxu0 0.0
    %1227 = vmatpush1.xpose.msra.mxu0 0.0
    %1228 = vmatprep.subr.mxu0 0.0
    %1229 = vmatpush1.xpose.msra.mxu0 0.0
    %1230 = vmatprep.subr.mxu0 0.0
    %1231 = vmatpush1.xpose.msra.mxu0 0.0
    %1232 = vmatprep.subr.mxu0 0.0
    %1233 = vmatpush1.xpose.msra.mxu0 0.0
    %1234 = vmatprep.subr.mxu0 0.0
    %1235 = vmatpush1.xpose.msra.mxu0 0.0
    %1236 = vmatprep.subr.mxu0 0.0
    %1237 = vmatpush1.xpose.msra.mxu0 0.0
    %1238 = vmatprep.subr.mxu0 0.0
    %1239 = vmatpush1.xpose.msra.mxu0 0.0
    %1240 = vmatprep.subr.mxu0 0.0
    %1241 = vmatpush1.xpose.msra.mxu0 0.0
    %1242 = vmatprep.subr.mxu0 0.0
    %1243 = vmatpush1.xpose.msra.mxu0 0.0
    %1244 = vmatprep.subr.mxu0 0.0
    %1245 = vmatpush1.xpose.msra.mxu0 0.0
    %1246 = vmatprep.subr.mxu0 0.0
    %1247 = vmatpush1.xpose.msra.mxu0 0.0
    %1248 = vmatprep.subr.mxu0 0.0
    %1249 = vmatpush1.xpose.msra.mxu0 0.0
    %1250 = vmatprep.subr.mxu0 0.0
    %1251 = vmatpush1.xpose.msra.mxu0 0.0
    %1252 = vmatprep.subr.mxu0 0.0
    %1253 = vmatpush1.xpose.msra.mxu0 0.0
    %1254 = vmatprep.subr.mxu0 0.0
    %1255 = vmatpush1.xpose.msra.mxu0 0.0
    %1256 = vmatprep.subr.mxu0 0.0
    %1257 = vmatpush1.xpose.msra.mxu0 0.0
    %1258 = vmatprep.mubr.f32.mxu0 0.0
    %1259 = vmatmul.mubr.f32.gmra.mrb[0].mxu0 %v1162
    %v1260 = vpop.f32.mrb[0].mxu0
    %v1261 = vadd.f32 %v146, %v1260
    %v1262 = vpop.f32.mrb[0].mxu0
    %1263 = vmatprep.mubr.f32.mxu0 0.0
    %1264 = vmatmul.mubr.f32.gmra.mrb[0].mxu0 %v1164
    %v1265 = vpop.f32.mrb[0].mxu0
    %v1266 = vadd.f32 %v147, %v1265
    %v1267 = vpop.f32.mrb[0].mxu0
    %1268 = vmatprep.mubr.f32.mxu0 0.0
    %1269 = vmatmul.mubr.f32.gmra.mrb[0].mxu0 %v1166
    %v1270 = vpop.f32.mrb[0].mxu0
    %v1271 = vadd.f32 %v148, %v1270
    %v1272 = vpop.f32.mrb[0].mxu0
    %1273 = vmatprep.mubr.f32.mxu0 0.0
    %1274 = vmatmul.mubr.f32.gmra.mrb[0].mxu0 %v1168
    %v1275 = vpop.f32.mrb[0].mxu0
    %v1276 = vadd.f32 %v149, %v1275
    %v1277 = vpop.f32.mrb[0].mxu0
    %1278 = vmatprep.mubr.f32.mxu0 0.0
    %1279 = vmatmul.mubr.f32.gmra.mrb[0].mxu0 %v1170
    %v1280 = vpop.f32.mrb[0].mxu0
    %v1281 = vadd.f32 %v150, %v1280
    %v1282 = vpop.f32.mrb[0].mxu0
    %1283 = vmatprep.mubr.f32.mxu0 0.0
    %1284 = vmatmul.mubr.f32.gmra.mrb[0].mxu0 %v1172
    %v1285 = vpop.f32.mrb[0].mxu0
    %v1286 = vadd.f32 %v151, %v1285
    %v1287 = vpop.f32.mrb[0].mxu0
    %1288 = vmatprep.mubr.f32.mxu0 0.0
    %1289 = vmatmul.mubr.f32.gmra.mrb[0].mxu0 %v1174
    %v1290 = vpop.f32.mrb[0].mxu0
    %v1291 = vadd.f32 %v152, %v1290
    %v1292 = vpop.f32.mrb[0].mxu0
    %1293 = vmatprep.mubr.f32.mxu0 0.0
    %1294 = vmatmul.mubr.f32.gmra.mrb[0].mxu0 %v1176
    %v1295 = vpop.f32.mrb[0].mxu0
    %v1296 = vadd.f32 %v153, %v1295
    %v1297 = vpop.f32.mrb[0].mxu0
    %1298 = vdwg.mxu0
    %v1299 = vsel %vm660, %v1261, -inf
    %1300 = vmax.xlane.f32.xlu0 %v1299
    %v1301 = vpop.xlane.xlu0 %1300
    %v1302 = vsel %vm660, %v1266, -inf
    %1303 = vmax.xlane.f32.xlu0 %v1302
    %v1304 = vpop.xlane.xlu0 %1303
    %v1305 = vsel %vm660, %v1271, -inf
    %1306 = vmax.xlane.f32.xlu0 %v1305
    %v1307 = vpop.xlane.xlu0 %1306
    %v1308 = vsel %vm660, %v1276, -inf
    %1309 = vmax.xlane.f32.xlu0 %v1308
    %v1310 = vpop.xlane.xlu0 %1309
    %v1311 = vsel %vm660, %v1281, -inf
    %1312 = vmax.xlane.f32.xlu0 %v1311
    %v1313 = vpop.xlane.xlu0 %1312
    %v1314 = vsel %vm660, %v1286, -inf
    %1315 = vmax.xlane.f32.xlu0 %v1314
    %v1316 = vpop.xlane.xlu0 %1315
    %v1317 = vsel %vm660, %v1291, -inf
    %1318 = vmax.xlane.f32.xlu0 %v1317
    %v1319 = vpop.xlane.xlu0 %1318
    %v1320 = vsel %vm660, %v1296, -inf
    %1321 = vmax.xlane.f32.xlu0 %v1320
    %v1322 = vpop.xlane.xlu0 %1321
    %v1323 = vsub.f32 %v1261, %v1301
    %v1324 = vsub.f32 %v1266, %v1304
    %v1325 = vsub.f32 %v1271, %v1307
    %v1326 = vsub.f32 %v1276, %v1310
    %v1327 = vsub.f32 %v1281, %v1313
    %v1328 = vsub.f32 %v1286, %v1316
    %v1329 = vsub.f32 %v1291, %v1319
    %v1330 = vsub.f32 %v1296, %v1322
    %v1331 = vmul.f32 %v1323, 1.442695
    %v1332 = vpow.pop %v1331
    %v1333 = vmul.f32 %v1324, 1.442695
    %v1334 = vpow.pop %v1333
    %v1335 = vmul.f32 %v1325, 1.442695
    %v1336 = vpow.pop %v1335
    %v1337 = vmul.f32 %v1326, 1.442695
    %v1338 = vpow.pop %v1337
    %v1339 = vmul.f32 %v1327, 1.442695
    %v1340 = vpow.pop %v1339
    %v1341 = vmul.f32 %v1328, 1.442695
    %v1342 = vpow.pop %v1341
    %v1343 = vmul.f32 %v1329, 1.442695
    %v1344 = vpow.pop %v1343
    %v1345 = vmul.f32 %v1330, 1.442695
    %v1346 = vpow.pop %v1345
    %v1347 = vsel %vm660, %v1332, 0.0
    %1348 = vadd.xlane.f32.xlu0 %v1347
    %v1349 = vpop.xlane.xlu0 %1348
    %v1350 = vsel %vm660, %v1334, 0.0
    %1351 = vadd.xlane.f32.xlu0 %v1350
    %v1352 = vpop.xlane.xlu0 %1351
    %v1353 = vsel %vm660, %v1336, 0.0
    %1354 = vadd.xlane.f32.xlu0 %v1353
    %v1355 = vpop.xlane.xlu0 %1354
    %v1356 = vsel %vm660, %v1338, 0.0
    %1357 = vadd.xlane.f32.xlu0 %v1356
    %v1358 = vpop.xlane.xlu0 %1357
    %v1359 = vsel %vm660, %v1340, 0.0
    %1360 = vadd.xlane.f32.xlu0 %v1359
    %v1361 = vpop.xlane.xlu0 %1360
    %v1362 = vsel %vm660, %v1342, 0.0
    %1363 = vadd.xlane.f32.xlu0 %v1362
    %v1364 = vpop.xlane.xlu0 %1363
    %v1365 = vsel %vm660, %v1344, 0.0
    %1366 = vadd.xlane.f32.xlu0 %v1365
    %v1367 = vpop.xlane.xlu0 %1366
    %v1368 = vsel %vm660, %v1346, 0.0
    %1369 = vadd.xlane.f32.xlu0 %v1368
    %v1370 = vpop.xlane.xlu0 %1369
    %v1371 = vrcp.pop %v1349
    %v1372 = vmul.f32 %v1332, %v1371
    %v1373 = vrcp.pop %v1352
    %v1374 = vmul.f32 %v1334, %v1373
    %v1375 = vrcp.pop %v1355
    %v1376 = vmul.f32 %v1336, %v1375
    %v1377 = vrcp.pop %v1358
    %v1378 = vmul.f32 %v1338, %v1377
    %v1379 = vrcp.pop %v1361
    %v1380 = vmul.f32 %v1340, %v1379
    %v1381 = vrcp.pop %v1364
    %v1382 = vmul.f32 %v1342, %v1381
    %v1383 = vrcp.pop %v1367
    %v1384 = vmul.f32 %v1344, %v1383
    %v1385 = vrcp.pop %v1370
    %v1386 = vmul.f32 %v1346, %v1385
    %v1388 = vsel %vm660, %v1372, 0
    %v1391 = vsel %vm660, %v1374, 0
    %v1394 = vsel %vm660, %v1376, 0
    %v1397 = vsel %vm660, %v1378, 0
    %v1400 = vsel %vm660, %v1380, 0
    %v1403 = vsel %vm660, %v1382, 0
    %v1406 = vsel %vm660, %v1384, 0
    %v1409 = vsel %vm660, %v1386, 0
    %1411 = vmatprep.subr.mxu0 0.0
    %1412 = vmatpush1.msra.mxu0 %v260
    %1413 = vmatprep.subr.mxu0 0.0
    %1414 = vmatpush1.msra.mxu0 %v262
    %1415 = vmatprep.subr.mxu0 0.0
    %1416 = vmatpush1.msra.mxu0 %v266
    %1417 = vmatprep.subr.mxu0 0.0
    %1418 = vmatpush1.msra.mxu0 %v268
    %1419 = vmatprep.subr.mxu0 0.0
    %1420 = vmatpush1.msra.mxu0 %v272
    %1421 = vmatprep.subr.mxu0 0.0
    %1422 = vmatpush1.msra.mxu0 %v274
    %1423 = vmatprep.subr.mxu0 0.0
    %1424 = vmatpush1.msra.mxu0 %v278
    %1425 = vmatprep.subr.mxu0 0.0
    %1426 = vmatpush1.msra.mxu0 %v280
    %1427 = vmatprep.subr.mxu0 0.0
    %1428 = vmatpush1.msra.mxu0 0.0
    %1429 = vmatprep.subr.mxu0 0.0
    %1430 = vmatpush1.msra.mxu0 0.0
    %1431 = vmatprep.subr.mxu0 0.0
    %1432 = vmatpush1.msra.mxu0 0.0
    %1433 = vmatprep.subr.mxu0 0.0
    %1434 = vmatpush1.msra.mxu0 0.0
    %1435 = vmatprep.subr.mxu0 0.0
    %1436 = vmatpush1.msra.mxu0 0.0
    %1437 = vmatprep.subr.mxu0 0.0
    %1438 = vmatpush1.msra.mxu0 0.0
    %1439 = vmatprep.subr.mxu0 0.0
    %1440 = vmatpush1.msra.mxu0 0.0
    %1441 = vmatprep.subr.mxu0 0.0
    %1442 = vmatpush1.msra.mxu0 0.0
    %1443 = vmatprep.subr.mxu0 0.0
    %1444 = vmatpush1.msra.mxu0 0.0
    %1445 = vmatprep.subr.mxu0 0.0
    %1446 = vmatpush1.msra.mxu0 0.0
    %1447 = vmatprep.subr.mxu0 0.0
    %1448 = vmatpush1.msra.mxu0 0.0
    %1449 = vmatprep.subr.mxu0 0.0
    %1450 = vmatpush1.msra.mxu0 0.0
    %1451 = vmatprep.subr.mxu0 0.0
    %1452 = vmatpush1.msra.mxu0 0.0
    %1453 = vmatprep.subr.mxu0 0.0
    %1454 = vmatpush1.msra.mxu0 0.0
    %1455 = vmatprep.subr.mxu0 0.0
    %1456 = vmatpush1.msra.mxu0 0.0
    %1457 = vmatprep.subr.mxu0 0.0
    %1458 = vmatpush1.msra.mxu0 0.0
    %1459 = vmatprep.subr.mxu0 0.0
    %1460 = vmatpush1.msra.mxu0 0.0
    %1461 = vmatprep.subr.mxu0 0.0
    %1462 = vmatpush1.msra.mxu0 0.0
    %1463 = vmatprep.subr.mxu0 0.0
    %1464 = vmatpush1.msra.mxu0 0.0
    %1465 = vmatprep.subr.mxu0 0.0
    %1466 = vmatpush1.msra.mxu0 0.0
    %1467 = vmatprep.subr.mxu0 0.0
    %1468 = vmatpush1.msra.mxu0 0.0
    %1469 = vmatprep.subr.mxu0 0.0
    %1470 = vmatpush1.msra.mxu0 0.0
    %1471 = vmatprep.subr.mxu0 0.0
    %1472 = vmatpush1.msra.mxu0 0.0
    %1473 = vmatprep.subr.mxu0 0.0
    %1474 = vmatpush1.msra.mxu0 0.0
    %1475 = vmatprep.mubr.f32.mxu0 0.0
    %1476 = vmatmul.mubr.f32.gmra.mrb[0].mxu0 %v1388
    %v1477 = vpop.f32.mrb[0].mxu0
    %v1478 = vadd.f32 0.0, %v1477
    %v1479 = vpop.f32.mrb[0].mxu0
    %1480 = vmatprep.mubr.f32.mxu0 0.0
    %1481 = vmatmul.mubr.f32.gmra.mrb[0].mxu0 %v1391
    %v1482 = vpop.f32.mrb[0].mxu0
    %v1483 = vadd.f32 0.0, %v1482
    %v1484 = vpop.f32.mrb[0].mxu0
    %1485 = vmatprep.mubr.f32.mxu0 0.0
    %1486 = vmatmul.mubr.f32.gmra.mrb[0].mxu0 %v1394
    %v1487 = vpop.f32.mrb[0].mxu0
    %v1488 = vadd.f32 0.0, %v1487
    %v1489 = vpop.f32.mrb[0].mxu0
    %1490 = vmatprep.mubr.f32.mxu0 0.0
    %1491 = vmatmul.mubr.f32.gmra.mrb[0].mxu0 %v1397
    %v1492 = vpop.f32.mrb[0].mxu0
    %v1493 = vadd.f32 0.0, %v1492
    %v1494 = vpop.f32.mrb[0].mxu0
    %1495 = vmatprep.mubr.f32.mxu0 0.0
    %1496 = vmatmul.mubr.f32.gmra.mrb[0].mxu0 %v1400
    %v1497 = vpop.f32.mrb[0].mxu0
    %v1498 = vadd.f32 0.0, %v1497
    %v1499 = vpop.f32.mrb[0].mxu0
    %1500 = vmatprep.mubr.f32.mxu0 0.0
    %1501 = vmatmul.mubr.f32.gmra.mrb[0].mxu0 %v1403
    %v1502 = vpop.f32.mrb[0].mxu0
    %v1503 = vadd.f32 0.0, %v1502
    %v1504 = vpop.f32.mrb[0].mxu0
    %1505 = vmatprep.mubr.f32.mxu0 0.0
    %1506 = vmatmul.mubr.f32.gmra.mrb[0].mxu0 %v1406
    %v1507 = vpop.f32.mrb[0].mxu0
    %v1508 = vadd.f32 0.0, %v1507
    %v1509 = vpop.f32.mrb[0].mxu0
    %1510 = vmatprep.mubr.f32.mxu0 0.0
    %1511 = vmatmul.mubr.f32.gmra.mrb[0].mxu0 %v1409
    %v1512 = vpop.f32.mrb[0].mxu0
    %v1513 = vadd.f32 0.0, %v1512
    %v1514 = vpop.f32.mrb[0].mxu0
    %1515 = vdwg.mxu0
    %1518 = vrot.lane.b32.xlu0 %v1488, 8
    %v1519 = vpop.permute.xlu0 %1518
    %1520 = vrot.lane.b32.xlu0 %v1493, 8
    %v1521 = vpop.permute.xlu0 %1520
    %1526 = vrot.lane.b32.xlu0 %v1498, 16
    %v1527 = vpop.permute.xlu0 %1526
    %1528 = vrot.lane.b32.xlu0 %v1503, 16
    %v1529 = vpop.permute.xlu0 %1528
    %1534 = vrot.lane.b32.xlu0 %v1508, 24
    %v1535 = vpop.permute.xlu0 %1534
    %1536 = vrot.lane.b32.xlu0 %v1513, 24
    %v1537 = vpop.permute.xlu0 %1536
    %v1540 = vsel %vm522, %v1478, %v1519
    %v1541 = vsel %vm522, %v1483, %v1521
    %v1542 = vsel %vm904, %v1540, %v1527
    %v1543 = vsel %vm904, %v1541, %v1529
    %v1544 = vsel %vm907, %v1542, %v1535
    %v1545 = vsel %vm907, %v1543, %v1537
    %s1546 = scalar_lea.vmem %s7, 32
    %v1547 = vld [vmem:[%s1546] sm:$0xff]
    %v1548 = vld [vmem:[%s1546 + $0x8] sm:$0xff]
    %v1549 = vld [vmem:[%s1546 + $0x10] sm:$0xff]
    %v1550 = vld [vmem:[%s1546 + $0x18] sm:$0xff]
    %v1552 = vsel %vm163, %v1544, 0
    %v1555 = vsel %vm163, %v1545, 0
    %1557 = vmatprep.subr.mxu0 0.0
    %1558 = vmatpush1.msra.mxu0 %v1547
    %1559 = vmatprep.subr.mxu0 0.0
    %1560 = vmatpush1.msra.mxu0 %v1548
    %1561 = vmatprep.subr.mxu0 0.0
    %1562 = vmatpush1.msra.mxu0 %v1549
    %1563 = vmatprep.subr.mxu0 0.0
    %1564 = vmatpush1.msra.mxu0 %v1550
    %1565 = vmatprep.subr.mxu0 0.0
    %1566 = vmatpush1.msra.mxu0 0.0
    %1567 = vmatprep.subr.mxu0 0.0
    %1568 = vmatpush1.msra.mxu0 0.0
    %1569 = vmatprep.subr.mxu0 0.0
    %1570 = vmatpush1.msra.mxu0 0.0
    %1571 = vmatprep.subr.mxu0 0.0
    %1572 = vmatpush1.msra.mxu0 0.0
    %1573 = vmatprep.subr.mxu0 0.0
    %1574 = vmatpush1.msra.mxu0 0.0
    %1575 = vmatprep.subr.mxu0 0.0
    %1576 = vmatpush1.msra.mxu0 0.0
    %1577 = vmatprep.subr.mxu0 0.0
    %1578 = vmatpush1.msra.mxu0 0.0
    %1579 = vmatprep.subr.mxu0 0.0
    %1580 = vmatpush1.msra.mxu0 0.0
    %1581 = vmatprep.subr.mxu0 0.0
    %1582 = vmatpush1.msra.mxu0 0.0
    %1583 = vmatprep.subr.mxu0 0.0
    %1584 = vmatpush1.msra.mxu0 0.0
    %1585 = vmatprep.subr.mxu0 0.0
    %1586 = vmatpush1.msra.mxu0 0.0
    %1587 = vmatprep.subr.mxu0 0.0
    %1588 = vmatpush1.msra.mxu0 0.0
    %1589 = vmatprep.subr.mxu0 0.0
    %1590 = vmatpush1.msra.mxu0 0.0
    %1591 = vmatprep.subr.mxu0 0.0
    %1592 = vmatpush1.msra.mxu0 0.0
    %1593 = vmatprep.subr.mxu0 0.0
    %1594 = vmatpush1.msra.mxu0 0.0
    %1595 = vmatprep.subr.mxu0 0.0
    %1596 = vmatpush1.msra.mxu0 0.0
    %1597 = vmatprep.subr.mxu0 0.0
    %1598 = vmatpush1.msra.mxu0 0.0
    %1599 = vmatprep.subr.mxu0 0.0
    %1600 = vmatpush1.msra.mxu0 0.0
    %1601 = vmatprep.subr.mxu0 0.0
    %1602 = vmatpush1.msra.mxu0 0.0
    %1603 = vmatprep.subr.mxu0 0.0
    %1604 = vmatpush1.msra.mxu0 0.0
    %1605 = vmatprep.subr.mxu0 0.0
    %1606 = vmatpush1.msra.mxu0 0.0
    %1607 = vmatprep.subr.mxu0 0.0
    %1608 = vmatpush1.msra.mxu0 0.0
    %1609 = vmatprep.subr.mxu0 0.0
    %1610 = vmatpush1.msra.mxu0 0.0
    %1611 = vmatprep.subr.mxu0 0.0
    %1612 = vmatpush1.msra.mxu0 0.0
    %1613 = vmatprep.subr.mxu0 0.0
    %1614 = vmatpush1.msra.mxu0 0.0
    %1615 = vmatprep.subr.mxu0 0.0
    %1616 = vmatpush1.msra.mxu0 0.0
    %1617 = vmatprep.subr.mxu0 0.0
    %1618 = vmatpush1.msra.mxu0 0.0
    %1619 = vmatprep.subr.mxu0 0.0
    %1620 = vmatpush1.msra.mxu0 0.0
    %1621 = vmatprep.mubr.f32.mxu0 0.0
    %1622 = vmatmul.mubr.f32.gmra.mrb[0].mxu0 %v1552
    %v1623 = vpop.f32.mrb[0].mxu0
    %v1624 = vadd.f32 0.0, %v1623
    %v1625 = vpop.f32.mrb[0].mxu0
    %1626 = vmatprep.mubr.f32.mxu0 0.0
    %1627 = vmatmul.mubr.f32.gmra.mrb[0].mxu0 %v1555
    %v1628 = vpop.f32.mrb[0].mxu0
    %v1629 = vadd.f32 0.0, %v1628
    %v1630 = vpop.f32.mrb[0].mxu0
    %1631 = vdwg.mxu0
    %v1632 = vadd.f32 %v1002, %v1624
    %v1633 = vadd.f32 %v1003, %v1629
    %v1634 = vld [vmem:[%s10 + $0x3] sm:$0x1]
    %v1635 = vlaneseq
    %v1636 = vshrl.u32 %v1635, 7
    %v1637 = vsub.s32 0, %v1636
    %v1638 = vrot.slane %v1634, %v1637
    %v1639 = vadd.f32 %v1632, %v1638
    %v1640 = vadd.f32 %v1633, %v1638
    %v1641 = vld [vmem:[%s10 + $0xa] sm:$0x1]
    %v1642 = vld [vmem:[%s10 + $0xb] sm:$0x1]
    %v1643 = vsel %vm163, %v1639, 0.0
    %1644 = vadd.xlane.f32.xlu0 %v1643
    %v1645 = vpop.xlane.xlu0 %1644
    %v1646 = vsel %vm163, %v1640, 0.0
    %1647 = vadd.xlane.f32.xlu0 %v1646
    %v1648 = vpop.xlane.xlu0 %1647
    %v1649 = vmul.f32 %v1645, %v331
    %v1650 = vmul.f32 %v1648, %v331
    %v1651 = vsub.f32 %v1639, %v1649
    %v1652 = vsub.f32 %v1640, %v1650
    %v1653 = vmul.f32 %v1651, %v1651
    %v1654 = vmul.f32 %v1652, %v1652
    %v1655 = vsel %vm163, %v1653, 0.0
    %1656 = vadd.xlane.f32.xlu0 %v1655
    %v1657 = vpop.xlane.xlu0 %1656
    %v1658 = vsel %vm163, %v1654, 0.0
    %1659 = vadd.xlane.f32.xlu0 %v1658
    %v1660 = vpop.xlane.xlu0 %1659
    %v1661 = vmul.f32 %v1657, 0.032258064
    %v1662 = vmul.f32 %v1660, 0.032258064
    %v1663 = vlaneseq
    %v1664 = vshrl.u32 %v1663, 7
    %v1665 = vsub.s32 0, %v1664
    %v1666 = vrot.slane %v1641, %v1665
    %v1667 = vmul.f32 %v1666, %v1651
    %v1668 = vmul.f32 %v1666, %v1652
    %v1669 = vrsqrt.pop %v1661
    %v1670 = vmul.f32 %v1661, %v1669
    %vm1671 = vcmp.eq.f32.partialorder %v1661, inf
    %v1672 = vsel %vm1671, %v1661, %v1670
    %vm1673 = vcmp.eq.f32.partialorder %v1661, 0.0
    %v1674 = vand.u32 %v1661, 2147483648
    %v1675 = vsel %vm1673, %v1674, %v1672
    %v1676 = vrsqrt.pop %v1662
    %v1677 = vmul.f32 %v1662, %v1676
    %vm1678 = vcmp.eq.f32.partialorder %v1662, inf
    %v1679 = vsel %vm1678, %v1662, %v1677
    %vm1680 = vcmp.eq.f32.partialorder %v1662, 0.0
    %v1681 = vand.u32 %v1662, 2147483648
    %v1682 = vsel %vm1680, %v1681, %v1679
    %v1683 = vadd.f32 %v1675, 1e-06
    %v1684 = vadd.f32 %v1682, 1e-06
    %v1685 = vrcp.pop %v1683
    %v1686 = vmul.f32 %v1667, %v1685
    %v1687 = vrcp.pop %v1684
    %v1688 = vmul.f32 %v1668, %v1687
    %v1689 = vlaneseq
    %v1690 = vshrl.u32 %v1689, 7
    %v1691 = vsub.s32 0, %v1690
    %v1692 = vrot.slane %v1642, %v1691
    %v1693 = vadd.f32 %v1686, %v1692
    %v1694 = vadd.f32 %v1688, %v1692
    %v1695 = vld [vmem:[#allocation13] sm:$0xff]
    %v1696 = vld [vmem:[#allocation13 + $0x8] sm:$0xff]
    %v1697 = vld [vmem:[#allocation13 + $0x10] sm:$0xff]
    %v1698 = vld [vmem:[#allocation13 + $0x18] sm:$0xff]
    %v1699 = vld [vmem:[%s10 + $0x4] sm:$0x1]
    %v1700 = vlaneseq
    %v1701 = vshrl.u32 %v1700, 7
    %v1702 = vsub.s32 0, %v1701
    %v1703 = vrot.slane %v1699, %v1702
    %v1705 = vsel %vm163, %v1693, 0
    %v1708 = vsel %vm163, %v1694, 0
    %1710 = vmatprep.subr.mxu0 0.0
    %1711 = vmatpush1.msra.mxu0 %v1695
    %1712 = vmatprep.subr.mxu0 0.0
    %1713 = vmatpush1.msra.mxu0 %v1696
    %1714 = vmatprep.subr.mxu0 0.0
    %1715 = vmatpush1.msra.mxu0 %v1697
    %1716 = vmatprep.subr.mxu0 0.0
    %1717 = vmatpush1.msra.mxu0 %v1698
    %1718 = vmatprep.subr.mxu0 0.0
    %1719 = vmatpush1.msra.mxu0 0.0
    %1720 = vmatprep.subr.mxu0 0.0
    %1721 = vmatpush1.msra.mxu0 0.0
    %1722 = vmatprep.subr.mxu0 0.0
    %1723 = vmatpush1.msra.mxu0 0.0
    %1724 = vmatprep.subr.mxu0 0.0
    %1725 = vmatpush1.msra.mxu0 0.0
    %1726 = vmatprep.subr.mxu0 0.0
    %1727 = vmatpush1.msra.mxu0 0.0
    %1728 = vmatprep.subr.mxu0 0.0
    %1729 = vmatpush1.msra.mxu0 0.0
    %1730 = vmatprep.subr.mxu0 0.0
    %1731 = vmatpush1.msra.mxu0 0.0
    %1732 = vmatprep.subr.mxu0 0.0
    %1733 = vmatpush1.msra.mxu0 0.0
    %1734 = vmatprep.subr.mxu0 0.0
    %1735 = vmatpush1.msra.mxu0 0.0
    %1736 = vmatprep.subr.mxu0 0.0
    %1737 = vmatpush1.msra.mxu0 0.0
    %1738 = vmatprep.subr.mxu0 0.0
    %1739 = vmatpush1.msra.mxu0 0.0
    %1740 = vmatprep.subr.mxu0 0.0
    %1741 = vmatpush1.msra.mxu0 0.0
    %1742 = vmatprep.subr.mxu0 0.0
    %1743 = vmatpush1.msra.mxu0 0.0
    %1744 = vmatprep.subr.mxu0 0.0
    %1745 = vmatpush1.msra.mxu0 0.0
    %1746 = vmatprep.subr.mxu0 0.0
    %1747 = vmatpush1.msra.mxu0 0.0
    %1748 = vmatprep.subr.mxu0 0.0
    %1749 = vmatpush1.msra.mxu0 0.0
    %1750 = vmatprep.subr.mxu0 0.0
    %1751 = vmatpush1.msra.mxu0 0.0
    %1752 = vmatprep.subr.mxu0 0.0
    %1753 = vmatpush1.msra.mxu0 0.0
    %1754 = vmatprep.subr.mxu0 0.0
    %1755 = vmatpush1.msra.mxu0 0.0
    %1756 = vmatprep.subr.mxu0 0.0
    %1757 = vmatpush1.msra.mxu0 0.0
    %1758 = vmatprep.subr.mxu0 0.0
    %1759 = vmatpush1.msra.mxu0 0.0
    %1760 = vmatprep.subr.mxu0 0.0
    %1761 = vmatpush1.msra.mxu0 0.0
    %1762 = vmatprep.subr.mxu0 0.0
    %1763 = vmatpush1.msra.mxu0 0.0
    %1764 = vmatprep.subr.mxu0 0.0
    %1765 = vmatpush1.msra.mxu0 0.0
    %1766 = vmatprep.subr.mxu0 0.0
    %1767 = vmatpush1.msra.mxu0 0.0
    %1768 = vmatprep.subr.mxu0 0.0
    %1769 = vmatpush1.msra.mxu0 0.0
    %1770 = vmatprep.subr.mxu0 0.0
    %1771 = vmatpush1.msra.mxu0 0.0
    %1772 = vmatprep.subr.mxu0 0.0
    %1773 = vmatpush1.msra.mxu0 0.0
    %1774 = vmatprep.mubr.f32.mxu0 0.0
    %1775 = vmatmul.mubr.f32.gmra.mrb[0].mxu0 %v1705
    %v1776 = vpop.f32.mrb[0].mxu0
    %v1777 = vadd.f32 %v1703, %v1776
    %v1778 = vpop.f32.mrb[0].mxu0
    %1779 = vmatprep.mubr.f32.mxu0 0.0
    %1780 = vmatmul.mubr.f32.gmra.mrb[0].mxu0 %v1708
    %v1781 = vpop.f32.mrb[0].mxu0
    %v1782 = vadd.f32 %v1703, %v1781
    %v1783 = vpop.f32.mrb[0].mxu0
    %1784 = vdwg.mxu0
    %v1785 = vmax.f32 %v1777, 0.0
    %v1786 = vmax.f32 %v1782, 0.0
    %v1787 = vld [vmem:[%s9] sm:$0xff]
    %v1788 = vld [vmem:[%s9 + $0x8] sm:$0xff]
    %v1789 = vld [vmem:[%s9 + $0x10] sm:$0xff]
    %v1790 = vld [vmem:[%s9 + $0x18] sm:$0xff]
    %v1791 = vld [vmem:[%s9 + $0x20] sm:$0xff]
    %v1792 = vld [vmem:[%s9 + $0x28] sm:$0xff]
    %v1793 = vld [vmem:[%s9 + $0x30] sm:$0xff]
    %v1794 = vld [vmem:[%s9 + $0x38] sm:$0xff]
    %v1796 = vsel %vm660, %v1785, 0
    %v1799 = vsel %vm660, %v1786, 0
    %1801 = vmatprep.subr.mxu0 0.0
    %1802 = vmatpush1.msra.mxu0 %v1787
    %1803 = vmatprep.subr.mxu0 0.0
    %1804 = vmatpush1.msra.mxu0 %v1788
    %1805 = vmatprep.subr.mxu0 0.0
    %1806 = vmatpush1.msra.mxu0 %v1789
    %1807 = vmatprep.subr.mxu0 0.0
    %1808 = vmatpush1.msra.mxu0 %v1790
    %1809 = vmatprep.subr.mxu0 0.0
    %1810 = vmatpush1.msra.mxu0 %v1791
    %1811 = vmatprep.subr.mxu0 0.0
    %1812 = vmatpush1.msra.mxu0 %v1792
    %1813 = vmatprep.subr.mxu0 0.0
    %1814 = vmatpush1.msra.mxu0 %v1793
    %1815 = vmatprep.subr.mxu0 0.0
    %1816 = vmatpush1.msra.mxu0 %v1794
    %1817 = vmatprep.subr.mxu0 0.0
    %1818 = vmatpush1.msra.mxu0 0.0
    %1819 = vmatprep.subr.mxu0 0.0
    %1820 = vmatpush1.msra.mxu0 0.0
    %1821 = vmatprep.subr.mxu0 0.0
    %1822 = vmatpush1.msra.mxu0 0.0
    %1823 = vmatprep.subr.mxu0 0.0
    %1824 = vmatpush1.msra.mxu0 0.0
    %1825 = vmatprep.subr.mxu0 0.0
    %1826 = vmatpush1.msra.mxu0 0.0
    %1827 = vmatprep.subr.mxu0 0.0
    %1828 = vmatpush1.msra.mxu0 0.0
    %1829 = vmatprep.subr.mxu0 0.0
    %1830 = vmatpush1.msra.mxu0 0.0
    %1831 = vmatprep.subr.mxu0 0.0
    %1832 = vmatpush1.msra.mxu0 0.0
    %1833 = vmatprep.subr.mxu0 0.0
    %1834 = vmatpush1.msra.mxu0 0.0
    %1835 = vmatprep.subr.mxu0 0.0
    %1836 = vmatpush1.msra.mxu0 0.0
    %1837 = vmatprep.subr.mxu0 0.0
    %1838 = vmatpush1.msra.mxu0 0.0
    %1839 = vmatprep.subr.mxu0 0.0
    %1840 = vmatpush1.msra.mxu0 0.0
    %1841 = vmatprep.subr.mxu0 0.0
    %1842 = vmatpush1.msra.mxu0 0.0
    %1843 = vmatprep.subr.mxu0 0.0
    %1844 = vmatpush1.msra.mxu0 0.0
    %1845 = vmatprep.subr.mxu0 0.0
    %1846 = vmatpush1.msra.mxu0 0.0
    %1847 = vmatprep.subr.mxu0 0.0
    %1848 = vmatpush1.msra.mxu0 0.0
    %1849 = vmatprep.subr.mxu0 0.0
    %1850 = vmatpush1.msra.mxu0 0.0
    %1851 = vmatprep.subr.mxu0 0.0
    %1852 = vmatpush1.msra.mxu0 0.0
    %1853 = vmatprep.subr.mxu0 0.0
    %1854 = vmatpush1.msra.mxu0 0.0
    %1855 = vmatprep.subr.mxu0 0.0
    %1856 = vmatpush1.msra.mxu0 0.0
    %1857 = vmatprep.subr.mxu0 0.0
    %1858 = vmatpush1.msra.mxu0 0.0
    %1859 = vmatprep.subr.mxu0 0.0
    %1860 = vmatpush1.msra.mxu0 0.0
    %1861 = vmatprep.subr.mxu0 0.0
    %1862 = vmatpush1.msra.mxu0 0.0
    %1863 = vmatprep.subr.mxu0 0.0
    %1864 = vmatpush1.msra.mxu0 0.0
    %1865 = vmatprep.mubr.f32.mxu0 0.0
    %1866 = vmatmul.mubr.f32.gmra.mrb[0].mxu0 %v1796
    %v1867 = vpop.f32.mrb[0].mxu0
    %v1868 = vadd.f32 0.0, %v1867
    %v1869 = vpop.f32.mrb[0].mxu0
    %1870 = vmatprep.mubr.f32.mxu0 0.0
    %1871 = vmatmul.mubr.f32.gmra.mrb[0].mxu0 %v1799
    %v1872 = vpop.f32.mrb[0].mxu0
    %v1873 = vadd.f32 0.0, %v1872
    %v1874 = vpop.f32.mrb[0].mxu0
    %1875 = vdwg.mxu0
    %v1876 = vadd.f32 %v1639, %v1868
    %v1877 = vadd.f32 %v1640, %v1873
    %v1878 = vld [vmem:[%s10 + $0x5] sm:$0x1]
    %v1879 = vlaneseq
    %v1880 = vshrl.u32 %v1879, 7
    %v1881 = vsub.s32 0, %v1880
    %v1882 = vrot.slane %v1878, %v1881
    %v1883 = vadd.f32 %v1876, %v1882
    %v1884 = vadd.f32 %v1877, %v1882
    %v1885 = vld [vmem:[%s10 + $0x12] sm:$0x1]
    %v1886 = vld [vmem:[%s10 + $0x13] sm:$0x1]
    %v1887 = vsel %vm163, %v1883, 0.0
    %1888 = vadd.xlane.f32.xlu0 %v1887
    %v1889 = vpop.xlane.xlu0 %1888
    %v1890 = vsel %vm163, %v1884, 0.0
    %1891 = vadd.xlane.f32.xlu0 %v1890
    %v1892 = vpop.xlane.xlu0 %1891
    %v1893 = vmul.f32 %v1889, %v331
    %v1894 = vmul.f32 %v1892, %v331
    %v1895 = vsub.f32 %v1883, %v1893
    %v1896 = vsub.f32 %v1884, %v1894
    %v1897 = vmul.f32 %v1895, %v1895
    %v1898 = vmul.f32 %v1896, %v1896
    %v1899 = vsel %vm163, %v1897, 0.0
    %1900 = vadd.xlane.f32.xlu0 %v1899
    %v1901 = vpop.xlane.xlu0 %1900
    %v1902 = vsel %vm163, %v1898, 0.0
    %1903 = vadd.xlane.f32.xlu0 %v1902
    %v1904 = vpop.xlane.xlu0 %1903
    %v1905 = vmul.f32 %v1901, 0.032258064
    %v1906 = vmul.f32 %v1904, 0.032258064
    %v1907 = vlaneseq
    %v1908 = vshrl.u32 %v1907, 7
    %v1909 = vsub.s32 0, %v1908
    %v1910 = vrot.slane %v1885, %v1909
    %v1911 = vmul.f32 %v1910, %v1895
    %v1912 = vmul.f32 %v1910, %v1896
    %v1913 = vrsqrt.pop %v1905
    %v1914 = vmul.f32 %v1905, %v1913
    %vm1915 = vcmp.eq.f32.partialorder %v1905, inf
    %v1916 = vsel %vm1915, %v1905, %v1914
    %vm1917 = vcmp.eq.f32.partialorder %v1905, 0.0
    %v1918 = vand.u32 %v1905, 2147483648
    %v1919 = vsel %vm1917, %v1918, %v1916
    %v1920 = vrsqrt.pop %v1906
    %v1921 = vmul.f32 %v1906, %v1920
    %vm1922 = vcmp.eq.f32.partialorder %v1906, inf
    %v1923 = vsel %vm1922, %v1906, %v1921
    %vm1924 = vcmp.eq.f32.partialorder %v1906, 0.0
    %v1925 = vand.u32 %v1906, 2147483648
    %v1926 = vsel %vm1924, %v1925, %v1923
    %v1927 = vadd.f32 %v1919, 1e-06
    %v1928 = vadd.f32 %v1926, 1e-06
    %v1929 = vrcp.pop %v1927
    %v1930 = vmul.f32 %v1911, %v1929
    %v1931 = vrcp.pop %v1928
    %v1932 = vmul.f32 %v1912, %v1931
    %v1933 = vlaneseq
    %v1934 = vshrl.u32 %v1933, 7
    %v1935 = vsub.s32 0, %v1934
    %v1936 = vrot.slane %v1886, %v1935
    %v1937 = vadd.f32 %v1930, %v1936
    %v1938 = vadd.f32 %v1932, %v1936
    %s1939 = scalar_lea.vmem [#allocation8], 32
    %v1940 = vld [vmem:[%s1939] sm:$0xff]
    %v1941 = vld [vmem:[%s1939 + $0x8] sm:$0xff]
    %v1942 = vld [vmem:[%s1939 + $0x10] sm:$0xff]
    %v1943 = vld [vmem:[%s1939 + $0x18] sm:$0xff]
    %v1944 = vld [vmem:[%s10 + $0xc] sm:$0x1]
    %v1945 = vlaneseq
    %v1946 = vshrl.u32 %v1945, 7
    %v1947 = vsub.s32 0, %v1946
    %v1948 = vrot.slane %v1944, %v1947
    %v1950 = vsel %vm163, %v1937, 0
    %v1953 = vsel %vm163, %v1938, 0
    %1955 = vmatprep.subr.mxu0 0.0
    %1956 = vmatpush1.msra.mxu0 %v1940
    %1957 = vmatprep.subr.mxu0 0.0
    %1958 = vmatpush1.msra.mxu0 %v1941
    %1959 = vmatprep.subr.mxu0 0.0
    %1960 = vmatpush1.msra.mxu0 %v1942
    %1961 = vmatprep.subr.mxu0 0.0
    %1962 = vmatpush1.msra.mxu0 %v1943
    %1963 = vmatprep.subr.mxu0 0.0
    %1964 = vmatpush1.msra.mxu0 0.0
    %1965 = vmatprep.subr.mxu0 0.0
    %1966 = vmatpush1.msra.mxu0 0.0
    %1967 = vmatprep.subr.mxu0 0.0
    %1968 = vmatpush1.msra.mxu0 0.0
    %1969 = vmatprep.subr.mxu0 0.0
    %1970 = vmatpush1.msra.mxu0 0.0
    %1971 = vmatprep.subr.mxu0 0.0
    %1972 = vmatpush1.msra.mxu0 0.0
    %1973 = vmatprep.subr.mxu0 0.0
    %1974 = vmatpush1.msra.mxu0 0.0
    %1975 = vmatprep.subr.mxu0 0.0
    %1976 = vmatpush1.msra.mxu0 0.0
    %1977 = vmatprep.subr.mxu0 0.0
    %1978 = vmatpush1.msra.mxu0 0.0
    %1979 = vmatprep.subr.mxu0 0.0
    %1980 = vmatpush1.msra.mxu0 0.0
    %1981 = vmatprep.subr.mxu0 0.0
    %1982 = vmatpush1.msra.mxu0 0.0
    %1983 = vmatprep.subr.mxu0 0.0
    %1984 = vmatpush1.msra.mxu0 0.0
    %1985 = vmatprep.subr.mxu0 0.0
    %1986 = vmatpush1.msra.mxu0 0.0
    %1987 = vmatprep.subr.mxu0 0.0
    %1988 = vmatpush1.msra.mxu0 0.0
    %1989 = vmatprep.subr.mxu0 0.0
    %1990 = vmatpush1.msra.mxu0 0.0
    %1991 = vmatprep.subr.mxu0 0.0
    %1992 = vmatpush1.msra.mxu0 0.0
    %1993 = vmatprep.subr.mxu0 0.0
    %1994 = vmatpush1.msra.mxu0 0.0
    %1995 = vmatprep.subr.mxu0 0.0
    %1996 = vmatpush1.msra.mxu0 0.0
    %1997 = vmatprep.subr.mxu0 0.0
    %1998 = vmatpush1.msra.mxu0 0.0
    %1999 = vmatprep.subr.mxu0 0.0
    %2000 = vmatpush1.msra.mxu0 0.0
    %2001 = vmatprep.subr.mxu0 0.0
    %2002 = vmatpush1.msra.mxu0 0.0
    %2003 = vmatprep.subr.mxu0 0.0
    %2004 = vmatpush1.msra.mxu0 0.0
    %2005 = vmatprep.subr.mxu0 0.0
    %2006 = vmatpush1.msra.mxu0 0.0
    %2007 = vmatprep.subr.mxu0 0.0
    %2008 = vmatpush1.msra.mxu0 0.0
    %2009 = vmatprep.subr.mxu0 0.0
    %2010 = vmatpush1.msra.mxu0 0.0
    %2011 = vmatprep.subr.mxu0 0.0
    %2012 = vmatpush1.msra.mxu0 0.0
    %2013 = vmatprep.subr.mxu0 0.0
    %2014 = vmatpush1.msra.mxu0 0.0
    %2015 = vmatprep.subr.mxu0 0.0
    %2016 = vmatpush1.msra.mxu0 0.0
    %2017 = vmatprep.subr.mxu0 0.0
    %2018 = vmatpush1.msra.mxu0 0.0
    %2019 = vmatprep.mubr.f32.mxu0 0.0
    %2020 = vmatmul.mubr.f32.gmra.mrb[0].mxu0 %v1950
    %v2021 = vpop.f32.mrb[0].mxu0
    %v2022 = vadd.f32 %v1948, %v2021
    %v2023 = vpop.f32.mrb[0].mxu0
    %2024 = vmatprep.mubr.f32.mxu0 0.0
    %2025 = vmatmul.mubr.f32.gmra.mrb[0].mxu0 %v1953
    %v2026 = vpop.f32.mrb[0].mxu0
    %v2027 = vadd.f32 %v1948, %v2026
    %v2028 = vpop.f32.mrb[0].mxu0
    %2029 = vdwg.mxu0
    %2032 = vrot.lane.b32.xlu0 %v2022, 120
    %v2033 = vpop.permute.xlu0 %2032
    %2034 = vrot.lane.b32.xlu0 %v2027, 120
    %v2035 = vpop.permute.xlu0 %2034
    %2036 = vrot.lane.b32.xlu0 %v2022, 112
    %v2037 = vpop.permute.xlu0 %2036
    %2038 = vrot.lane.b32.xlu0 %v2027, 112
    %v2039 = vpop.permute.xlu0 %2038
    %2040 = vrot.lane.b32.xlu0 %v2022, 104
    %v2041 = vpop.permute.xlu0 %2040
    %2042 = vrot.lane.b32.xlu0 %v2027, 104
    %v2043 = vpop.permute.xlu0 %2042
    %2044 = vrot.lane.b32.xlu0 %v2022, 96
    %v2045 = vpop.permute.xlu0 %2044
    %2046 = vrot.lane.b32.xlu0 %v2027, 96
    %v2047 = vpop.permute.xlu0 %2046
    %2048 = vrot.lane.b32.xlu0 %v2022, 88
    %v2049 = vpop.permute.xlu0 %2048
    %2050 = vrot.lane.b32.xlu0 %v2027, 88
    %v2051 = vpop.permute.xlu0 %2050
    %2052 = vrot.lane.b32.xlu0 %v2022, 80
    %v2053 = vpop.permute.xlu0 %2052
    %2054 = vrot.lane.b32.xlu0 %v2027, 80
    %v2055 = vpop.permute.xlu0 %2054
    %2056 = vrot.lane.b32.xlu0 %v2022, 72
    %v2057 = vpop.permute.xlu0 %2056
    %2058 = vrot.lane.b32.xlu0 %v2027, 72
    %v2059 = vpop.permute.xlu0 %2058
    %2060 = vrot.lane.b32.xlu0 %v2022, 64
    %v2061 = vpop.permute.xlu0 %2060
    %2062 = vrot.lane.b32.xlu0 %v2027, 64
    %v2063 = vpop.permute.xlu0 %2062
    %2066 = vrot.lane.b32.xlu0 %v2022, 56
    %v2067 = vpop.permute.xlu0 %2066
    %2068 = vrot.lane.b32.xlu0 %v2027, 56
    %v2069 = vpop.permute.xlu0 %2068
    %2072 = vrot.lane.b32.xlu0 %v2022, 48
    %v2073 = vpop.permute.xlu0 %2072
    %2074 = vrot.lane.b32.xlu0 %v2027, 48
    %v2075 = vpop.permute.xlu0 %2074
    %2078 = vrot.lane.b32.xlu0 %v2022, 40
    %v2079 = vpop.permute.xlu0 %2078
    %2080 = vrot.lane.b32.xlu0 %v2027, 40
    %v2081 = vpop.permute.xlu0 %2080
    %v2084 = vsel %vm522, %v2022, 0
    %v2086 = vsel %vm522, %v2027, 0
    %v2088 = vsel %vm522, %v2033, 0
    %v2090 = vsel %vm522, %v2035, 0
    %v2092 = vsel %vm522, %v2037, 0
    %v2094 = vsel %vm522, %v2039, 0
    %v2096 = vsel %vm522, %v2041, 0
    %v2098 = vsel %vm522, %v2043, 0
    %v2100 = vsel %vm522, %v2045, 0
    %v2102 = vsel %vm522, %v2047, 0
    %v2104 = vsel %vm522, %v2049, 0
    %v2106 = vsel %vm522, %v2051, 0
    %v2108 = vsel %vm522, %v2053, 0
    %v2110 = vsel %vm522, %v2055, 0
    %v2112 = vsel %vm522, %v2057, 0
    %v2114 = vsel %vm522, %v2059, 0
    %2116 = vmatprep.subr.mxu0 0.0
    %2117 = vmatpush1.xpose.msra.mxu0 %v2100
    %2118 = vmatprep.subr.mxu0 0.0
    %2119 = vmatpush1.xpose.msra.mxu0 %v2102
    %2120 = vmatprep.subr.mxu0 0.0
    %2121 = vmatpush1.xpose.msra.mxu0 %v2104
    %2122 = vmatprep.subr.mxu0 0.0
    %2123 = vmatpush1.xpose.msra.mxu0 %v2106
    %2124 = vmatprep.subr.mxu0 0.0
    %2125 = vmatpush1.xpose.msra.mxu0 %v2108
    %2126 = vmatprep.subr.mxu0 0.0
    %2127 = vmatpush1.xpose.msra.mxu0 %v2110
    %2128 = vmatprep.subr.mxu0 0.0
    %2129 = vmatpush1.xpose.msra.mxu0 %v2112
    %2130 = vmatprep.subr.mxu0 0.0
    %2131 = vmatpush1.xpose.msra.mxu0 %v2114
    %2132 = vmatprep.subr.mxu0 0.0
    %2133 = vmatpush1.xpose.msra.mxu0 0.0
    %2134 = vmatprep.subr.mxu0 0.0
    %2135 = vmatpush1.xpose.msra.mxu0 0.0
    %2136 = vmatprep.subr.mxu0 0.0
    %2137 = vmatpush1.xpose.msra.mxu0 0.0
    %2138 = vmatprep.subr.mxu0 0.0
    %2139 = vmatpush1.xpose.msra.mxu0 0.0
    %2140 = vmatprep.subr.mxu0 0.0
    %2141 = vmatpush1.xpose.msra.mxu0 0.0
    %2142 = vmatprep.subr.mxu0 0.0
    %2143 = vmatpush1.xpose.msra.mxu0 0.0
    %2144 = vmatprep.subr.mxu0 0.0
    %2145 = vmatpush1.xpose.msra.mxu0 0.0
    %2146 = vmatprep.subr.mxu0 0.0
    %2147 = vmatpush1.xpose.msra.mxu0 0.0
    %2148 = vmatprep.subr.mxu0 0.0
    %2149 = vmatpush1.xpose.msra.mxu0 0.0
    %2150 = vmatprep.subr.mxu0 0.0
    %2151 = vmatpush1.xpose.msra.mxu0 0.0
    %2152 = vmatprep.subr.mxu0 0.0
    %2153 = vmatpush1.xpose.msra.mxu0 0.0
    %2154 = vmatprep.subr.mxu0 0.0
    %2155 = vmatpush1.xpose.msra.mxu0 0.0
    %2156 = vmatprep.subr.mxu0 0.0
    %2157 = vmatpush1.xpose.msra.mxu0 0.0
    %2158 = vmatprep.subr.mxu0 0.0
    %2159 = vmatpush1.xpose.msra.mxu0 0.0
    %2160 = vmatprep.subr.mxu0 0.0
    %2161 = vmatpush1.xpose.msra.mxu0 0.0
    %2162 = vmatprep.subr.mxu0 0.0
    %2163 = vmatpush1.xpose.msra.mxu0 0.0
    %2164 = vmatprep.subr.mxu0 0.0
    %2165 = vmatpush1.xpose.msra.mxu0 0.0
    %2166 = vmatprep.subr.mxu0 0.0
    %2167 = vmatpush1.xpose.msra.mxu0 0.0
    %2168 = vmatprep.subr.mxu0 0.0
    %2169 = vmatpush1.xpose.msra.mxu0 0.0
    %2170 = vmatprep.subr.mxu0 0.0
    %2171 = vmatpush1.xpose.msra.mxu0 0.0
    %2172 = vmatprep.subr.mxu0 0.0
    %2173 = vmatpush1.xpose.msra.mxu0 0.0
    %2174 = vmatprep.subr.mxu0 0.0
    %2175 = vmatpush1.xpose.msra.mxu0 0.0
    %2176 = vmatprep.subr.mxu0 0.0
    %2177 = vmatpush1.xpose.msra.mxu0 0.0
    %2178 = vmatprep.subr.mxu0 0.0
    %2179 = vmatpush1.xpose.msra.mxu0 0.0
    %2180 = vmatprep.mubr.f32.mxu0 0.0
    %2181 = vmatmul.mubr.f32.gmra.mrb[0].mxu0 %v2084
    %v2182 = vpop.f32.mrb[0].mxu0
    %v2183 = vadd.f32 %v138, %v2182
    %v2184 = vpop.f32.mrb[0].mxu0
    %2185 = vmatprep.mubr.f32.mxu0 0.0
    %2186 = vmatmul.mubr.f32.gmra.mrb[0].mxu0 %v2086
    %v2187 = vpop.f32.mrb[0].mxu0
    %v2188 = vadd.f32 %v139, %v2187
    %v2189 = vpop.f32.mrb[0].mxu0
    %2190 = vmatprep.mubr.f32.mxu0 0.0
    %2191 = vmatmul.mubr.f32.gmra.mrb[0].mxu0 %v2088
    %v2192 = vpop.f32.mrb[0].mxu0
    %v2193 = vadd.f32 %v140, %v2192
    %v2194 = vpop.f32.mrb[0].mxu0
    %2195 = vmatprep.mubr.f32.mxu0 0.0
    %2196 = vmatmul.mubr.f32.gmra.mrb[0].mxu0 %v2090
    %v2197 = vpop.f32.mrb[0].mxu0
    %v2198 = vadd.f32 %v141, %v2197
    %v2199 = vpop.f32.mrb[0].mxu0
    %2200 = vmatprep.mubr.f32.mxu0 0.0
    %2201 = vmatmul.mubr.f32.gmra.mrb[0].mxu0 %v2092
    %v2202 = vpop.f32.mrb[0].mxu0
    %v2203 = vadd.f32 %v142, %v2202
    %v2204 = vpop.f32.mrb[0].mxu0
    %2205 = vmatprep.mubr.f32.mxu0 0.0
    %2206 = vmatmul.mubr.f32.gmra.mrb[0].mxu0 %v2094
    %v2207 = vpop.f32.mrb[0].mxu0
    %v2208 = vadd.f32 %v143, %v2207
    %v2209 = vpop.f32.mrb[0].mxu0
    %2210 = vmatprep.mubr.f32.mxu0 0.0
    %2211 = vmatmul.mubr.f32.gmra.mrb[0].mxu0 %v2096
    %v2212 = vpop.f32.mrb[0].mxu0
    %v2213 = vadd.f32 %v144, %v2212
    %v2214 = vpop.f32.mrb[0].mxu0
    %2215 = vmatprep.mubr.f32.mxu0 0.0
    %2216 = vmatmul.mubr.f32.gmra.mrb[0].mxu0 %v2098
    %v2217 = vpop.f32.mrb[0].mxu0
    %v2218 = vadd.f32 %v145, %v2217
    %v2219 = vpop.f32.mrb[0].mxu0
    %2220 = vdwg.mxu0
    %v2221 = vsel %vm660, %v2183, -inf
    %2222 = vmax.xlane.f32.xlu0 %v2221
    %v2223 = vpop.xlane.xlu0 %2222
    %v2224 = vsel %vm660, %v2188, -inf
    %2225 = vmax.xlane.f32.xlu0 %v2224
    %v2226 = vpop.xlane.xlu0 %2225
    %v2227 = vsel %vm660, %v2193, -inf
    %2228 = vmax.xlane.f32.xlu0 %v2227
    %v2229 = vpop.xlane.xlu0 %2228
    %v2230 = vsel %vm660, %v2198, -inf
    %2231 = vmax.xlane.f32.xlu0 %v2230
    %v2232 = vpop.xlane.xlu0 %2231
    %v2233 = vsel %vm660, %v2203, -inf
    %2234 = vmax.xlane.f32.xlu0 %v2233
    %v2235 = vpop.xlane.xlu0 %2234
    %v2236 = vsel %vm660, %v2208, -inf
    %2237 = vmax.xlane.f32.xlu0 %v2236
    %v2238 = vpop.xlane.xlu0 %2237
    %v2239 = vsel %vm660, %v2213, -inf
    %2240 = vmax.xlane.f32.xlu0 %v2239
    %v2241 = vpop.xlane.xlu0 %2240
    %v2242 = vsel %vm660, %v2218, -inf
    %2243 = vmax.xlane.f32.xlu0 %v2242
    %v2244 = vpop.xlane.xlu0 %2243
    %v2245 = vsub.f32 %v2183, %v2223
    %v2246 = vsub.f32 %v2188, %v2226
    %v2247 = vsub.f32 %v2193, %v2229
    %v2248 = vsub.f32 %v2198, %v2232
    %v2249 = vsub.f32 %v2203, %v2235
    %v2250 = vsub.f32 %v2208, %v2238
    %v2251 = vsub.f32 %v2213, %v2241
    %v2252 = vsub.f32 %v2218, %v2244
    %v2253 = vmul.f32 %v2245, 1.442695
    %v2254 = vpow.pop %v2253
    %v2255 = vmul.f32 %v2246, 1.442695
    %v2256 = vpow.pop %v2255
    %v2257 = vmul.f32 %v2247, 1.442695
    %v2258 = vpow.pop %v2257
    %v2259 = vmul.f32 %v2248, 1.442695
    %v2260 = vpow.pop %v2259
    %v2261 = vmul.f32 %v2249, 1.442695
    %v2262 = vpow.pop %v2261
    %v2263 = vmul.f32 %v2250, 1.442695
    %v2264 = vpow.pop %v2263
    %v2265 = vmul.f32 %v2251, 1.442695
    %v2266 = vpow.pop %v2265
    %v2267 = vmul.f32 %v2252, 1.442695
    %v2268 = vpow.pop %v2267
    %v2269 = vsel %vm660, %v2254, 0.0
    %2270 = vadd.xlane.f32.xlu0 %v2269
    %v2271 = vpop.xlane.xlu0 %2270
    %v2272 = vsel %vm660, %v2256, 0.0
    %2273 = vadd.xlane.f32.xlu0 %v2272
    %v2274 = vpop.xlane.xlu0 %2273
    %v2275 = vsel %vm660, %v2258, 0.0
    %2276 = vadd.xlane.f32.xlu0 %v2275
    %v2277 = vpop.xlane.xlu0 %2276
    %v2278 = vsel %vm660, %v2260, 0.0
    %2279 = vadd.xlane.f32.xlu0 %v2278
    %v2280 = vpop.xlane.xlu0 %2279
    %v2281 = vsel %vm660, %v2262, 0.0
    %2282 = vadd.xlane.f32.xlu0 %v2281
    %v2283 = vpop.xlane.xlu0 %2282
    %v2284 = vsel %vm660, %v2264, 0.0
    %2285 = vadd.xlane.f32.xlu0 %v2284
    %v2286 = vpop.xlane.xlu0 %2285
    %v2287 = vsel %vm660, %v2266, 0.0
    %2288 = vadd.xlane.f32.xlu0 %v2287
    %v2289 = vpop.xlane.xlu0 %2288
    %v2290 = vsel %vm660, %v2268, 0.0
    %2291 = vadd.xlane.f32.xlu0 %v2290
    %v2292 = vpop.xlane.xlu0 %2291
    %v2293 = vrcp.pop %v2271
    %v2294 = vmul.f32 %v2254, %v2293
    %v2295 = vrcp.pop %v2274
    %v2296 = vmul.f32 %v2256, %v2295
    %v2297 = vrcp.pop %v2277
    %v2298 = vmul.f32 %v2258, %v2297
    %v2299 = vrcp.pop %v2280
    %v2300 = vmul.f32 %v2260, %v2299
    %v2301 = vrcp.pop %v2283
    %v2302 = vmul.f32 %v2262, %v2301
    %v2303 = vrcp.pop %v2286
    %v2304 = vmul.f32 %v2264, %v2303
    %v2305 = vrcp.pop %v2289
    %v2306 = vmul.f32 %v2266, %v2305
    %v2307 = vrcp.pop %v2292
    %v2308 = vmul.f32 %v2268, %v2307
    %v2310 = vsel %vm660, %v2294, 0
    %v2313 = vsel %vm660, %v2296, 0
    %v2316 = vsel %vm660, %v2298, 0
    %v2319 = vsel %vm660, %v2300, 0
    %v2322 = vsel %vm660, %v2302, 0
    %v2325 = vsel %vm660, %v2304, 0
    %v2328 = vsel %vm660, %v2306, 0
    %v2331 = vsel %vm660, %v2308, 0
    %2333 = vmatprep.subr.mxu0 0.0
    %2334 = vmatpush1.msra.mxu0 %v2061
    %2335 = vmatprep.subr.mxu0 0.0
    %2336 = vmatpush1.msra.mxu0 %v2063
    %2337 = vmatprep.subr.mxu0 0.0
    %2338 = vmatpush1.msra.mxu0 %v2067
    %2339 = vmatprep.subr.mxu0 0.0
    %2340 = vmatpush1.msra.mxu0 %v2069
    %2341 = vmatprep.subr.mxu0 0.0
    %2342 = vmatpush1.msra.mxu0 %v2073
    %2343 = vmatprep.subr.mxu0 0.0
    %2344 = vmatpush1.msra.mxu0 %v2075
    %2345 = vmatprep.subr.mxu0 0.0
    %2346 = vmatpush1.msra.mxu0 %v2079
    %2347 = vmatprep.subr.mxu0 0.0
    %2348 = vmatpush1.msra.mxu0 %v2081
    %2349 = vmatprep.subr.mxu0 0.0
    %2350 = vmatpush1.msra.mxu0 0.0
    %2351 = vmatprep.subr.mxu0 0.0
    %2352 = vmatpush1.msra.mxu0 0.0
    %2353 = vmatprep.subr.mxu0 0.0
    %2354 = vmatpush1.msra.mxu0 0.0
    %2355 = vmatprep.subr.mxu0 0.0
    %2356 = vmatpush1.msra.mxu0 0.0
    %2357 = vmatprep.subr.mxu0 0.0
    %2358 = vmatpush1.msra.mxu0 0.0
    %2359 = vmatprep.subr.mxu0 0.0
    %2360 = vmatpush1.msra.mxu0 0.0
    %2361 = vmatprep.subr.mxu0 0.0
    %2362 = vmatpush1.msra.mxu0 0.0
    %2363 = vmatprep.subr.mxu0 0.0
    %2364 = vmatpush1.msra.mxu0 0.0
    %2365 = vmatprep.subr.mxu0 0.0
    %2366 = vmatpush1.msra.mxu0 0.0
    %2367 = vmatprep.subr.mxu0 0.0
    %2368 = vmatpush1.msra.mxu0 0.0
    %2369 = vmatprep.subr.mxu0 0.0
    %2370 = vmatpush1.msra.mxu0 0.0
    %2371 = vmatprep.subr.mxu0 0.0
    %2372 = vmatpush1.msra.mxu0 0.0
    %2373 = vmatprep.subr.mxu0 0.0
    %2374 = vmatpush1.msra.mxu0 0.0
    %2375 = vmatprep.subr.mxu0 0.0
    %2376 = vmatpush1.msra.mxu0 0.0
    %2377 = vmatprep.subr.mxu0 0.0
    %2378 = vmatpush1.msra.mxu0 0.0
    %2379 = vmatprep.subr.mxu0 0.0
    %2380 = vmatpush1.msra.mxu0 0.0
    %2381 = vmatprep.subr.mxu0 0.0
    %2382 = vmatpush1.msra.mxu0 0.0
    %2383 = vmatprep.subr.mxu0 0.0
    %2384 = vmatpush1.msra.mxu0 0.0
    %2385 = vmatprep.subr.mxu0 0.0
    %2386 = vmatpush1.msra.mxu0 0.0
    %2387 = vmatprep.subr.mxu0 0.0
    %2388 = vmatpush1.msra.mxu0 0.0
    %2389 = vmatprep.subr.mxu0 0.0
    %2390 = vmatpush1.msra.mxu0 0.0
    %2391 = vmatprep.subr.mxu0 0.0
    %2392 = vmatpush1.msra.mxu0 0.0
    %2393 = vmatprep.subr.mxu0 0.0
    %2394 = vmatpush1.msra.mxu0 0.0
    %2395 = vmatprep.subr.mxu0 0.0
    %2396 = vmatpush1.msra.mxu0 0.0
    %2397 = vmatprep.mubr.f32.mxu0 0.0
    %2398 = vmatmul.mubr.f32.gmra.mrb[0].mxu0 %v2310
    %v2399 = vpop.f32.mrb[0].mxu0
    %v2400 = vadd.f32 0.0, %v2399
    %v2401 = vpop.f32.mrb[0].mxu0
    %2402 = vmatprep.mubr.f32.mxu0 0.0
    %2403 = vmatmul.mubr.f32.gmra.mrb[0].mxu0 %v2313
    %v2404 = vpop.f32.mrb[0].mxu0
    %v2405 = vadd.f32 0.0, %v2404
    %v2406 = vpop.f32.mrb[0].mxu0
    %2407 = vmatprep.mubr.f32.mxu0 0.0
    %2408 = vmatmul.mubr.f32.gmra.mrb[0].mxu0 %v2316
    %v2409 = vpop.f32.mrb[0].mxu0
    %v2410 = vadd.f32 0.0, %v2409
    %v2411 = vpop.f32.mrb[0].mxu0
    %2412 = vmatprep.mubr.f32.mxu0 0.0
    %2413 = vmatmul.mubr.f32.gmra.mrb[0].mxu0 %v2319
    %v2414 = vpop.f32.mrb[0].mxu0
    %v2415 = vadd.f32 0.0, %v2414
    %v2416 = vpop.f32.mrb[0].mxu0
    %2417 = vmatprep.mubr.f32.mxu0 0.0
    %2418 = vmatmul.mubr.f32.gmra.mrb[0].mxu0 %v2322
    %v2419 = vpop.f32.mrb[0].mxu0
    %v2420 = vadd.f32 0.0, %v2419
    %v2421 = vpop.f32.mrb[0].mxu0
    %2422 = vmatprep.mubr.f32.mxu0 0.0
    %2423 = vmatmul.mubr.f32.gmra.mrb[0].mxu0 %v2325
    %v2424 = vpop.f32.mrb[0].mxu0
    %v2425 = vadd.f32 0.0, %v2424
    %v2426 = vpop.f32.mrb[0].mxu0
    %2427 = vmatprep.mubr.f32.mxu0 0.0
    %2428 = vmatmul.mubr.f32.gmra.mrb[0].mxu0 %v2328
    %v2429 = vpop.f32.mrb[0].mxu0
    %v2430 = vadd.f32 0.0, %v2429
    %v2431 = vpop.f32.mrb[0].mxu0
    %2432 = vmatprep.mubr.f32.mxu0 0.0
    %2433 = vmatmul.mubr.f32.gmra.mrb[0].mxu0 %v2331
    %v2434 = vpop.f32.mrb[0].mxu0
    %v2435 = vadd.f32 0.0, %v2434
    %v2436 = vpop.f32.mrb[0].mxu0
    %2437 = vdwg.mxu0
    %2440 = vrot.lane.b32.xlu0 %v2410, 8
    %v2441 = vpop.permute.xlu0 %2440
    %2442 = vrot.lane.b32.xlu0 %v2415, 8
    %v2443 = vpop.permute.xlu0 %2442
    %2448 = vrot.lane.b32.xlu0 %v2420, 16
    %v2449 = vpop.permute.xlu0 %2448
    %2450 = vrot.lane.b32.xlu0 %v2425, 16
    %v2451 = vpop.permute.xlu0 %2450
    %2456 = vrot.lane.b32.xlu0 %v2430, 24
    %v2457 = vpop.permute.xlu0 %2456
    %2458 = vrot.lane.b32.xlu0 %v2435, 24
    %v2459 = vpop.permute.xlu0 %2458
    %v2462 = vsel %vm522, %v2400, %v2441
    %v2463 = vsel %vm522, %v2405, %v2443
    %v2464 = vsel %vm904, %v2462, %v2449
    %v2465 = vsel %vm904, %v2463, %v2451
    %v2466 = vsel %vm907, %v2464, %v2457
    %v2467 = vsel %vm907, %v2465, %v2459
    %s2468 = scalar_lea.vmem %s7, 64
    %v2469 = vld [vmem:[%s2468] sm:$0xff]
    %v2470 = vld [vmem:[%s2468 + $0x8] sm:$0xff]
    %v2471 = vld [vmem:[%s2468 + $0x10] sm:$0xff]
    %v2472 = vld [vmem:[%s2468 + $0x18] sm:$0xff]
    %v2474 = vsel %vm163, %v2466, 0
    %v2477 = vsel %vm163, %v2467, 0
    %2479 = vmatprep.subr.mxu0 0.0
    %2480 = vmatpush1.msra.mxu0 %v2469
    %2481 = vmatprep.subr.mxu0 0.0
    %2482 = vmatpush1.msra.mxu0 %v2470
    %2483 = vmatprep.subr.mxu0 0.0
    %2484 = vmatpush1.msra.mxu0 %v2471
    %2485 = vmatprep.subr.mxu0 0.0
    %2486 = vmatpush1.msra.mxu0 %v2472
    %2487 = vmatprep.subr.mxu0 0.0
    %2488 = vmatpush1.msra.mxu0 0.0
    %2489 = vmatprep.subr.mxu0 0.0
    %2490 = vmatpush1.msra.mxu0 0.0
    %2491 = vmatprep.subr.mxu0 0.0
    %2492 = vmatpush1.msra.mxu0 0.0
    %2493 = vmatprep.subr.mxu0 0.0
    %2494 = vmatpush1.msra.mxu0 0.0
    %2495 = vmatprep.subr.mxu0 0.0
    %2496 = vmatpush1.msra.mxu0 0.0
    %2497 = vmatprep.subr.mxu0 0.0
    %2498 = vmatpush1.msra.mxu0 0.0
    %2499 = vmatprep.subr.mxu0 0.0
    %2500 = vmatpush1.msra.mxu0 0.0
    %2501 = vmatprep.subr.mxu0 0.0
    %2502 = vmatpush1.msra.mxu0 0.0
    %2503 = vmatprep.subr.mxu0 0.0
    %2504 = vmatpush1.msra.mxu0 0.0
    %2505 = vmatprep.subr.mxu0 0.0
    %2506 = vmatpush1.msra.mxu0 0.0
    %2507 = vmatprep.subr.mxu0 0.0
    %2508 = vmatpush1.msra.mxu0 0.0
    %2509 = vmatprep.subr.mxu0 0.0
    %2510 = vmatpush1.msra.mxu0 0.0
    %2511 = vmatprep.subr.mxu0 0.0
    %2512 = vmatpush1.msra.mxu0 0.0
    %2513 = vmatprep.subr.mxu0 0.0
    %2514 = vmatpush1.msra.mxu0 0.0
    %2515 = vmatprep.subr.mxu0 0.0
    %2516 = vmatpush1.msra.mxu0 0.0
    %2517 = vmatprep.subr.mxu0 0.0
    %2518 = vmatpush1.msra.mxu0 0.0
    %2519 = vmatprep.subr.mxu0 0.0
    %2520 = vmatpush1.msra.mxu0 0.0
    %2521 = vmatprep.subr.mxu0 0.0
    %2522 = vmatpush1.msra.mxu0 0.0
    %2523 = vmatprep.subr.mxu0 0.0
    %2524 = vmatpush1.msra.mxu0 0.0
    %2525 = vmatprep.subr.mxu0 0.0
    %2526 = vmatpush1.msra.mxu0 0.0
    %2527 = vmatprep.subr.mxu0 0.0
    %2528 = vmatpush1.msra.mxu0 0.0
    %2529 = vmatprep.subr.mxu0 0.0
    %2530 = vmatpush1.msra.mxu0 0.0
    %2531 = vmatprep.subr.mxu0 0.0
    %2532 = vmatpush1.msra.mxu0 0.0
    %2533 = vmatprep.subr.mxu0 0.0
    %2534 = vmatpush1.msra.mxu0 0.0
    %2535 = vmatprep.subr.mxu0 0.0
    %2536 = vmatpush1.msra.mxu0 0.0
    %2537 = vmatprep.subr.mxu0 0.0
    %2538 = vmatpush1.msra.mxu0 0.0
    %2539 = vmatprep.subr.mxu0 0.0
    %2540 = vmatpush1.msra.mxu0 0.0
    %2541 = vmatprep.subr.mxu0 0.0
    %2542 = vmatpush1.msra.mxu0 0.0
    %2543 = vmatprep.mubr.f32.mxu0 0.0
    %2544 = vmatmul.mubr.f32.gmra.mrb[0].mxu0 %v2474
    %v2545 = vpop.f32.mrb[0].mxu0
    %v2546 = vadd.f32 0.0, %v2545
    %v2547 = vpop.f32.mrb[0].mxu0
    %2548 = vmatprep.mubr.f32.mxu0 0.0
    %2549 = vmatmul.mubr.f32.gmra.mrb[0].mxu0 %v2477
    %v2550 = vpop.f32.mrb[0].mxu0
    %v2551 = vadd.f32 0.0, %v2550
    %v2552 = vpop.f32.mrb[0].mxu0
    %2553 = vdwg.mxu0
    %v2554 = vadd.f32 %v1883, %v2546
    %v2555 = vadd.f32 %v1884, %v2551
    %v2556 = vld [vmem:[%s10 + $0xe] sm:$0x1]
    %v2557 = vlaneseq
    %v2558 = vshrl.u32 %v2557, 7
    %v2559 = vsub.s32 0, %v2558
    %v2560 = vrot.slane %v2556, %v2559
    %v2561 = vadd.f32 %v2554, %v2560
    %v2562 = vadd.f32 %v2555, %v2560
    %v2563 = vld [vmem:[%s10 + $0x14] sm:$0x1]
    %v2564 = vld [vmem:[%s10 + $0x15] sm:$0x1]
    %v2565 = vsel %vm163, %v2561, 0.0
    %2566 = vadd.xlane.f32.xlu0 %v2565
    %v2567 = vpop.xlane.xlu0 %2566
    %v2568 = vsel %vm163, %v2562, 0.0
    %2569 = vadd.xlane.f32.xlu0 %v2568
    %v2570 = vpop.xlane.xlu0 %2569
    %v2571 = vmul.f32 %v2567, %v331
    %v2572 = vmul.f32 %v2570, %v331
    %v2573 = vsub.f32 %v2561, %v2571
    %v2574 = vsub.f32 %v2562, %v2572
    %v2575 = vmul.f32 %v2573, %v2573
    %v2576 = vmul.f32 %v2574, %v2574
    %v2577 = vsel %vm163, %v2575, 0.0
    %2578 = vadd.xlane.f32.xlu0 %v2577
    %v2579 = vpop.xlane.xlu0 %2578
    %v2580 = vsel %vm163, %v2576, 0.0
    %2581 = vadd.xlane.f32.xlu0 %v2580
    %v2582 = vpop.xlane.xlu0 %2581
    %v2583 = vmul.f32 %v2579, 0.032258064
    %v2584 = vmul.f32 %v2582, 0.032258064
    %v2585 = vlaneseq
    %v2586 = vshrl.u32 %v2585, 7
    %v2587 = vsub.s32 0, %v2586
    %v2588 = vrot.slane %v2563, %v2587
    %v2589 = vmul.f32 %v2588, %v2573
    %v2590 = vmul.f32 %v2588, %v2574
    %v2591 = vrsqrt.pop %v2583
    %v2592 = vmul.f32 %v2583, %v2591
    %vm2593 = vcmp.eq.f32.partialorder %v2583, inf
    %v2594 = vsel %vm2593, %v2583, %v2592
    %vm2595 = vcmp.eq.f32.partialorder %v2583, 0.0
    %v2596 = vand.u32 %v2583, 2147483648
    %v2597 = vsel %vm2595, %v2596, %v2594
    %v2598 = vrsqrt.pop %v2584
    %v2599 = vmul.f32 %v2584, %v2598
    %vm2600 = vcmp.eq.f32.partialorder %v2584, inf
    %v2601 = vsel %vm2600, %v2584, %v2599
    %vm2602 = vcmp.eq.f32.partialorder %v2584, 0.0
    %v2603 = vand.u32 %v2584, 2147483648
    %v2604 = vsel %vm2602, %v2603, %v2601
    %v2605 = vadd.f32 %v2597, 1e-06
    %v2606 = vadd.f32 %v2604, 1e-06
    %v2607 = vrcp.pop %v2605
    %v2608 = vmul.f32 %v2589, %v2607
    %v2609 = vrcp.pop %v2606
    %v2610 = vmul.f32 %v2590, %v2609
    %v2611 = vlaneseq
    %v2612 = vshrl.u32 %v2611, 7
    %v2613 = vsub.s32 0, %v2612
    %v2614 = vrot.slane %v2564, %v2613
    %v2615 = vadd.f32 %v2608, %v2614
    %v2616 = vadd.f32 %v2610, %v2614
    %s2617 = scalar_lea.vmem [#allocation10], 32
    %v2618 = vld [vmem:[%s2617] sm:$0xff]
    %v2619 = vld [vmem:[%s2617 + $0x8] sm:$0xff]
    %v2620 = vld [vmem:[%s2617 + $0x10] sm:$0xff]
    %v2621 = vld [vmem:[%s2617 + $0x18] sm:$0xff]
    %v2622 = vld [vmem:[%s10 + $0xd] sm:$0x1]
    %v2623 = vlaneseq
    %v2624 = vshrl.u32 %v2623, 7
    %v2625 = vsub.s32 0, %v2624
    %v2626 = vrot.slane %v2622, %v2625
    %v2628 = vsel %vm163, %v2615, 0
    %v2631 = vsel %vm163, %v2616, 0
    %2633 = vmatprep.subr.mxu0 0.0
    %2634 = vmatpush1.msra.mxu0 %v2618
    %2635 = vmatprep.subr.mxu0 0.0
    %2636 = vmatpush1.msra.mxu0 %v2619
    %2637 = vmatprep.subr.mxu0 0.0
    %2638 = vmatpush1.msra.mxu0 %v2620
    %2639 = vmatprep.subr.mxu0 0.0
    %2640 = vmatpush1.msra.mxu0 %v2621
    %2641 = vmatprep.subr.mxu0 0.0
    %2642 = vmatpush1.msra.mxu0 0.0
    %2643 = vmatprep.subr.mxu0 0.0
    %2644 = vmatpush1.msra.mxu0 0.0
    %2645 = vmatprep.subr.mxu0 0.0
    %2646 = vmatpush1.msra.mxu0 0.0
    %2647 = vmatprep.subr.mxu0 0.0
    %2648 = vmatpush1.msra.mxu0 0.0
    %2649 = vmatprep.subr.mxu0 0.0
    %2650 = vmatpush1.msra.mxu0 0.0
    %2651 = vmatprep.subr.mxu0 0.0
    %2652 = vmatpush1.msra.mxu0 0.0
    %2653 = vmatprep.subr.mxu0 0.0
    %2654 = vmatpush1.msra.mxu0 0.0
    %2655 = vmatprep.subr.mxu0 0.0
    %2656 = vmatpush1.msra.mxu0 0.0
    %2657 = vmatprep.subr.mxu0 0.0
    %2658 = vmatpush1.msra.mxu0 0.0
    %2659 = vmatprep.subr.mxu0 0.0
    %2660 = vmatpush1.msra.mxu0 0.0
    %2661 = vmatprep.subr.mxu0 0.0
    %2662 = vmatpush1.msra.mxu0 0.0
    %2663 = vmatprep.subr.mxu0 0.0
    %2664 = vmatpush1.msra.mxu0 0.0
    %2665 = vmatprep.subr.mxu0 0.0
    %2666 = vmatpush1.msra.mxu0 0.0
    %2667 = vmatprep.subr.mxu0 0.0
    %2668 = vmatpush1.msra.mxu0 0.0
    %2669 = vmatprep.subr.mxu0 0.0
    %2670 = vmatpush1.msra.mxu0 0.0
    %2671 = vmatprep.subr.mxu0 0.0
    %2672 = vmatpush1.msra.mxu0 0.0
    %2673 = vmatprep.subr.mxu0 0.0
    %2674 = vmatpush1.msra.mxu0 0.0
    %2675 = vmatprep.subr.mxu0 0.0
    %2676 = vmatpush1.msra.mxu0 0.0
    %2677 = vmatprep.subr.mxu0 0.0
    %2678 = vmatpush1.msra.mxu0 0.0
    %2679 = vmatprep.subr.mxu0 0.0
    %2680 = vmatpush1.msra.mxu0 0.0
    %2681 = vmatprep.subr.mxu0 0.0
    %2682 = vmatpush1.msra.mxu0 0.0
    %2683 = vmatprep.subr.mxu0 0.0
    %2684 = vmatpush1.msra.mxu0 0.0
    %2685 = vmatprep.subr.mxu0 0.0
    %2686 = vmatpush1.msra.mxu0 0.0
    %2687 = vmatprep.subr.mxu0 0.0
    %2688 = vmatpush1.msra.mxu0 0.0
    %2689 = vmatprep.subr.mxu0 0.0
    %2690 = vmatpush1.msra.mxu0 0.0
    %2691 = vmatprep.subr.mxu0 0.0
    %2692 = vmatpush1.msra.mxu0 0.0
    %2693 = vmatprep.subr.mxu0 0.0
    %2694 = vmatpush1.msra.mxu0 0.0
    %2695 = vmatprep.subr.mxu0 0.0
    %2696 = vmatpush1.msra.mxu0 0.0
    %2697 = vmatprep.mubr.f32.mxu0 0.0
    %2698 = vmatmul.mubr.f32.gmra.mrb[0].mxu0 %v2628
    %v2699 = vpop.f32.mrb[0].mxu0
    %v2700 = vadd.f32 %v2626, %v2699
    %v2701 = vpop.f32.mrb[0].mxu0
    %2702 = vmatprep.mubr.f32.mxu0 0.0
    %2703 = vmatmul.mubr.f32.gmra.mrb[0].mxu0 %v2631
    %v2704 = vpop.f32.mrb[0].mxu0
    %v2705 = vadd.f32 %v2626, %v2704
    %v2706 = vpop.f32.mrb[0].mxu0
    %2707 = vdwg.mxu0
    %2710 = vrot.lane.b32.xlu0 %v2700, 120
    %v2711 = vpop.permute.xlu0 %2710
    %2712 = vrot.lane.b32.xlu0 %v2705, 120
    %v2713 = vpop.permute.xlu0 %2712
    %2714 = vrot.lane.b32.xlu0 %v2700, 112
    %v2715 = vpop.permute.xlu0 %2714
    %2716 = vrot.lane.b32.xlu0 %v2705, 112
    %v2717 = vpop.permute.xlu0 %2716
    %2718 = vrot.lane.b32.xlu0 %v2700, 104
    %v2719 = vpop.permute.xlu0 %2718
    %2720 = vrot.lane.b32.xlu0 %v2705, 104
    %v2721 = vpop.permute.xlu0 %2720
    %v2722 = vsel %vm522, %v2700, 0
    %v2724 = vsel %vm522, %v2705, 0
    %v2726 = vsel %vm522, %v2711, 0
    %v2728 = vsel %vm522, %v2713, 0
    %v2730 = vsel %vm522, %v2715, 0
    %v2732 = vsel %vm522, %v2717, 0
    %v2734 = vsel %vm522, %v2719, 0
    %v2736 = vsel %vm522, %v2721, 0
    %v2738 = vsel %vm522, %v284, 0
    %v2740 = vsel %vm522, %v286, 0
    %v2742 = vsel %vm522, %v288, 0
    %v2744 = vsel %vm522, %v290, 0
    %v2746 = vsel %vm522, %v292, 0
    %v2748 = vsel %vm522, %v294, 0
    %v2750 = vsel %vm522, %v296, 0
    %v2752 = vsel %vm522, %v298, 0
    %2754 = vmatprep.subr.mxu0 0.0
    %2755 = vmatpush1.xpose.msra.mxu0 %v2738
    %2756 = vmatprep.subr.mxu0 0.0
    %2757 = vmatpush1.xpose.msra.mxu0 %v2740
    %2758 = vmatprep.subr.mxu0 0.0
    %2759 = vmatpush1.xpose.msra.mxu0 %v2742
    %2760 = vmatprep.subr.mxu0 0.0
    %2761 = vmatpush1.xpose.msra.mxu0 %v2744
    %2762 = vmatprep.subr.mxu0 0.0
    %2763 = vmatpush1.xpose.msra.mxu0 %v2746
    %2764 = vmatprep.subr.mxu0 0.0
    %2765 = vmatpush1.xpose.msra.mxu0 %v2748
    %2766 = vmatprep.subr.mxu0 0.0
    %2767 = vmatpush1.xpose.msra.mxu0 %v2750
    %2768 = vmatprep.subr.mxu0 0.0
    %2769 = vmatpush1.xpose.msra.mxu0 %v2752
    %2770 = vmatprep.subr.mxu0 0.0
    %2771 = vmatpush1.xpose.msra.mxu0 0.0
    %2772 = vmatprep.subr.mxu0 0.0
    %2773 = vmatpush1.xpose.msra.mxu0 0.0
    %2774 = vmatprep.subr.mxu0 0.0
    %2775 = vmatpush1.xpose.msra.mxu0 0.0
    %2776 = vmatprep.subr.mxu0 0.0
    %2777 = vmatpush1.xpose.msra.mxu0 0.0
    %2778 = vmatprep.subr.mxu0 0.0
    %2779 = vmatpush1.xpose.msra.mxu0 0.0
    %2780 = vmatprep.subr.mxu0 0.0
    %2781 = vmatpush1.xpose.msra.mxu0 0.0
    %2782 = vmatprep.subr.mxu0 0.0
    %2783 = vmatpush1.xpose.msra.mxu0 0.0
    %2784 = vmatprep.subr.mxu0 0.0
    %2785 = vmatpush1.xpose.msra.mxu0 0.0
    %2786 = vmatprep.subr.mxu0 0.0
    %2787 = vmatpush1.xpose.msra.mxu0 0.0
    %2788 = vmatprep.subr.mxu0 0.0
    %2789 = vmatpush1.xpose.msra.mxu0 0.0
    %2790 = vmatprep.subr.mxu0 0.0
    %2791 = vmatpush1.xpose.msra.mxu0 0.0
    %2792 = vmatprep.subr.mxu0 0.0
    %2793 = vmatpush1.xpose.msra.mxu0 0.0
    %2794 = vmatprep.subr.mxu0 0.0
    %2795 = vmatpush1.xpose.msra.mxu0 0.0
    %2796 = vmatprep.subr.mxu0 0.0
    %2797 = vmatpush1.xpose.msra.mxu0 0.0
    %2798 = vmatprep.subr.mxu0 0.0
    %2799 = vmatpush1.xpose.msra.mxu0 0.0
    %2800 = vmatprep.subr.mxu0 0.0
    %2801 = vmatpush1.xpose.msra.mxu0 0.0
    %2802 = vmatprep.subr.mxu0 0.0
    %2803 = vmatpush1.xpose.msra.mxu0 0.0
    %2804 = vmatprep.subr.mxu0 0.0
    %2805 = vmatpush1.xpose.msra.mxu0 0.0
    %2806 = vmatprep.subr.mxu0 0.0
    %2807 = vmatpush1.xpose.msra.mxu0 0.0
    %2808 = vmatprep.subr.mxu0 0.0
    %2809 = vmatpush1.xpose.msra.mxu0 0.0
    %2810 = vmatprep.subr.mxu0 0.0
    %2811 = vmatpush1.xpose.msra.mxu0 0.0
    %2812 = vmatprep.subr.mxu0 0.0
    %2813 = vmatpush1.xpose.msra.mxu0 0.0
    %2814 = vmatprep.subr.mxu0 0.0
    %2815 = vmatpush1.xpose.msra.mxu0 0.0
    %2816 = vmatprep.subr.mxu0 0.0
    %2817 = vmatpush1.xpose.msra.mxu0 0.0
    %2818 = vmatprep.mubr.f32.mxu0 0.0
    %2819 = vmatmul.mubr.f32.gmra.mrb[0].mxu0 %v2722
    %v2820 = vpop.f32.mrb[0].mxu0
    %v2821 = vadd.f32 %v146, %v2820
    %v2822 = vpop.f32.mrb[0].mxu0
    %2823 = vmatprep.mubr.f32.mxu0 0.0
    %2824 = vmatmul.mubr.f32.gmra.mrb[0].mxu0 %v2724
    %v2825 = vpop.f32.mrb[0].mxu0
    %v2826 = vadd.f32 %v147, %v2825
    %v2827 = vpop.f32.mrb[0].mxu0
    %2828 = vmatprep.mubr.f32.mxu0 0.0
    %2829 = vmatmul.mubr.f32.gmra.mrb[0].mxu0 %v2726
    %v2830 = vpop.f32.mrb[0].mxu0
    %v2831 = vadd.f32 %v148, %v2830
    %v2832 = vpop.f32.mrb[0].mxu0
    %2833 = vmatprep.mubr.f32.mxu0 0.0
    %2834 = vmatmul.mubr.f32.gmra.mrb[0].mxu0 %v2728
    %v2835 = vpop.f32.mrb[0].mxu0
    %v2836 = vadd.f32 %v149, %v2835
    %v2837 = vpop.f32.mrb[0].mxu0
    %2838 = vmatprep.mubr.f32.mxu0 0.0
    %2839 = vmatmul.mubr.f32.gmra.mrb[0].mxu0 %v2730
    %v2840 = vpop.f32.mrb[0].mxu0
    %v2841 = vadd.f32 %v150, %v2840
    %v2842 = vpop.f32.mrb[0].mxu0
    %2843 = vmatprep.mubr.f32.mxu0 0.0
    %2844 = vmatmul.mubr.f32.gmra.mrb[0].mxu0 %v2732
    %v2845 = vpop.f32.mrb[0].mxu0
    %v2846 = vadd.f32 %v151, %v2845
    %v2847 = vpop.f32.mrb[0].mxu0
    %2848 = vmatprep.mubr.f32.mxu0 0.0
    %2849 = vmatmul.mubr.f32.gmra.mrb[0].mxu0 %v2734
    %v2850 = vpop.f32.mrb[0].mxu0
    %v2851 = vadd.f32 %v152, %v2850
    %v2852 = vpop.f32.mrb[0].mxu0
    %2853 = vmatprep.mubr.f32.mxu0 0.0
    %2854 = vmatmul.mubr.f32.gmra.mrb[0].mxu0 %v2736
    %v2855 = vpop.f32.mrb[0].mxu0
    %v2856 = vadd.f32 %v153, %v2855
    %v2857 = vpop.f32.mrb[0].mxu0
    %2858 = vdwg.mxu0
    %v2859 = vsel %vm660, %v2821, -inf
    %2860 = vmax.xlane.f32.xlu0 %v2859
    %v2861 = vpop.xlane.xlu0 %2860
    %v2862 = vsel %vm660, %v2826, -inf
    %2863 = vmax.xlane.f32.xlu0 %v2862
    %v2864 = vpop.xlane.xlu0 %2863
    %v2865 = vsel %vm660, %v2831, -inf
    %2866 = vmax.xlane.f32.xlu0 %v2865
    %v2867 = vpop.xlane.xlu0 %2866
    %v2868 = vsel %vm660, %v2836, -inf
    %2869 = vmax.xlane.f32.xlu0 %v2868
    %v2870 = vpop.xlane.xlu0 %2869
    %v2871 = vsel %vm660, %v2841, -inf
    %2872 = vmax.xlane.f32.xlu0 %v2871
    %v2873 = vpop.xlane.xlu0 %2872
    %v2874 = vsel %vm660, %v2846, -inf
    %2875 = vmax.xlane.f32.xlu0 %v2874
    %v2876 = vpop.xlane.xlu0 %2875
    %v2877 = vsel %vm660, %v2851, -inf
    %2878 = vmax.xlane.f32.xlu0 %v2877
    %v2879 = vpop.xlane.xlu0 %2878
    %v2880 = vsel %vm660, %v2856, -inf
    %2881 = vmax.xlane.f32.xlu0 %v2880
    %v2882 = vpop.xlane.xlu0 %2881
    %v2883 = vsub.f32 %v2821, %v2861
    %v2884 = vsub.f32 %v2826, %v2864
    %v2885 = vsub.f32 %v2831, %v2867
    %v2886 = vsub.f32 %v2836, %v2870
    %v2887 = vsub.f32 %v2841, %v2873
    %v2888 = vsub.f32 %v2846, %v2876
    %v2889 = vsub.f32 %v2851, %v2879
    %v2890 = vsub.f32 %v2856, %v2882
    %v2891 = vmul.f32 %v2883, 1.442695
    %v2892 = vpow.pop %v2891
    %v2893 = vmul.f32 %v2884, 1.442695
    %v2894 = vpow.pop %v2893
    %v2895 = vmul.f32 %v2885, 1.442695
    %v2896 = vpow.pop %v2895
    %v2897 = vmul.f32 %v2886, 1.442695
    %v2898 = vpow.pop %v2897
    %v2899 = vmul.f32 %v2887, 1.442695
    %v2900 = vpow.pop %v2899
    %v2901 = vmul.f32 %v2888, 1.442695
    %v2902 = vpow.pop %v2901
    %v2903 = vmul.f32 %v2889, 1.442695
    %v2904 = vpow.pop %v2903
    %v2905 = vmul.f32 %v2890, 1.442695
    %v2906 = vpow.pop %v2905
    %v2907 = vsel %vm660, %v2892, 0.0
    %2908 = vadd.xlane.f32.xlu0 %v2907
    %v2909 = vpop.xlane.xlu0 %2908
    %v2910 = vsel %vm660, %v2894, 0.0
    %2911 = vadd.xlane.f32.xlu0 %v2910
    %v2912 = vpop.xlane.xlu0 %2911
    %v2913 = vsel %vm660, %v2896, 0.0
    %2914 = vadd.xlane.f32.xlu0 %v2913
    %v2915 = vpop.xlane.xlu0 %2914
    %v2916 = vsel %vm660, %v2898, 0.0
    %2917 = vadd.xlane.f32.xlu0 %v2916
    %v2918 = vpop.xlane.xlu0 %2917
    %v2919 = vsel %vm660, %v2900, 0.0
    %2920 = vadd.xlane.f32.xlu0 %v2919
    %v2921 = vpop.xlane.xlu0 %2920
    %v2922 = vsel %vm660, %v2902, 0.0
    %2923 = vadd.xlane.f32.xlu0 %v2922
    %v2924 = vpop.xlane.xlu0 %2923
    %v2925 = vsel %vm660, %v2904, 0.0
    %2926 = vadd.xlane.f32.xlu0 %v2925
    %v2927 = vpop.xlane.xlu0 %2926
    %v2928 = vsel %vm660, %v2906, 0.0
    %2929 = vadd.xlane.f32.xlu0 %v2928
    %v2930 = vpop.xlane.xlu0 %2929
    %v2931 = vrcp.pop %v2909
    %v2932 = vmul.f32 %v2892, %v2931
    %v2933 = vrcp.pop %v2912
    %v2934 = vmul.f32 %v2894, %v2933
    %v2935 = vrcp.pop %v2915
    %v2936 = vmul.f32 %v2896, %v2935
    %v2937 = vrcp.pop %v2918
    %v2938 = vmul.f32 %v2898, %v2937
    %v2939 = vrcp.pop %v2921
    %v2940 = vmul.f32 %v2900, %v2939
    %v2941 = vrcp.pop %v2924
    %v2942 = vmul.f32 %v2902, %v2941
    %v2943 = vrcp.pop %v2927
    %v2944 = vmul.f32 %v2904, %v2943
    %v2945 = vrcp.pop %v2930
    %v2946 = vmul.f32 %v2906, %v2945
    %v2948 = vsel %vm660, %v2932, 0
    %v2951 = vsel %vm660, %v2934, 0
    %v2954 = vsel %vm660, %v2936, 0
    %v2957 = vsel %vm660, %v2938, 0
    %v2960 = vsel %vm660, %v2940, 0
    %v2963 = vsel %vm660, %v2942, 0
    %v2966 = vsel %vm660, %v2944, 0
    %v2969 = vsel %vm660, %v2946, 0
    %2971 = vmatprep.subr.mxu0 0.0
    %2972 = vmatpush1.msra.mxu0 %v300
    %2973 = vmatprep.subr.mxu0 0.0
    %2974 = vmatpush1.msra.mxu0 %v302
    %2975 = vmatprep.subr.mxu0 0.0
    %2976 = vmatpush1.msra.mxu0 %v306
    %2977 = vmatprep.subr.mxu0 0.0
    %2978 = vmatpush1.msra.mxu0 %v308
    %2979 = vmatprep.subr.mxu0 0.0
    %2980 = vmatpush1.msra.mxu0 %v312
    %2981 = vmatprep.subr.mxu0 0.0
    %2982 = vmatpush1.msra.mxu0 %v314
    %2983 = vmatprep.subr.mxu0 0.0
    %2984 = vmatpush1.msra.mxu0 %v318
    %2985 = vmatprep.subr.mxu0 0.0
    %2986 = vmatpush1.msra.mxu0 %v320
    %2987 = vmatprep.subr.mxu0 0.0
    %2988 = vmatpush1.msra.mxu0 0.0
    %2989 = vmatprep.subr.mxu0 0.0
    %2990 = vmatpush1.msra.mxu0 0.0
    %2991 = vmatprep.subr.mxu0 0.0
    %2992 = vmatpush1.msra.mxu0 0.0
    %2993 = vmatprep.subr.mxu0 0.0
    %2994 = vmatpush1.msra.mxu0 0.0
    %2995 = vmatprep.subr.mxu0 0.0
    %2996 = vmatpush1.msra.mxu0 0.0
    %2997 = vmatprep.subr.mxu0 0.0
    %2998 = vmatpush1.msra.mxu0 0.0
    %2999 = vmatprep.subr.mxu0 0.0
    %3000 = vmatpush1.msra.mxu0 0.0
    %3001 = vmatprep.subr.mxu0 0.0
    %3002 = vmatpush1.msra.mxu0 0.0
    %3003 = vmatprep.subr.mxu0 0.0
    %3004 = vmatpush1.msra.mxu0 0.0
    %3005 = vmatprep.subr.mxu0 0.0
    %3006 = vmatpush1.msra.mxu0 0.0
    %3007 = vmatprep.subr.mxu0 0.0
    %3008 = vmatpush1.msra.mxu0 0.0
    %3009 = vmatprep.subr.mxu0 0.0
    %3010 = vmatpush1.msra.mxu0 0.0
    %3011 = vmatprep.subr.mxu0 0.0
    %3012 = vmatpush1.msra.mxu0 0.0
    %3013 = vmatprep.subr.mxu0 0.0
    %3014 = vmatpush1.msra.mxu0 0.0
    %3015 = vmatprep.subr.mxu0 0.0
    %3016 = vmatpush1.msra.mxu0 0.0
    %3017 = vmatprep.subr.mxu0 0.0
    %3018 = vmatpush1.msra.mxu0 0.0
    %3019 = vmatprep.subr.mxu0 0.0
    %3020 = vmatpush1.msra.mxu0 0.0
    %3021 = vmatprep.subr.mxu0 0.0
    %3022 = vmatpush1.msra.mxu0 0.0
    %3023 = vmatprep.subr.mxu0 0.0
    %3024 = vmatpush1.msra.mxu0 0.0
    %3025 = vmatprep.subr.mxu0 0.0
    %3026 = vmatpush1.msra.mxu0 0.0
    %3027 = vmatprep.subr.mxu0 0.0
    %3028 = vmatpush1.msra.mxu0 0.0
    %3029 = vmatprep.subr.mxu0 0.0
    %3030 = vmatpush1.msra.mxu0 0.0
    %3031 = vmatprep.subr.mxu0 0.0
    %3032 = vmatpush1.msra.mxu0 0.0
    %3033 = vmatprep.subr.mxu0 0.0
    %3034 = vmatpush1.msra.mxu0 0.0
    %3035 = vmatprep.mubr.f32.mxu0 0.0
    %3036 = vmatmul.mubr.f32.gmra.mrb[0].mxu0 %v2948
    %v3037 = vpop.f32.mrb[0].mxu0
    %v3038 = vadd.f32 0.0, %v3037
    %v3039 = vpop.f32.mrb[0].mxu0
    %3040 = vmatprep.mubr.f32.mxu0 0.0
    %3041 = vmatmul.mubr.f32.gmra.mrb[0].mxu0 %v2951
    %v3042 = vpop.f32.mrb[0].mxu0
    %v3043 = vadd.f32 0.0, %v3042
    %v3044 = vpop.f32.mrb[0].mxu0
    %3045 = vmatprep.mubr.f32.mxu0 0.0
    %3046 = vmatmul.mubr.f32.gmra.mrb[0].mxu0 %v2954
    %v3047 = vpop.f32.mrb[0].mxu0
    %v3048 = vadd.f32 0.0, %v3047
    %v3049 = vpop.f32.mrb[0].mxu0
    %3050 = vmatprep.mubr.f32.mxu0 0.0
    %3051 = vmatmul.mubr.f32.gmra.mrb[0].mxu0 %v2957
    %v3052 = vpop.f32.mrb[0].mxu0
    %v3053 = vadd.f32 0.0, %v3052
    %v3054 = vpop.f32.mrb[0].mxu0
    %3055 = vmatprep.mubr.f32.mxu0 0.0
    %3056 = vmatmul.mubr.f32.gmra.mrb[0].mxu0 %v2960
    %v3057 = vpop.f32.mrb[0].mxu0
    %v3058 = vadd.f32 0.0, %v3057
    %v3059 = vpop.f32.mrb[0].mxu0
    %3060 = vmatprep.mubr.f32.mxu0 0.0
    %3061 = vmatmul.mubr.f32.gmra.mrb[0].mxu0 %v2963
    %v3062 = vpop.f32.mrb[0].mxu0
    %v3063 = vadd.f32 0.0, %v3062
    %v3064 = vpop.f32.mrb[0].mxu0
    %3065 = vmatprep.mubr.f32.mxu0 0.0
    %3066 = vmatmul.mubr.f32.gmra.mrb[0].mxu0 %v2966
    %v3067 = vpop.f32.mrb[0].mxu0
    %v3068 = vadd.f32 0.0, %v3067
    %v3069 = vpop.f32.mrb[0].mxu0
    %3070 = vmatprep.mubr.f32.mxu0 0.0
    %3071 = vmatmul.mubr.f32.gmra.mrb[0].mxu0 %v2969
    %v3072 = vpop.f32.mrb[0].mxu0
    %v3073 = vadd.f32 0.0, %v3072
    %v3074 = vpop.f32.mrb[0].mxu0
    %3075 = vdwg.mxu0
    %3078 = vrot.lane.b32.xlu0 %v3048, 8
    %v3079 = vpop.permute.xlu0 %3078
    %3080 = vrot.lane.b32.xlu0 %v3053, 8
    %v3081 = vpop.permute.xlu0 %3080
    %3086 = vrot.lane.b32.xlu0 %v3058, 16
    %v3087 = vpop.permute.xlu0 %3086
    %3088 = vrot.lane.b32.xlu0 %v3063, 16
    %v3089 = vpop.permute.xlu0 %3088
    %3094 = vrot.lane.b32.xlu0 %v3068, 24
    %v3095 = vpop.permute.xlu0 %3094
    %3096 = vrot.lane.b32.xlu0 %v3073, 24
    %v3097 = vpop.permute.xlu0 %3096
    %v3100 = vsel %vm522, %v3038, %v3079
    %v3101 = vsel %vm522, %v3043, %v3081
    %v3102 = vsel %vm904, %v3100, %v3087
    %v3103 = vsel %vm904, %v3101, %v3089
    %v3104 = vsel %vm907, %v3102, %v3095
    %v3105 = vsel %vm907, %v3103, %v3097
    %s3106 = scalar_lea.vmem %s7, 96
    %v3107 = vld [vmem:[%s3106] sm:$0xff]
    %v3108 = vld [vmem:[%s3106 + $0x8] sm:$0xff]
    %v3109 = vld [vmem:[%s3106 + $0x10] sm:$0xff]
    %v3110 = vld [vmem:[%s3106 + $0x18] sm:$0xff]
    %v3112 = vsel %vm163, %v3104, 0
    %v3115 = vsel %vm163, %v3105, 0
    %3117 = vmatprep.subr.mxu0 0.0
    %3118 = vmatpush1.msra.mxu0 %v3107
    %3119 = vmatprep.subr.mxu0 0.0
    %3120 = vmatpush1.msra.mxu0 %v3108
    %3121 = vmatprep.subr.mxu0 0.0
    %3122 = vmatpush1.msra.mxu0 %v3109
    %3123 = vmatprep.subr.mxu0 0.0
    %3124 = vmatpush1.msra.mxu0 %v3110
    %3125 = vmatprep.subr.mxu0 0.0
    %3126 = vmatpush1.msra.mxu0 0.0
    %3127 = vmatprep.subr.mxu0 0.0
    %3128 = vmatpush1.msra.mxu0 0.0
    %3129 = vmatprep.subr.mxu0 0.0
    %3130 = vmatpush1.msra.mxu0 0.0
    %3131 = vmatprep.subr.mxu0 0.0
    %3132 = vmatpush1.msra.mxu0 0.0
    %3133 = vmatprep.subr.mxu0 0.0
    %3134 = vmatpush1.msra.mxu0 0.0
    %3135 = vmatprep.subr.mxu0 0.0
    %3136 = vmatpush1.msra.mxu0 0.0
    %3137 = vmatprep.subr.mxu0 0.0
    %3138 = vmatpush1.msra.mxu0 0.0
    %3139 = vmatprep.subr.mxu0 0.0
    %3140 = vmatpush1.msra.mxu0 0.0
    %3141 = vmatprep.subr.mxu0 0.0
    %3142 = vmatpush1.msra.mxu0 0.0
    %3143 = vmatprep.subr.mxu0 0.0
    %3144 = vmatpush1.msra.mxu0 0.0
    %3145 = vmatprep.subr.mxu0 0.0
    %3146 = vmatpush1.msra.mxu0 0.0
    %3147 = vmatprep.subr.mxu0 0.0
    %3148 = vmatpush1.msra.mxu0 0.0
    %3149 = vmatprep.subr.mxu0 0.0
    %3150 = vmatpush1.msra.mxu0 0.0
    %3151 = vmatprep.subr.mxu0 0.0
    %3152 = vmatpush1.msra.mxu0 0.0
    %3153 = vmatprep.subr.mxu0 0.0
    %3154 = vmatpush1.msra.mxu0 0.0
    %3155 = vmatprep.subr.mxu0 0.0
    %3156 = vmatpush1.msra.mxu0 0.0
    %3157 = vmatprep.subr.mxu0 0.0
    %3158 = vmatpush1.msra.mxu0 0.0
    %3159 = vmatprep.subr.mxu0 0.0
    %3160 = vmatpush1.msra.mxu0 0.0
    %3161 = vmatprep.subr.mxu0 0.0
    %3162 = vmatpush1.msra.mxu0 0.0
    %3163 = vmatprep.subr.mxu0 0.0
    %3164 = vmatpush1.msra.mxu0 0.0
    %3165 = vmatprep.subr.mxu0 0.0
    %3166 = vmatpush1.msra.mxu0 0.0
    %3167 = vmatprep.subr.mxu0 0.0
    %3168 = vmatpush1.msra.mxu0 0.0
    %3169 = vmatprep.subr.mxu0 0.0
    %3170 = vmatpush1.msra.mxu0 0.0
    %3171 = vmatprep.subr.mxu0 0.0
    %3172 = vmatpush1.msra.mxu0 0.0
    %3173 = vmatprep.subr.mxu0 0.0
    %3174 = vmatpush1.msra.mxu0 0.0
    %3175 = vmatprep.subr.mxu0 0.0
    %3176 = vmatpush1.msra.mxu0 0.0
    %3177 = vmatprep.subr.mxu0 0.0
    %3178 = vmatpush1.msra.mxu0 0.0
    %3179 = vmatprep.subr.mxu0 0.0
    %3180 = vmatpush1.msra.mxu0 0.0
    %3181 = vmatprep.mubr.f32.mxu0 0.0
    %3182 = vmatmul.mubr.f32.gmra.mrb[0].mxu0 %v3112
    %v3183 = vpop.f32.mrb[0].mxu0
    %v3184 = vadd.f32 0.0, %v3183
    %v3185 = vpop.f32.mrb[0].mxu0
    %3186 = vmatprep.mubr.f32.mxu0 0.0
    %3187 = vmatmul.mubr.f32.gmra.mrb[0].mxu0 %v3115
    %v3188 = vpop.f32.mrb[0].mxu0
    %v3189 = vadd.f32 0.0, %v3188
    %v3190 = vpop.f32.mrb[0].mxu0
    %3191 = vdwg.mxu0
    %v3192 = vadd.f32 %v2561, %v3184
    %v3193 = vadd.f32 %v2562, %v3189
    %v3194 = vld [vmem:[%s10 + $0xf] sm:$0x1]
    %v3195 = vlaneseq
    %v3196 = vshrl.u32 %v3195, 7
    %v3197 = vsub.s32 0, %v3196
    %v3198 = vrot.slane %v3194, %v3197
    %v3199 = vadd.f32 %v3192, %v3198
    %v3200 = vadd.f32 %v3193, %v3198
    %v3201 = vld [vmem:[%s10 + $0x16] sm:$0x1]
    %v3202 = vld [vmem:[%s10 + $0x17] sm:$0x1]
    %v3203 = vsel %vm163, %v3199, 0.0
    %3204 = vadd.xlane.f32.xlu0 %v3203
    %v3205 = vpop.xlane.xlu0 %3204
    %v3206 = vsel %vm163, %v3200, 0.0
    %3207 = vadd.xlane.f32.xlu0 %v3206
    %v3208 = vpop.xlane.xlu0 %3207
    %v3209 = vmul.f32 %v3205, %v331
    %v3210 = vmul.f32 %v3208, %v331
    %v3211 = vsub.f32 %v3199, %v3209
    %v3212 = vsub.f32 %v3200, %v3210
    %v3213 = vmul.f32 %v3211, %v3211
    %v3214 = vmul.f32 %v3212, %v3212
    %v3215 = vsel %vm163, %v3213, 0.0
    %3216 = vadd.xlane.f32.xlu0 %v3215
    %v3217 = vpop.xlane.xlu0 %3216
    %v3218 = vsel %vm163, %v3214, 0.0
    %3219 = vadd.xlane.f32.xlu0 %v3218
    %v3220 = vpop.xlane.xlu0 %3219
    %v3221 = vmul.f32 %v3217, 0.032258064
    %v3222 = vmul.f32 %v3220, 0.032258064
    %v3223 = vlaneseq
    %v3224 = vshrl.u32 %v3223, 7
    %v3225 = vsub.s32 0, %v3224
    %v3226 = vrot.slane %v3201, %v3225
    %v3227 = vmul.f32 %v3226, %v3211
    %v3228 = vmul.f32 %v3226, %v3212
    %v3229 = vrsqrt.pop %v3221
    %v3230 = vmul.f32 %v3221, %v3229
    %vm3231 = vcmp.eq.f32.partialorder %v3221, inf
    %v3232 = vsel %vm3231, %v3221, %v3230
    %vm3233 = vcmp.eq.f32.partialorder %v3221, 0.0
    %v3234 = vand.u32 %v3221, 2147483648
    %v3235 = vsel %vm3233, %v3234, %v3232
    %v3236 = vrsqrt.pop %v3222
    %v3237 = vmul.f32 %v3222, %v3236
    %vm3238 = vcmp.eq.f32.partialorder %v3222, inf
    %v3239 = vsel %vm3238, %v3222, %v3237
    %vm3240 = vcmp.eq.f32.partialorder %v3222, 0.0
    %v3241 = vand.u32 %v3222, 2147483648
    %v3242 = vsel %vm3240, %v3241, %v3239
    %v3243 = vadd.f32 %v3235, 1e-06
    %v3244 = vadd.f32 %v3242, 1e-06
    %v3245 = vrcp.pop %v3243
    %v3246 = vmul.f32 %v3227, %v3245
    %v3247 = vrcp.pop %v3244
    %v3248 = vmul.f32 %v3228, %v3247
    %v3249 = vlaneseq
    %v3250 = vshrl.u32 %v3249, 7
    %v3251 = vsub.s32 0, %v3250
    %v3252 = vrot.slane %v3202, %v3251
    %v3253 = vadd.f32 %v3246, %v3252
    %v3254 = vadd.f32 %v3248, %v3252
    %s3255 = scalar_lea.vmem [#allocation13], 32
    %v3256 = vld [vmem:[%s3255] sm:$0xff]
    %v3257 = vld [vmem:[%s3255 + $0x8] sm:$0xff]
    %v3258 = vld [vmem:[%s3255 + $0x10] sm:$0xff]
    %v3259 = vld [vmem:[%s3255 + $0x18] sm:$0xff]
    %v3260 = vld [vmem:[%s10 + $0x10] sm:$0x1]
    %v3261 = vlaneseq
    %v3262 = vshrl.u32 %v3261, 7
    %v3263 = vsub.s32 0, %v3262
    %v3264 = vrot.slane %v3260, %v3263
    %v3266 = vsel %vm163, %v3253, 0
    %v3269 = vsel %vm163, %v3254, 0
    %3271 = vmatprep.subr.mxu0 0.0
    %3272 = vmatpush1.msra.mxu0 %v3256
    %3273 = vmatprep.subr.mxu0 0.0
    %3274 = vmatpush1.msra.mxu0 %v3257
    %3275 = vmatprep.subr.mxu0 0.0
    %3276 = vmatpush1.msra.mxu0 %v3258
    %3277 = vmatprep.subr.mxu0 0.0
    %3278 = vmatpush1.msra.mxu0 %v3259
    %3279 = vmatprep.subr.mxu0 0.0
    %3280 = vmatpush1.msra.mxu0 0.0
    %3281 = vmatprep.subr.mxu0 0.0
    %3282 = vmatpush1.msra.mxu0 0.0
    %3283 = vmatprep.subr.mxu0 0.0
    %3284 = vmatpush1.msra.mxu0 0.0
    %3285 = vmatprep.subr.mxu0 0.0
    %3286 = vmatpush1.msra.mxu0 0.0
    %3287 = vmatprep.subr.mxu0 0.0
    %3288 = vmatpush1.msra.mxu0 0.0
    %3289 = vmatprep.subr.mxu0 0.0
    %3290 = vmatpush1.msra.mxu0 0.0
    %3291 = vmatprep.subr.mxu0 0.0
    %3292 = vmatpush1.msra.mxu0 0.0
    %3293 = vmatprep.subr.mxu0 0.0
    %3294 = vmatpush1.msra.mxu0 0.0
    %3295 = vmatprep.subr.mxu0 0.0
    %3296 = vmatpush1.msra.mxu0 0.0
    %3297 = vmatprep.subr.mxu0 0.0
    %3298 = vmatpush1.msra.mxu0 0.0
    %3299 = vmatprep.subr.mxu0 0.0
    %3300 = vmatpush1.msra.mxu0 0.0
    %3301 = vmatprep.subr.mxu0 0.0
    %3302 = vmatpush1.msra.mxu0 0.0
    %3303 = vmatprep.subr.mxu0 0.0
    %3304 = vmatpush1.msra.mxu0 0.0
    %3305 = vmatprep.subr.mxu0 0.0
    %3306 = vmatpush1.msra.mxu0 0.0
    %3307 = vmatprep.subr.mxu0 0.0
    %3308 = vmatpush1.msra.mxu0 0.0
    %3309 = vmatprep.subr.mxu0 0.0
    %3310 = vmatpush1.msra.mxu0 0.0
    %3311 = vmatprep.subr.mxu0 0.0
    %3312 = vmatpush1.msra.mxu0 0.0
    %3313 = vmatprep.subr.mxu0 0.0
    %3314 = vmatpush1.msra.mxu0 0.0
    %3315 = vmatprep.subr.mxu0 0.0
    %3316 = vmatpush1.msra.mxu0 0.0
    %3317 = vmatprep.subr.mxu0 0.0
    %3318 = vmatpush1.msra.mxu0 0.0
    %3319 = vmatprep.subr.mxu0 0.0
    %3320 = vmatpush1.msra.mxu0 0.0
    %3321 = vmatprep.subr.mxu0 0.0
    %3322 = vmatpush1.msra.mxu0 0.0
    %3323 = vmatprep.subr.mxu0 0.0
    %3324 = vmatpush1.msra.mxu0 0.0
    %3325 = vmatprep.subr.mxu0 0.0
    %3326 = vmatpush1.msra.mxu0 0.0
    %3327 = vmatprep.subr.mxu0 0.0
    %3328 = vmatpush1.msra.mxu0 0.0
    %3329 = vmatprep.subr.mxu0 0.0
    %3330 = vmatpush1.msra.mxu0 0.0
    %3331 = vmatprep.subr.mxu0 0.0
    %3332 = vmatpush1.msra.mxu0 0.0
    %3333 = vmatprep.subr.mxu0 0.0
    %3334 = vmatpush1.msra.mxu0 0.0
    %3335 = vmatprep.mubr.f32.mxu0 0.0
    %3336 = vmatmul.mubr.f32.gmra.mrb[0].mxu0 %v3266
    %v3337 = vpop.f32.mrb[0].mxu0
    %v3338 = vadd.f32 %v3264, %v3337
    %v3339 = vpop.f32.mrb[0].mxu0
    %3340 = vmatprep.mubr.f32.mxu0 0.0
    %3341 = vmatmul.mubr.f32.gmra.mrb[0].mxu0 %v3269
    %v3342 = vpop.f32.mrb[0].mxu0
    %v3343 = vadd.f32 %v3264, %v3342
    %v3344 = vpop.f32.mrb[0].mxu0
    %3345 = vdwg.mxu0
    %v3346 = vmax.f32 %v3338, 0.0
    %v3347 = vmax.f32 %v3343, 0.0
    %s3348 = scalar_lea.vmem %s9, 64
    %v3349 = vld [vmem:[%s3348] sm:$0xff]
    %v3350 = vld [vmem:[%s3348 + $0x8] sm:$0xff]
    %v3351 = vld [vmem:[%s3348 + $0x10] sm:$0xff]
    %v3352 = vld [vmem:[%s3348 + $0x18] sm:$0xff]
    %v3353 = vld [vmem:[%s3348 + $0x20] sm:$0xff]
    %v3354 = vld [vmem:[%s3348 + $0x28] sm:$0xff]
    %v3355 = vld [vmem:[%s3348 + $0x30] sm:$0xff]
    %v3356 = vld [vmem:[%s3348 + $0x38] sm:$0xff]
    %v3358 = vsel %vm660, %v3346, 0
    %v3361 = vsel %vm660, %v3347, 0
    %3363 = vmatprep.subr.mxu0 0.0
    %3364 = vmatpush1.msra.mxu0 %v3349
    %3365 = vmatprep.subr.mxu0 0.0
    %3366 = vmatpush1.msra.mxu0 %v3350
    %3367 = vmatprep.subr.mxu0 0.0
    %3368 = vmatpush1.msra.mxu0 %v3351
    %3369 = vmatprep.subr.mxu0 0.0
    %3370 = vmatpush1.msra.mxu0 %v3352
    %3371 = vmatprep.subr.mxu0 0.0
    %3372 = vmatpush1.msra.mxu0 %v3353
    %3373 = vmatprep.subr.mxu0 0.0
    %3374 = vmatpush1.msra.mxu0 %v3354
    %3375 = vmatprep.subr.mxu0 0.0
    %3376 = vmatpush1.msra.mxu0 %v3355
    %3377 = vmatprep.subr.mxu0 0.0
    %3378 = vmatpush1.msra.mxu0 %v3356
    %3379 = vmatprep.subr.mxu0 0.0
    %3380 = vmatpush1.msra.mxu0 0.0
    %3381 = vmatprep.subr.mxu0 0.0
    %3382 = vmatpush1.msra.mxu0 0.0
    %3383 = vmatprep.subr.mxu0 0.0
    %3384 = vmatpush1.msra.mxu0 0.0
    %3385 = vmatprep.subr.mxu0 0.0
    %3386 = vmatpush1.msra.mxu0 0.0
    %3387 = vmatprep.subr.mxu0 0.0
    %3388 = vmatpush1.msra.mxu0 0.0
    %3389 = vmatprep.subr.mxu0 0.0
    %3390 = vmatpush1.msra.mxu0 0.0
    %3391 = vmatprep.subr.mxu0 0.0
    %3392 = vmatpush1.msra.mxu0 0.0
    %3393 = vmatprep.subr.mxu0 0.0
    %3394 = vmatpush1.msra.mxu0 0.0
    %3395 = vmatprep.subr.mxu0 0.0
    %3396 = vmatpush1.msra.mxu0 0.0
    %3397 = vmatprep.subr.mxu0 0.0
    %3398 = vmatpush1.msra.mxu0 0.0
    %3399 = vmatprep.subr.mxu0 0.0
    %3400 = vmatpush1.msra.mxu0 0.0
    %3401 = vmatprep.subr.mxu0 0.0
    %3402 = vmatpush1.msra.mxu0 0.0
    %3403 = vmatprep.subr.mxu0 0.0
    %3404 = vmatpush1.msra.mxu0 0.0
    %3405 = vmatprep.subr.mxu0 0.0
    %3406 = vmatpush1.msra.mxu0 0.0
    %3407 = vmatprep.subr.mxu0 0.0
    %3408 = vmatpush1.msra.mxu0 0.0
    %3409 = vmatprep.subr.mxu0 0.0
    %3410 = vmatpush1.msra.mxu0 0.0
    %3411 = vmatprep.subr.mxu0 0.0
    %3412 = vmatpush1.msra.mxu0 0.0
    %3413 = vmatprep.subr.mxu0 0.0
    %3414 = vmatpush1.msra.mxu0 0.0
    %3415 = vmatprep.subr.mxu0 0.0
    %3416 = vmatpush1.msra.mxu0 0.0
    %3417 = vmatprep.subr.mxu0 0.0
    %3418 = vmatpush1.msra.mxu0 0.0
    %3419 = vmatprep.subr.mxu0 0.0
    %3420 = vmatpush1.msra.mxu0 0.0
    %3421 = vmatprep.subr.mxu0 0.0
    %3422 = vmatpush1.msra.mxu0 0.0
    %3423 = vmatprep.subr.mxu0 0.0
    %3424 = vmatpush1.msra.mxu0 0.0
    %3425 = vmatprep.subr.mxu0 0.0
    %3426 = vmatpush1.msra.mxu0 0.0
    %3427 = vmatprep.mubr.f32.mxu0 0.0
    %3428 = vmatmul.mubr.f32.gmra.mrb[0].mxu0 %v3358
    %v3429 = vpop.f32.mrb[0].mxu0
    %v3430 = vadd.f32 0.0, %v3429
    %v3431 = vpop.f32.mrb[0].mxu0
    %3432 = vmatprep.mubr.f32.mxu0 0.0
    %3433 = vmatmul.mubr.f32.gmra.mrb[0].mxu0 %v3361
    %v3434 = vpop.f32.mrb[0].mxu0
    %v3435 = vadd.f32 0.0, %v3434
    %v3436 = vpop.f32.mrb[0].mxu0
    %3437 = vdwg.mxu0
    %v3438 = vadd.f32 %v3199, %v3430
    %v3439 = vadd.f32 %v3200, %v3435
    %v3440 = vld [vmem:[%s10 + $0x11] sm:$0x1]
    %v3441 = vlaneseq
    %v3442 = vshrl.u32 %v3441, 7
    %v3443 = vsub.s32 0, %v3442
    %v3444 = vrot.slane %v3440, %v3443
    %v3445 = vadd.f32 %v3438, %v3444
    %v3446 = vadd.f32 %v3439, %v3444
    %v3447 = vld [vmem:[%s10 + $0x19] sm:$0x1]
    %v3448 = vld [vmem:[%s10 + $0x1a] sm:$0x1]
    %v3449 = vsel %vm163, %v3445, 0.0
    %3450 = vadd.xlane.f32.xlu0 %v3449
    %v3451 = vpop.xlane.xlu0 %3450
    %v3452 = vsel %vm163, %v3446, 0.0
    %3453 = vadd.xlane.f32.xlu0 %v3452
    %v3454 = vpop.xlane.xlu0 %3453
    %v3455 = vmul.f32 %v3451, %v331
    %v3456 = vmul.f32 %v3454, %v331
    %v3457 = vsub.f32 %v3445, %v3455
    %v3458 = vsub.f32 %v3446, %v3456
    %v3459 = vmul.f32 %v3457, %v3457
    %v3460 = vmul.f32 %v3458, %v3458
    %v3461 = vsel %vm163, %v3459, 0.0
    %3462 = vadd.xlane.f32.xlu0 %v3461
    %v3463 = vpop.xlane.xlu0 %3462
    %v3464 = vsel %vm163, %v3460, 0.0
    %3465 = vadd.xlane.f32.xlu0 %v3464
    %v3466 = vpop.xlane.xlu0 %3465
    %v3467 = vmul.f32 %v3463, 0.032258064
    %v3468 = vmul.f32 %v3466, 0.032258064
    %v3469 = vlaneseq
    %v3470 = vshrl.u32 %v3469, 7
    %v3471 = vsub.s32 0, %v3470
    %v3472 = vrot.slane %v3447, %v3471
    %v3473 = vmul.f32 %v3472, %v3457
    %v3474 = vmul.f32 %v3472, %v3458
    %v3475 = vrsqrt.pop %v3467
    %v3476 = vmul.f32 %v3467, %v3475
    %vm3477 = vcmp.eq.f32.partialorder %v3467, inf
    %v3478 = vsel %vm3477, %v3467, %v3476
    %vm3479 = vcmp.eq.f32.partialorder %v3467, 0.0
    %v3480 = vand.u32 %v3467, 2147483648
    %v3481 = vsel %vm3479, %v3480, %v3478
    %v3482 = vrsqrt.pop %v3468
    %v3483 = vmul.f32 %v3468, %v3482
    %vm3484 = vcmp.eq.f32.partialorder %v3468, inf
    %v3485 = vsel %vm3484, %v3468, %v3483
    %vm3486 = vcmp.eq.f32.partialorder %v3468, 0.0
    %v3487 = vand.u32 %v3468, 2147483648
    %v3488 = vsel %vm3486, %v3487, %v3485
    %v3489 = vadd.f32 %v3481, 1e-06
    %v3490 = vadd.f32 %v3488, 1e-06
    %v3491 = vrcp.pop %v3489
    %v3492 = vmul.f32 %v3473, %v3491
    %v3493 = vrcp.pop %v3490
    %v3494 = vmul.f32 %v3474, %v3493
    %v3495 = vlaneseq
    %v3496 = vshrl.u32 %v3495, 7
    %v3497 = vsub.s32 0, %v3496
    %v3498 = vrot.slane %v3448, %v3497
    %v3499 = vadd.f32 %v3492, %v3498
    %v3500 = vadd.f32 %v3494, %v3498
    %3501 = vst.msk [vmem:[#allocation14] sm:$0xff] %vm163, %v3499
    %3502 = vst.msk [vmem:[#allocation14 + $0x8] sm:$0xff] %vm163, %v3500
    // Predicated region
    $region74: #{tpu_custom_call.1} parent=1 // pred_check
      _
    $region75: #{tpu_custom_call.1} parent=1 // pred_check_branch
      %3504 = sbr.rel (0) target = $region77
    $region76: #{tpu_custom_call.1} parent=1 // pred_region
      %s3506 = ssub.s32 256, 256
      %3507 = vsyncadd [#allocation4], %s3506
      %s3508 = sshll.u32 [#allocation14], 4
      %s3509 = int_to_ptr.vmem [resolvable:$true] %s3508
      %3514 = dma.vmem_to_hbm [thread:$0]  %s3509, 256, %s11, [#allocation4], 128, 128, 8
    $region77: #{tpu_custom_call.1} parent=1 // pred_fallthru
      _
    // Predicated region
    $region78: #{tpu_custom_call.1} parent=1 // pred_check
      _
    $region79: #{tpu_custom_call.1} parent=1 // pred_check_branch
      %3516 = sbr.rel (0) target = $region81
    $region80: #{tpu_custom_call.1} parent=1 // pred_region
      %3517 = dma.done [#allocation4], 256
    $region81: #{tpu_custom_call.1} parent=1 // pred_fallthru
      _
    %3518 = vsyncpa [#allocation3], 1
    %3519 = vsyncpa [#allocation6], 1
    %3520 = vsyncpa [#allocation9], 1
    %3521 = vsyncpa [#allocation12], 1
    %3522 = vsyncpa [#allocation4], 1

</llo_original>
